<compile_context>
chip_gen: v7x
topology: tpu7x:2x2x1
jax: 0.10.0
libtpu: 0.0.40
codegen_flags: <defaults>
</compile_context>

<pallas_src>
import functools

import jax
import jax.numpy as jnp
import numpy as np
from jax.experimental import pallas as pl
from jax.experimental.pallas import tpu as pltpu


# ---------------------------------------------------------------------------
# Pallas kernel: one fused SAGEConv layer + L2-normalize + ReLU for a node tile
# ---------------------------------------------------------------------------
def _make_sage_layer_kernel(tile_n):
    def kernel(a_ref, x_ref, wn_ref, ws_ref, b_ref, o_ref):
        # a_ref : (tile_n, N_pad)  row-normalized adjacency rows for this node tile
        # x_ref : (N_pad, Fin)     all node features (resident block, constant index)
        # wn_ref: (Fin, Fout)      neighbour weight, pre-transposed
        # ws_ref: (Fin, Fout)      self weight, pre-transposed
        # b_ref : (1, Fout)        bias
        # o_ref : (tile_n, Fout)   output features for this node tile
        row0 = pl.multiple_of(pl.program_id(0) * tile_n, tile_n)

        x_all = x_ref[...].astype(jnp.float32)
        x_tile = x_ref[pl.ds(row0, tile_n), :].astype(jnp.float32)

        # Mean neighbour aggregation (dense normalized adjacency) on the MXU.
        agg = jnp.dot(a_ref[...], x_all, preferred_element_type=jnp.float32)

        # SAGEConv: neighbour term + self term + bias.
        h = jnp.dot(agg, wn_ref[...], preferred_element_type=jnp.float32)
        h = h + jnp.dot(x_tile, ws_ref[...], preferred_element_type=jnp.float32)
        h = h + b_ref[...]

        # F.normalize(p=2, dim=1, eps=1e-12) then ReLU.
        norm = jnp.sqrt(jnp.sum(h * h, axis=-1, keepdims=True))
        h = h / jnp.maximum(norm, 1e-12)
        o_ref[...] = jnp.maximum(h, 0.0).astype(o_ref.dtype)
        # TODO(synk): training-mode dropout (pltpu.prng_* masking) omitted; the kernel
        # implements eval-mode semantics where nn.Dropout is the identity.

    return kernel


def _round_up(x, m):
    return ((x + m - 1) // m) * m


def _choose_tile(n_pad, fin, fout, budget_bytes=8 << 20):
    """Largest node tile (divisor of n_pad, multiple of 8) fitting a VMEM budget."""
    for t in (1024, 512, 256, 128, 64, 32, 16, 8):
        if t > n_pad or n_pad % t:
            continue
        need = 4 * (
            2 * t * n_pad          # double-buffered adjacency tile
            + n_pad * fin          # resident full feature block
            + 2 * fin * fout       # both weight matrices
            + fout                 # bias
            + 2 * t * fout         # double-buffered output tile
        )
        if need <= budget_bytes:
            return t
    return 8


def _sage_layer(a_norm, h, wn_t, ws_t, b_row, *, tile_n):
    n_pad, fin = h.shape
    fout = wn_t.shape[1]
    grid = (n_pad // tile_n,)

    flops = 2 * n_pad * n_pad * fin + 4 * n_pad * fin * fout + 5 * n_pad * fout
    bytes_accessed = 4 * (
        n_pad * n_pad + n_pad * fin + 2 * fin * fout + fout + n_pad * fout
    )

    return pl.pallas_call(
        _make_sage_layer_kernel(tile_n),
        out_shape=jax.ShapeDtypeStruct((n_pad, fout), jnp.float32),
        grid_spec=pltpu.PrefetchScalarGridSpec(
            num_scalar_prefetch=0,
            grid=grid,
            in_specs=[
                pl.BlockSpec((tile_n, n_pad), lambda i: (i, 0)),  # A_norm rows
                pl.BlockSpec((n_pad, fin), lambda i: (0, 0)),     # all features (resident)
                pl.BlockSpec((fin, fout), lambda i: (0, 0)),      # W_neigh^T
                pl.BlockSpec((fin, fout), lambda i: (0, 0)),      # W_self^T
                pl.BlockSpec((1, fout), lambda i: (0, 0)),        # bias
            ],
            out_specs=pl.BlockSpec((tile_n, fout), lambda i: (i, 0)),
        ),
        compiler_params=pltpu.CompilerParams(
            dimension_semantics=("parallel",),
            vmem_limit_bytes=32 * 1024 * 1024,
        ),
        cost_estimate=pl.CostEstimate(
            flops=int(flops),
            transcendentals=int(n_pad),
            bytes_accessed=int(bytes_accessed),
        ),
    )(a_norm, h, wn_t, ws_t, b_row)


# ---------------------------------------------------------------------------
# Wrapper: Encoder.forward(edge_index, inputs)
# ---------------------------------------------------------------------------
def _build_norm_adj(edge_index, n_pad):
    # Irregular scatter -> dense row-normalized (mean-aggregation) adjacency.
    src, dst = edge_index[0], edge_index[1]
    a = jnp.zeros((n_pad, n_pad), jnp.float32).at[dst, src].add(1.0)
    deg = jnp.sum(a, axis=1, keepdims=True)
    return a / jnp.maximum(deg, 1.0)


@functools.partial(jax.jit, static_argnums=())
def encoder_forward(params, edge_index, inputs):
    n, _ = inputs.shape
    n_pad = _round_up(n, 8)

    a_norm = _build_norm_adj(edge_index, n_pad)
    h = inputs.astype(jnp.float32)
    if n_pad != n:
        h = jnp.pad(h, ((0, n_pad - n), (0, 0)))

    for wn, ws, b in params:
        fin = h.shape[1]
        fout = wn.shape[0]
        tile_n = _choose_tile(n_pad, fin, fout)
        h = _sage_layer(
            a_norm, h, wn.T, ws.T, b.reshape(1, -1), tile_n=tile_n
        )
    return h[:n]


def encoder_ref(params, edge_index, inputs):
    n = inputs.shape[0]
    src, dst = edge_index[0], edge_index[1]
    a = jnp.zeros((n, n), jnp.float32).at[dst, src].add(1.0)
    a = a / jnp.maximum(jnp.sum(a, axis=1, keepdims=True), 1.0)
    h = inputs.astype(jnp.float32)
    for wn, ws, b in params:
        h = a @ h @ wn.T + h @ ws.T + b
        nrm = jnp.sqrt(jnp.sum(h * h, axis=-1, keepdims=True))
        h = h / jnp.maximum(nrm, 1e-12)
        h = jnp.maximum(h, 0.0)
    return h


def init_encoder_params(key, in_feats, n_hidden, n_layers):
    params = []
    fin = in_feats
    for _ in range(n_layers):
        key, k1, k2, k3 = jax.random.split(key, 4)
        scale = 1.0 / np.sqrt(fin)
        wn = jax.random.uniform(k1, (n_hidden, fin), jnp.float32, -scale, scale)
        ws = jax.random.uniform(k2, (n_hidden, fin), jnp.float32, -scale, scale)
        b = jax.random.uniform(k3, (n_hidden,), jnp.float32, -scale, scale)
        params.append((wn, ws, b))
        fin = n_hidden
    return params


if __name__ == "__main__":
    key = jax.random.PRNGKey(0)
    k_feat, k_src, k_dst, k_par = jax.random.split(key, 4)

    n_nodes, n_edges = 256, 1024
    in_feats, n_hidden, n_layers = 64, 128, 2

    inputs = jax.random.normal(k_feat, (n_nodes, in_feats), dtype=jnp.float32)
    src = jax.random.randint(k_src, (n_edges,), 0, n_nodes)
    dst = jax.random.randint(k_dst, (n_edges,), 0, n_nodes)
    edge_index = jnp.stack([src, dst]).astype(jnp.int32)

    params = init_encoder_params(k_par, in_feats, n_hidden, n_layers)

    out = jax.block_until_ready(encoder_forward(params, edge_index, inputs))
    ref = jax.block_until_ready(encoder_ref(params, edge_index, inputs))

    np.testing.assert_allclose(np.asarray(out), np.asarray(ref), rtol=1e-5, atol=1e-4)
    print("KERNEL_OK")
</pallas_src>

<mosaic_0001>
module attributes {stable_mosaic.version = 11 : i64} {
  func.func private @main(%arg0: i32) attributes {dimension_semantics = [#tpu.dimension_semantics<core_parallel>], iteration_bounds = array<i64: 2>, tpu.core_type = #tpu.core_type<sc_scalar_subcore>, window_params = []} {
    return
  }
}

module attributes {stable_mosaic.version = 11 : i64} {
  func.func private @main(%arg0: i32) attributes {dimension_semantics = [#tpu.dimension_semantics<core_parallel>], iteration_bounds = array<i64: 2>, tpu.core_type = #tpu.core_type<sc_scalar_subcore>, window_params = []} {
    return
  }
}

module attributes {stable_mosaic.version = 11 : i64} {
  func.func @kernel(%arg0: i32, %arg1: memref<256x256xf32, #tpu.memory_space<vmem>>, %arg2: memref<256x64xf32, #tpu.memory_space<vmem>>, %arg3: memref<64x128xf32, #tpu.memory_space<vmem>>, %arg4: memref<64x128xf32, #tpu.memory_space<vmem>>, %arg5: memref<1x128xf32, #tpu.memory_space<vmem>>, %arg6: memref<256x128xf32, #tpu.memory_space<vmem>>) attributes {dimension_semantics = [#tpu.dimension_semantics<parallel>], iteration_bounds = array<i64: 1>, scalar_prefetch = 0 : i64, scratch_operands = 0 : i64, tpu.core_type = #tpu.core_type<tc>, window_params = [{transform_indices = @transform_0, window_bounds = array<i64: 256, 256>}, {pipeline_mode = #tpu.pipeline_mode<synchronous>, transform_indices = @transform_1, window_bounds = array<i64: 256, 64>}, {pipeline_mode = #tpu.pipeline_mode<synchronous>, transform_indices = @transform_2, window_bounds = array<i64: 64, 128>}, {pipeline_mode = #tpu.pipeline_mode<synchronous>, transform_indices = @transform_3, window_bounds = array<i64: 64, 128>}, {pipeline_mode = #tpu.pipeline_mode<synchronous>, transform_indices = @transform_4, window_bounds = array<i64: 1, 128>}, {transform_indices = @transform_5, window_bounds = array<i64: 256, 128>}]} {
    %c256_i32 = arith.constant 256 : i32
    %0 = arith.muli %arg0, %c256_i32 : i32
    %1 = tpu.assume_multiple %0, 256 : i32
    %c0 = arith.constant 0 : index
    %c0_0 = arith.constant 0 : index
    %2 = vector.load %arg2[%c0, %c0_0] : memref<256x64xf32, #tpu.memory_space<vmem>>, vector<256x64xf32>
    %3 = arith.index_cast %1 : i32 to index
    %c0_1 = arith.constant 0 : index
    %4 = vector.load %arg2[%3, %c0_1] : memref<256x64xf32, #tpu.memory_space<vmem>>, vector<256x64xf32>
    %c0_2 = arith.constant 0 : index
    %c0_3 = arith.constant 0 : index
    %5 = vector.load %arg1[%c0_2, %c0_3] : memref<256x256xf32, #tpu.memory_space<vmem>>, vector<256x256xf32>
    %cst = arith.constant dense<0.000000e+00> : vector<256x64xf32>
    %6 = tpu.matmul %5, %2, %cst {dimension_numbers = #tpu.dot_dimension_numbers<[1], [0], [0], [1], [0, 0, 1, 1], [], []>} : vector<256x256xf32>, vector<256x64xf32>, vector<256x64xf32> -> vector<256x64xf32>
    %c0_4 = arith.constant 0 : index
    %c0_5 = arith.constant 0 : index
    %7 = vector.load %arg3[%c0_4, %c0_5] : memref<64x128xf32, #tpu.memory_space<vmem>>, vector<64x128xf32>
    %cst_6 = arith.constant dense<0.000000e+00> : vector<256x128xf32>
    %8 = tpu.matmul %6, %7, %cst_6 {dimension_numbers = #tpu.dot_dimension_numbers<[1], [0], [0], [1], [0, 0, 1, 1], [], []>} : vector<256x64xf32>, vector<64x128xf32>, vector<256x128xf32> -> vector<256x128xf32>
    %c0_7 = arith.constant 0 : index
    %c0_8 = arith.constant 0 : index
    %9 = vector.load %arg4[%c0_7, %c0_8] : memref<64x128xf32, #tpu.memory_space<vmem>>, vector<64x128xf32>
    %cst_9 = arith.constant dense<0.000000e+00> : vector<256x128xf32>
    %10 = tpu.matmul %4, %9, %cst_9 {dimension_numbers = #tpu.dot_dimension_numbers<[1], [0], [0], [1], [0, 0, 1, 1], [], []>} : vector<256x64xf32>, vector<64x128xf32>, vector<256x128xf32> -> vector<256x128xf32>
    %11 = arith.addf %8, %10 : vector<256x128xf32>
    %c0_10 = arith.constant 0 : index
    %c0_11 = arith.constant 0 : index
    %12 = vector.load %arg5[%c0_10, %c0_11] : memref<1x128xf32, #tpu.memory_space<vmem>>, vector<1x128xf32>
    %13 = vector.broadcast %12 : vector<1x128xf32> to vector<256x128xf32>
    %14 = arith.addf %11, %13 : vector<256x128xf32>
    %15 = arith.mulf %14, %14 : vector<256x128xf32>
    %cst_12 = arith.constant dense<0.000000e+00> : vector<256xf32>
    %16 = vector.multi_reduction <add>, %15, %cst_12 [1] : vector<256x128xf32> to vector<256xf32>
    %17 = vector.shape_cast %16 : vector<256xf32> to vector<256x1xf32>
    %18 = math.sqrt %17 : vector<256x1xf32>
    %cst_13 = arith.constant 9.99999996E-13 : f32
    %19 = vector.broadcast %cst_13 : f32 to vector<256x1xf32>
    %20 = arith.maximumf %18, %19 : vector<256x1xf32>
    %21 = vector.broadcast %20 : vector<256x1xf32> to vector<256x128xf32>
    %22 = arith.divf %14, %21 : vector<256x128xf32>
    %cst_14 = arith.constant 0.000000e+00 : f32
    %23 = vector.broadcast %cst_14 : f32 to vector<256x128xf32>
    %24 = arith.maximumf %22, %23 : vector<256x128xf32>
    %c0_15 = arith.constant 0 : index
    %c0_16 = arith.constant 0 : index
    %25 = vector.load %arg6[%c0_15, %c0_16] : memref<256x128xf32, #tpu.memory_space<vmem>>, vector<256x128xf32>
    tpu.vector_store %arg6[%c0_15, %c0_16], %24 {strides = array<i32>} : memref<256x128xf32, #tpu.memory_space<vmem>>, vector<256x128xf32>,
    return
  }
  func.func @transform_0(%arg0: i32) -> (i32, i32) {
    %c0_i32 = arith.constant 0 : i32
    %c0_i32_0 = arith.constant 0 : i32
    return %arg0, %c0_i32 : i32, i32
  }
  func.func @transform_1(%arg0: i32) -> (i32, i32) {
    %c0_i32 = arith.constant 0 : i32
    %c0_i32_0 = arith.constant 0 : i32
    %c0_i32_1 = arith.constant 0 : i32
    return %c0_i32, %c0_i32_0 : i32, i32
  }
  func.func @transform_2(%arg0: i32) -> (i32, i32) {
    %c0_i32 = arith.constant 0 : i32
    %c0_i32_0 = arith.constant 0 : i32
    %c0_i32_1 = arith.constant 0 : i32
    return %c0_i32, %c0_i32_0 : i32, i32
  }
  func.func @transform_3(%arg0: i32) -> (i32, i32) {
    %c0_i32 = arith.constant 0 : i32
    %c0_i32_0 = arith.constant 0 : i32
    %c0_i32_1 = arith.constant 0 : i32
    return %c0_i32, %c0_i32_0 : i32, i32
  }
  func.func @transform_4(%arg0: i32) -> (i32, i32) {
    %c0_i32 = arith.constant 0 : i32
    %c0_i32_0 = arith.constant 0 : i32
    %c0_i32_1 = arith.constant 0 : i32
    return %c0_i32, %c0_i32_0 : i32, i32
  }
  func.func @transform_5(%arg0: i32) -> (i32, i32) {
    %c0_i32 = arith.constant 0 : i32
    %c0_i32_0 = arith.constant 0 : i32
    return %arg0, %c0_i32 : i32, i32
  }
}

module attributes {stable_mosaic.version = 11 : i64} {
  func.func @kernel(%arg0: i32, %arg1: memref<256x256xf32, #tpu.memory_space<vmem>>, %arg2: memref<256x128xf32, #tpu.memory_space<vmem>>, %arg3: memref<128x128xf32, #tpu.memory_space<vmem>>, %arg4: memref<128x128xf32, #tpu.memory_space<vmem>>, %arg5: memref<1x128xf32, #tpu.memory_space<vmem>>, %arg6: memref<256x128xf32, #tpu.memory_space<vmem>>) attributes {dimension_semantics = [#tpu.dimension_semantics<parallel>], iteration_bounds = array<i64: 1>, scalar_prefetch = 0 : i64, scratch_operands = 0 : i64, tpu.core_type = #tpu.core_type<tc>, window_params = [{transform_indices = @transform_0, window_bounds = array<i64: 256, 256>}, {pipeline_mode = #tpu.pipeline_mode<synchronous>, transform_indices = @transform_1, window_bounds = array<i64: 256, 128>}, {pipeline_mode = #tpu.pipeline_mode<synchronous>, transform_indices = @transform_2, window_bounds = array<i64: 128, 128>}, {pipeline_mode = #tpu.pipeline_mode<synchronous>, transform_indices = @transform_3, window_bounds = array<i64: 128, 128>}, {pipeline_mode = #tpu.pipeline_mode<synchronous>, transform_indices = @transform_4, window_bounds = array<i64: 1, 128>}, {transform_indices = @transform_5, window_bounds = array<i64: 256, 128>}]} {
    %c256_i32 = arith.constant 256 : i32
    %0 = arith.muli %arg0, %c256_i32 : i32
    %1 = tpu.assume_multiple %0, 256 : i32
    %c0 = arith.constant 0 : index
    %c0_0 = arith.constant 0 : index
    %2 = vector.load %arg2[%c0, %c0_0] : memref<256x128xf32, #tpu.memory_space<vmem>>, vector<256x128xf32>
    %3 = arith.index_cast %1 : i32 to index
    %c0_1 = arith.constant 0 : index
    %4 = vector.load %arg2[%3, %c0_1] : memref<256x128xf32, #tpu.memory_space<vmem>>, vector<256x128xf32>
    %c0_2 = arith.constant 0 : index
    %c0_3 = arith.constant 0 : index
    %5 = vector.load %arg1[%c0_2, %c0_3] : memref<256x256xf32, #tpu.memory_space<vmem>>, vector<256x256xf32>
    %cst = arith.constant dense<0.000000e+00> : vector<256x128xf32>
    %6 = tpu.matmul %5, %2, %cst {dimension_numbers = #tpu.dot_dimension_numbers<[1], [0], [0], [1], [0, 0, 1, 1], [], []>} : vector<256x256xf32>, vector<256x128xf32>, vector<256x128xf32> -> vector<256x128xf32>
    %c0_4 = arith.constant 0 : index
    %c0_5 = arith.constant 0 : index
    %7 = vector.load %arg3[%c0_4, %c0_5] : memref<128x128xf32, #tpu.memory_space<vmem>>, vector<128x128xf32>
    %cst_6 = arith.constant dense<0.000000e+00> : vector<256x128xf32>
    %8 = tpu.matmul %6, %7, %cst_6 {dimension_numbers = #tpu.dot_dimension_numbers<[1], [0], [0], [1], [0, 0, 1, 1], [], []>} : vector<256x128xf32>, vector<128x128xf32>, vector<256x128xf32> -> vector<256x128xf32>
    %c0_7 = arith.constant 0 : index
    %c0_8 = arith.constant 0 : index
    %9 = vector.load %arg4[%c0_7, %c0_8] : memref<128x128xf32, #tpu.memory_space<vmem>>, vector<128x128xf32>
    %cst_9 = arith.constant dense<0.000000e+00> : vector<256x128xf32>
    %10 = tpu.matmul %4, %9, %cst_9 {dimension_numbers = #tpu.dot_dimension_numbers<[1], [0], [0], [1], [0, 0, 1, 1], [], []>} : vector<256x128xf32>, vector<128x128xf32>, vector<256x128xf32> -> vector<256x128xf32>
    %11 = arith.addf %8, %10 : vector<256x128xf32>
    %c0_10 = arith.constant 0 : index
    %c0_11 = arith.constant 0 : index
    %12 = vector.load %arg5[%c0_10, %c0_11] : memref<1x128xf32, #tpu.memory_space<vmem>>, vector<1x128xf32>
    %13 = vector.broadcast %12 : vector<1x128xf32> to vector<256x128xf32>
    %14 = arith.addf %11, %13 : vector<256x128xf32>
    %15 = arith.mulf %14, %14 : vector<256x128xf32>
    %cst_12 = arith.constant dense<0.000000e+00> : vector<256xf32>
    %16 = vector.multi_reduction <add>, %15, %cst_12 [1] : vector<256x128xf32> to vector<256xf32>
    %17 = vector.shape_cast %16 : vector<256xf32> to vector<256x1xf32>
    %18 = math.sqrt %17 : vector<256x1xf32>
    %cst_13 = arith.constant 9.99999996E-13 : f32
    %19 = vector.broadcast %cst_13 : f32 to vector<256x1xf32>
    %20 = arith.maximumf %18, %19 : vector<256x1xf32>
    %21 = vector.broadcast %20 : vector<256x1xf32> to vector<256x128xf32>
    %22 = arith.divf %14, %21 : vector<256x128xf32>
    %cst_14 = arith.constant 0.000000e+00 : f32
    %23 = vector.broadcast %cst_14 : f32 to vector<256x128xf32>
    %24 = arith.maximumf %22, %23 : vector<256x128xf32>
    %c0_15 = arith.constant 0 : index
    %c0_16 = arith.constant 0 : index
    %25 = vector.load %arg6[%c0_15, %c0_16] : memref<256x128xf32, #tpu.memory_space<vmem>>, vector<256x128xf32>
    tpu.vector_store %arg6[%c0_15, %c0_16], %24 {strides = array<i32>} : memref<256x128xf32, #tpu.memory_space<vmem>>, vector<256x128xf32>,
    return
  }
  func.func @transform_0(%arg0: i32) -> (i32, i32) {
    %c0_i32 = arith.constant 0 : i32
    %c0_i32_0 = arith.constant 0 : i32
    return %arg0, %c0_i32 : i32, i32
  }
  func.func @transform_1(%arg0: i32) -> (i32, i32) {
    %c0_i32 = arith.constant 0 : i32
    %c0_i32_0 = arith.constant 0 : i32
    %c0_i32_1 = arith.constant 0 : i32
    return %c0_i32, %c0_i32_0 : i32, i32
  }
  func.func @transform_2(%arg0: i32) -> (i32, i32) {
    %c0_i32 = arith.constant 0 : i32
    %c0_i32_0 = arith.constant 0 : i32
    %c0_i32_1 = arith.constant 0 : i32
    return %c0_i32, %c0_i32_0 : i32, i32
  }
  func.func @transform_3(%arg0: i32) -> (i32, i32) {
    %c0_i32 = arith.constant 0 : i32
    %c0_i32_0 = arith.constant 0 : i32
    %c0_i32_1 = arith.constant 0 : i32
    return %c0_i32, %c0_i32_0 : i32, i32
  }
  func.func @transform_4(%arg0: i32) -> (i32, i32) {
    %c0_i32 = arith.constant 0 : i32
    %c0_i32_0 = arith.constant 0 : i32
    %c0_i32_1 = arith.constant 0 : i32
    return %c0_i32, %c0_i32_0 : i32, i32
  }
  func.func @transform_5(%arg0: i32) -> (i32, i32) {
    %c0_i32 = arith.constant 0 : i32
    %c0_i32_0 = arith.constant 0 : i32
    return %arg0, %c0_i32 : i32, i32
  }
}

</mosaic_0001>

<llo_original>
// kernel: encoder_forward.3
$region0: #{encoder_forward.3}
  #allocation0 [shape = 'u32[]', space=smem, size = 0x4, offset = 0x4, fixed_abs, tag = 'smem constant byte address 0x4 - core index']
  #allocation1 [shape = 'u32[144,128]{1,0:T(1,128)}', space=vmem, size = 0x12000, scoped, tag = 'internal scratch']
  %s0 = inlined_call_operand.vmem [shape: f32[256,256], index: 0, kind: input, shape index: {}]
  %s1 = inlined_call_operand.vmem [shape: f32[256,128], index: 1, kind: input, shape index: {}]
  %s2 = inlined_call_operand.vmem [shape: f32[128,128], index: 2, kind: input, shape index: {}]
  %s3 = inlined_call_operand.vmem [shape: f32[128,128], index: 3, kind: input, shape index: {}]
  %s4 = inlined_call_operand.vmem [shape: f32[1,128], index: 4, kind: input, shape index: {}]
  %s5 = inlined_call_operand.hbm [shape: f32[256,128], index: 5, kind: output, shape index: {}]
  %s6 = sld [smem:[#allocation0]]
  $region30: #{encoder_forward.3} parent=0
    _
  %s8 = ssub.s32 1, %s6
  %s9 = scalar_select 0, %s8, %s6
  $region1: #{encoder_forward.3} parent=0
    #allocation2 [shape = 'u8[131072]{0}', space=vmem, size = 0x20000, scoped, tag = 'output window, operand 0, single buffered']
    #allocation3 [shape = 's32[1]{0}', space=sflag, size = 0x4, scoped, tag = 'scoped memory for encoder_forward.3']
    %10 = vsyncpa [#allocation3], 0
    // Predicated region
    $region2: #{encoder_forward.3} parent=1 // pred_check
      _
    $region3: #{encoder_forward.3} parent=1 // pred_check_branch
      %12 = sbr.rel (0) target = $region5
    $region4: #{encoder_forward.3} parent=1 // pred_region
      _
    $region5: #{encoder_forward.3} parent=1 // pred_fallthru
      _
    // Predicated region
    $region6: #{encoder_forward.3} parent=1 // pred_check
      _
    $region7: #{encoder_forward.3} parent=1 // pred_check_branch
      %14 = sbr.rel (0) target = $region9
    $region8: #{encoder_forward.3} parent=1 // pred_region
      _
    $region9: #{encoder_forward.3} parent=1 // pred_fallthru
      _
    // Predicated region
    $region10: #{encoder_forward.3} parent=1 // pred_check
      _
    $region11: #{encoder_forward.3} parent=1 // pred_check_branch
      %16 = sbr.rel (0) target = $region13
    $region12: #{encoder_forward.3} parent=1 // pred_region
      _
    $region13: #{encoder_forward.3} parent=1 // pred_fallthru
      _
    // Predicated region
    $region14: #{encoder_forward.3} parent=1 // pred_check
      _
    $region15: #{encoder_forward.3} parent=1 // pred_check_branch
      %18 = sbr.rel (0) target = $region17
    $region16: #{encoder_forward.3} parent=1 // pred_region
      _
    $region17: #{encoder_forward.3} parent=1 // pred_fallthru
      _
    // Predicated region
    $region18: #{encoder_forward.3} parent=1 // pred_check
      _
    $region19: #{encoder_forward.3} parent=1 // pred_check_branch
      %20 = sbr.rel (0) target = $region21
    $region20: #{encoder_forward.3} parent=1 // pred_region
      _
    $region21: #{encoder_forward.3} parent=1 // pred_fallthru
      _
    %s21 = smul.u32 0, 256
    %v22 = vld [vmem:[%s1] sm:$0xff]
    %v23 = vld [vmem:[%s1 + $0x8] sm:$0xff]
    %v24 = vld [vmem:[%s1 + $0x10] sm:$0xff]
    %v25 = vld [vmem:[%s1 + $0x18] sm:$0xff]
    %v26 = vld [vmem:[%s1 + $0x20] sm:$0xff]
    %v27 = vld [vmem:[%s1 + $0x28] sm:$0xff]
    %v28 = vld [vmem:[%s1 + $0x30] sm:$0xff]
    %v29 = vld [vmem:[%s1 + $0x38] sm:$0xff]
    %v30 = vld [vmem:[%s1 + $0x40] sm:$0xff]
    %v31 = vld [vmem:[%s1 + $0x48] sm:$0xff]
    %v32 = vld [vmem:[%s1 + $0x50] sm:$0xff]
    %v33 = vld [vmem:[%s1 + $0x58] sm:$0xff]
    %v34 = vld [vmem:[%s1 + $0x60] sm:$0xff]
    %v35 = vld [vmem:[%s1 + $0x68] sm:$0xff]
    %v36 = vld [vmem:[%s1 + $0x70] sm:$0xff]
    %v37 = vld [vmem:[%s1 + $0x78] sm:$0xff]
    %v38 = vld [vmem:[%s1 + $0x80] sm:$0xff]
    %v39 = vld [vmem:[%s1 + $0x88] sm:$0xff]
    %v40 = vld [vmem:[%s1 + $0x90] sm:$0xff]
    %v41 = vld [vmem:[%s1 + $0x98] sm:$0xff]
    %v42 = vld [vmem:[%s1 + $0xa0] sm:$0xff]
    %v43 = vld [vmem:[%s1 + $0xa8] sm:$0xff]
    %v44 = vld [vmem:[%s1 + $0xb0] sm:$0xff]
    %v45 = vld [vmem:[%s1 + $0xb8] sm:$0xff]
    %v46 = vld [vmem:[%s1 + $0xc0] sm:$0xff]
    %v47 = vld [vmem:[%s1 + $0xc8] sm:$0xff]
    %v48 = vld [vmem:[%s1 + $0xd0] sm:$0xff]
    %v49 = vld [vmem:[%s1 + $0xd8] sm:$0xff]
    %v50 = vld [vmem:[%s1 + $0xe0] sm:$0xff]
    %v51 = vld [vmem:[%s1 + $0xe8] sm:$0xff]
    %v52 = vld [vmem:[%s1 + $0xf0] sm:$0xff]
    %v53 = vld [vmem:[%s1 + $0xf8] sm:$0xff]
    %s54 = scalar_lea.vmem %s1, %s21
    %v55 = vld [vmem:[%s54] sm:$0xff]
    %v56 = vld [vmem:[%s54 + $0x8] sm:$0xff]
    %v57 = vld [vmem:[%s54 + $0x10] sm:$0xff]
    %v58 = vld [vmem:[%s54 + $0x18] sm:$0xff]
    %v59 = vld [vmem:[%s54 + $0x20] sm:$0xff]
    %v60 = vld [vmem:[%s54 + $0x28] sm:$0xff]
    %v61 = vld [vmem:[%s54 + $0x30] sm:$0xff]
    %v62 = vld [vmem:[%s54 + $0x38] sm:$0xff]
    %v63 = vld [vmem:[%s54 + $0x40] sm:$0xff]
    %v64 = vld [vmem:[%s54 + $0x48] sm:$0xff]
    %v65 = vld [vmem:[%s54 + $0x50] sm:$0xff]
    %v66 = vld [vmem:[%s54 + $0x58] sm:$0xff]
    %v67 = vld [vmem:[%s54 + $0x60] sm:$0xff]
    %v68 = vld [vmem:[%s54 + $0x68] sm:$0xff]
    %v69 = vld [vmem:[%s54 + $0x70] sm:$0xff]
    %v70 = vld [vmem:[%s54 + $0x78] sm:$0xff]
    %v71 = vld [vmem:[%s54 + $0x80] sm:$0xff]
    %v72 = vld [vmem:[%s54 + $0x88] sm:$0xff]
    %v73 = vld [vmem:[%s54 + $0x90] sm:$0xff]
    %v74 = vld [vmem:[%s54 + $0x98] sm:$0xff]
    %v75 = vld [vmem:[%s54 + $0xa0] sm:$0xff]
    %v76 = vld [vmem:[%s54 + $0xa8] sm:$0xff]
    %v77 = vld [vmem:[%s54 + $0xb0] sm:$0xff]
    %v78 = vld [vmem:[%s54 + $0xb8] sm:$0xff]
    %v79 = vld [vmem:[%s54 + $0xc0] sm:$0xff]
    %v80 = vld [vmem:[%s54 + $0xc8] sm:$0xff]
    %v81 = vld [vmem:[%s54 + $0xd0] sm:$0xff]
    %v82 = vld [vmem:[%s54 + $0xd8] sm:$0xff]
    %v83 = vld [vmem:[%s54 + $0xe0] sm:$0xff]
    %v84 = vld [vmem:[%s54 + $0xe8] sm:$0xff]
    %v85 = vld [vmem:[%s54 + $0xf0] sm:$0xff]
    %v86 = vld [vmem:[%s54 + $0xf8] sm:$0xff]
    %v87 = vld [vmem:[%s0] sm:$0xff]
    %v88 = vld [vmem:[%s0 + $0x8] sm:$0xff]
    %v89 = vld [vmem:[%s0 + $0x10] sm:$0xff]
    %v90 = vld [vmem:[%s0 + $0x18] sm:$0xff]
    %v91 = vld [vmem:[%s0 + $0x20] sm:$0xff]
    %v92 = vld [vmem:[%s0 + $0x28] sm:$0xff]
    %v93 = vld [vmem:[%s0 + $0x30] sm:$0xff]
    %v94 = vld [vmem:[%s0 + $0x38] sm:$0xff]
    %v95 = vld [vmem:[%s0 + $0x40] sm:$0xff]
    %v96 = vld [vmem:[%s0 + $0x48] sm:$0xff]
    %v97 = vld [vmem:[%s0 + $0x50] sm:$0xff]
    %v98 = vld [vmem:[%s0 + $0x58] sm:$0xff]
    %v99 = vld [vmem:[%s0 + $0x60] sm:$0xff]
    %v100 = vld [vmem:[%s0 + $0x68] sm:$0xff]
    %v101 = vld [vmem:[%s0 + $0x70] sm:$0xff]
    %v102 = vld [vmem:[%s0 + $0x78] sm:$0xff]
    %v103 = vld [vmem:[%s0 + $0x80] sm:$0xff]
    %v104 = vld [vmem:[%s0 + $0x88] sm:$0xff]
    %v105 = vld [vmem:[%s0 + $0x90] sm:$0xff]
    %v106 = vld [vmem:[%s0 + $0x98] sm:$0xff]
    %v107 = vld [vmem:[%s0 + $0xa0] sm:$0xff]
    %v108 = vld [vmem:[%s0 + $0xa8] sm:$0xff]
    %v109 = vld [vmem:[%s0 + $0xb0] sm:$0xff]
    %v110 = vld [vmem:[%s0 + $0xb8] sm:$0xff]
    %v111 = vld [vmem:[%s0 + $0xc0] sm:$0xff]
    %v112 = vld [vmem:[%s0 + $0xc8] sm:$0xff]
    %v113 = vld [vmem:[%s0 + $0xd0] sm:$0xff]
    %v114 = vld [vmem:[%s0 + $0xd8] sm:$0xff]
    %v115 = vld [vmem:[%s0 + $0xe0] sm:$0xff]
    %v116 = vld [vmem:[%s0 + $0xe8] sm:$0xff]
    %v117 = vld [vmem:[%s0 + $0xf0] sm:$0xff]
    %v118 = vld [vmem:[%s0 + $0xf8] sm:$0xff]
    %v119 = vld [vmem:[%s0 + $0x100] sm:$0xff]
    %v120 = vld [vmem:[%s0 + $0x108] sm:$0xff]
    %v121 = vld [vmem:[%s0 + $0x110] sm:$0xff]
    %v122 = vld [vmem:[%s0 + $0x118] sm:$0xff]
    %v123 = vld [vmem:[%s0 + $0x120] sm:$0xff]
    %v124 = vld [vmem:[%s0 + $0x128] sm:$0xff]
    %v125 = vld [vmem:[%s0 + $0x130] sm:$0xff]
    %v126 = vld [vmem:[%s0 + $0x138] sm:$0xff]
    %v127 = vld [vmem:[%s0 + $0x140] sm:$0xff]
    %v128 = vld [vmem:[%s0 + $0x148] sm:$0xff]
    %v129 = vld [vmem:[%s0 + $0x150] sm:$0xff]
    %v130 = vld [vmem:[%s0 + $0x158] sm:$0xff]
    %v131 = vld [vmem:[%s0 + $0x160] sm:$0xff]
    %v132 = vld [vmem:[%s0 + $0x168] sm:$0xff]
    %v133 = vld [vmem:[%s0 + $0x170] sm:$0xff]
    %v134 = vld [vmem:[%s0 + $0x178] sm:$0xff]
    %v135 = vld [vmem:[%s0 + $0x180] sm:$0xff]
    %v136 = vld [vmem:[%s0 + $0x188] sm:$0xff]
    %v137 = vld [vmem:[%s0 + $0x190] sm:$0xff]
    %v138 = vld [vmem:[%s0 + $0x198] sm:$0xff]
    %v139 = vld [vmem:[%s0 + $0x1a0] sm:$0xff]
    %v140 = vld [vmem:[%s0 + $0x1a8] sm:$0xff]
    %v141 = vld [vmem:[%s0 + $0x1b0] sm:$0xff]
    %v142 = vld [vmem:[%s0 + $0x1b8] sm:$0xff]
    %v143 = vld [vmem:[%s0 + $0x1c0] sm:$0xff]
    %v144 = vld [vmem:[%s0 + $0x1c8] sm:$0xff]
    %v145 = vld [vmem:[%s0 + $0x1d0] sm:$0xff]
    %v146 = vld [vmem:[%s0 + $0x1d8] sm:$0xff]
    %v147 = vld [vmem:[%s0 + $0x1e0] sm:$0xff]
    %v148 = vld [vmem:[%s0 + $0x1e8] sm:$0xff]
    %v149 = vld [vmem:[%s0 + $0x1f0] sm:$0xff]
    %v150 = vld [vmem:[%s0 + $0x1f8] sm:$0xff]
    %151 = vmatprep.subr.mxu0 0.0
    %152 = vmatpush1.msra.mxu0 %v22
    %153 = vmatprep.subr.mxu0 0.0
    %154 = vmatpush1.msra.mxu0 %v23
    %155 = vmatprep.subr.mxu0 0.0
    %156 = vmatpush1.msra.mxu0 %v24
    %157 = vmatprep.subr.mxu0 0.0
    %158 = vmatpush1.msra.mxu0 %v25
    %159 = vmatprep.subr.mxu0 0.0
    %160 = vmatpush1.msra.mxu0 %v26
    %161 = vmatprep.subr.mxu0 0.0
    %162 = vmatpush1.msra.mxu0 %v27
    %163 = vmatprep.subr.mxu0 0.0
    %164 = vmatpush1.msra.mxu0 %v28
    %165 = vmatprep.subr.mxu0 0.0
    %166 = vmatpush1.msra.mxu0 %v29
    %167 = vmatprep.subr.mxu0 0.0
    %168 = vmatpush1.msra.mxu0 %v30
    %169 = vmatprep.subr.mxu0 0.0
    %170 = vmatpush1.msra.mxu0 %v31
    %171 = vmatprep.subr.mxu0 0.0
    %172 = vmatpush1.msra.mxu0 %v32
    %173 = vmatprep.subr.mxu0 0.0
    %174 = vmatpush1.msra.mxu0 %v33
    %175 = vmatprep.subr.mxu0 0.0
    %176 = vmatpush1.msra.mxu0 %v34
    %177 = vmatprep.subr.mxu0 0.0
    %178 = vmatpush1.msra.mxu0 %v35
    %179 = vmatprep.subr.mxu0 0.0
    %180 = vmatpush1.msra.mxu0 %v36
    %181 = vmatprep.subr.mxu0 0.0
    %182 = vmatpush1.msra.mxu0 %v37
    %183 = vmatprep.subr.mxu0 0.0
    %184 = vmatpush1.msra.mxu0 %v38
    %185 = vmatprep.subr.mxu0 0.0
    %186 = vmatpush1.msra.mxu0 %v39
    %187 = vmatprep.subr.mxu0 0.0
    %188 = vmatpush1.msra.mxu0 %v40
    %189 = vmatprep.subr.mxu0 0.0
    %190 = vmatpush1.msra.mxu0 %v41
    %191 = vmatprep.subr.mxu0 0.0
    %192 = vmatpush1.msra.mxu0 %v42
    %193 = vmatprep.subr.mxu0 0.0
    %194 = vmatpush1.msra.mxu0 %v43
    %195 = vmatprep.subr.mxu0 0.0
    %196 = vmatpush1.msra.mxu0 %v44
    %197 = vmatprep.subr.mxu0 0.0
    %198 = vmatpush1.msra.mxu0 %v45
    %199 = vmatprep.subr.mxu0 0.0
    %200 = vmatpush1.msra.mxu0 %v46
    %201 = vmatprep.subr.mxu0 0.0
    %202 = vmatpush1.msra.mxu0 %v47
    %203 = vmatprep.subr.mxu0 0.0
    %204 = vmatpush1.msra.mxu0 %v48
    %205 = vmatprep.subr.mxu0 0.0
    %206 = vmatpush1.msra.mxu0 %v49
    %207 = vmatprep.subr.mxu0 0.0
    %208 = vmatpush1.msra.mxu0 %v50
    %209 = vmatprep.subr.mxu0 0.0
    %210 = vmatpush1.msra.mxu0 %v51
    %211 = vmatprep.subr.mxu0 0.0
    %212 = vmatpush1.msra.mxu0 %v52
    %213 = vmatprep.subr.mxu0 0.0
    %214 = vmatpush1.msra.mxu0 %v53
    %215 = vmatprep.mubr.f32.mxu0 %v88
    %216 = vmatmul.mubr.f32.gmra.mrb[0].mxu0 %v87
    %v217 = vpop.f32.mrb[0].mxu0
    %v218 = vadd.f32 0.0, %v217
    %v219 = vpop.f32.mrb[0].mxu0
    %220 = vmatprep.mubr.f32.mxu0 %v90
    %221 = vmatmul.mubr.f32.gmra.mrb[0].mxu0 %v89
    %v222 = vpop.f32.mrb[0].mxu0
    %v223 = vadd.f32 0.0, %v222
    %v224 = vpop.f32.mrb[0].mxu0
    %225 = vmatprep.mubr.f32.mxu0 %v92
    %226 = vmatmul.mubr.f32.gmra.mrb[0].mxu0 %v91
    %v227 = vpop.f32.mrb[0].mxu0
    %v228 = vadd.f32 0.0, %v227
    %v229 = vpop.f32.mrb[0].mxu0
    %230 = vmatprep.mubr.f32.mxu0 %v94
    %231 = vmatmul.mubr.f32.gmra.mrb[0].mxu0 %v93
    %v232 = vpop.f32.mrb[0].mxu0
    %v233 = vadd.f32 0.0, %v232
    %v234 = vpop.f32.mrb[0].mxu0
    %235 = vmatprep.mubr.f32.mxu0 %v96
    %236 = vmatmul.mubr.f32.gmra.mrb[0].mxu0 %v95
    %v237 = vpop.f32.mrb[0].mxu0
    %v238 = vadd.f32 0.0, %v237
    %v239 = vpop.f32.mrb[0].mxu0
    %240 = vmatprep.mubr.f32.mxu0 %v98
    %241 = vmatmul.mubr.f32.gmra.mrb[0].mxu0 %v97
    %v242 = vpop.f32.mrb[0].mxu0
    %v243 = vadd.f32 0.0, %v242
    %v244 = vpop.f32.mrb[0].mxu0
    %245 = vmatprep.mubr.f32.mxu0 %v100
    %246 = vmatmul.mubr.f32.gmra.mrb[0].mxu0 %v99
    %v247 = vpop.f32.mrb[0].mxu0
    %v248 = vadd.f32 0.0, %v247
    %v249 = vpop.f32.mrb[0].mxu0
    %250 = vmatprep.mubr.f32.mxu0 %v102
    %251 = vmatmul.mubr.f32.gmra.mrb[0].mxu0 %v101
    %v252 = vpop.f32.mrb[0].mxu0
    %v253 = vadd.f32 0.0, %v252
    %v254 = vpop.f32.mrb[0].mxu0
    %255 = vmatprep.mubr.f32.mxu0 %v104
    %256 = vmatmul.mubr.f32.gmra.mrb[0].mxu0 %v103
    %v257 = vpop.f32.mrb[0].mxu0
    %v258 = vadd.f32 0.0, %v257
    %v259 = vpop.f32.mrb[0].mxu0
    %260 = vmatprep.mubr.f32.mxu0 %v106
    %261 = vmatmul.mubr.f32.gmra.mrb[0].mxu0 %v105
    %v262 = vpop.f32.mrb[0].mxu0
    %v263 = vadd.f32 0.0, %v262
    %v264 = vpop.f32.mrb[0].mxu0
    %265 = vmatprep.mubr.f32.mxu0 %v108
    %266 = vmatmul.mubr.f32.gmra.mrb[0].mxu0 %v107
    %v267 = vpop.f32.mrb[0].mxu0
    %v268 = vadd.f32 0.0, %v267
    %v269 = vpop.f32.mrb[0].mxu0
    %270 = vmatprep.mubr.f32.mxu0 %v110
    %271 = vmatmul.mubr.f32.gmra.mrb[0].mxu0 %v109
    %v272 = vpop.f32.mrb[0].mxu0
    %v273 = vadd.f32 0.0, %v272
    %v274 = vpop.f32.mrb[0].mxu0
    %275 = vmatprep.mubr.f32.mxu0 %v112
    %276 = vmatmul.mubr.f32.gmra.mrb[0].mxu0 %v111
    %v277 = vpop.f32.mrb[0].mxu0
    %v278 = vadd.f32 0.0, %v277
    %v279 = vpop.f32.mrb[0].mxu0
    %280 = vmatprep.mubr.f32.mxu0 %v114
    %281 = vmatmul.mubr.f32.gmra.mrb[0].mxu0 %v113
    %v282 = vpop.f32.mrb[0].mxu0
    %v283 = vadd.f32 0.0, %v282
    %v284 = vpop.f32.mrb[0].mxu0
    %285 = vmatprep.mubr.f32.mxu0 %v116
    %286 = vmatmul.mubr.f32.gmra.mrb[0].mxu0 %v115
    %v287 = vpop.f32.mrb[0].mxu0
    %v288 = vadd.f32 0.0, %v287
    %v289 = vpop.f32.mrb[0].mxu0
    %290 = vmatprep.mubr.f32.mxu0 %v118
    %291 = vmatmul.mubr.f32.gmra.mrb[0].mxu0 %v117
    %v292 = vpop.f32.mrb[0].mxu0
    %v293 = vadd.f32 0.0, %v292
    %v294 = vpop.f32.mrb[0].mxu0
    %295 = vmatprep.mubr.f32.mxu0 %v120
    %296 = vmatmul.mubr.f32.gmra.mrb[0].mxu0 %v119
    %v297 = vpop.f32.mrb[0].mxu0
    %v298 = vadd.f32 0.0, %v297
    %v299 = vpop.f32.mrb[0].mxu0
    %300 = vmatprep.mubr.f32.mxu0 %v122
    %301 = vmatmul.mubr.f32.gmra.mrb[0].mxu0 %v121
    %v302 = vpop.f32.mrb[0].mxu0
    %v303 = vadd.f32 0.0, %v302
    %v304 = vpop.f32.mrb[0].mxu0
    %305 = vmatprep.mubr.f32.mxu0 %v124
    %306 = vmatmul.mubr.f32.gmra.mrb[0].mxu0 %v123
    %v307 = vpop.f32.mrb[0].mxu0
    %v308 = vadd.f32 0.0, %v307
    %v309 = vpop.f32.mrb[0].mxu0
    %310 = vmatprep.mubr.f32.mxu0 %v126
    %311 = vmatmul.mubr.f32.gmra.mrb[0].mxu0 %v125
    %v312 = vpop.f32.mrb[0].mxu0
    %v313 = vadd.f32 0.0, %v312
    %v314 = vpop.f32.mrb[0].mxu0
    %315 = vmatprep.mubr.f32.mxu0 %v128
    %316 = vmatmul.mubr.f32.gmra.mrb[0].mxu0 %v127
    %v317 = vpop.f32.mrb[0].mxu0
    %v318 = vadd.f32 0.0, %v317
    %v319 = vpop.f32.mrb[0].mxu0
    %320 = vmatprep.mubr.f32.mxu0 %v130
    %321 = vmatmul.mubr.f32.gmra.mrb[0].mxu0 %v129
    %v322 = vpop.f32.mrb[0].mxu0
    %v323 = vadd.f32 0.0, %v322
    %v324 = vpop.f32.mrb[0].mxu0
    %325 = vmatprep.mubr.f32.mxu0 %v132
    %326 = vmatmul.mubr.f32.gmra.mrb[0].mxu0 %v131
    %v327 = vpop.f32.mrb[0].mxu0
    %v328 = vadd.f32 0.0, %v327
    %v329 = vpop.f32.mrb[0].mxu0
    %330 = vmatprep.mubr.f32.mxu0 %v134
    %331 = vmatmul.mubr.f32.gmra.mrb[0].mxu0 %v133
    %v332 = vpop.f32.mrb[0].mxu0
    %v333 = vadd.f32 0.0, %v332
    %v334 = vpop.f32.mrb[0].mxu0
    %335 = vmatprep.mubr.f32.mxu0 %v136
    %336 = vmatmul.mubr.f32.gmra.mrb[0].mxu0 %v135
    %v337 = vpop.f32.mrb[0].mxu0
    %v338 = vadd.f32 0.0, %v337
    %v339 = vpop.f32.mrb[0].mxu0
    %340 = vmatprep.mubr.f32.mxu0 %v138
    %341 = vmatmul.mubr.f32.gmra.mrb[0].mxu0 %v137
    %v342 = vpop.f32.mrb[0].mxu0
    %v343 = vadd.f32 0.0, %v342
    %v344 = vpop.f32.mrb[0].mxu0
    %345 = vmatprep.mubr.f32.mxu0 %v140
    %346 = vmatmul.mubr.f32.gmra.mrb[0].mxu0 %v139
    %v347 = vpop.f32.mrb[0].mxu0
    %v348 = vadd.f32 0.0, %v347
    %v349 = vpop.f32.mrb[0].mxu0
    %350 = vmatprep.mubr.f32.mxu0 %v142
    %351 = vmatmul.mubr.f32.gmra.mrb[0].mxu0 %v141
    %v352 = vpop.f32.mrb[0].mxu0
    %v353 = vadd.f32 0.0, %v352
    %v354 = vpop.f32.mrb[0].mxu0
    %355 = vmatprep.mubr.f32.mxu0 %v144
    %356 = vmatmul.mubr.f32.gmra.mrb[0].mxu0 %v143
    %v357 = vpop.f32.mrb[0].mxu0
    %v358 = vadd.f32 0.0, %v357
    %v359 = vpop.f32.mrb[0].mxu0
    %360 = vmatprep.mubr.f32.mxu0 %v146
    %361 = vmatmul.mubr.f32.gmra.mrb[0].mxu0 %v145
    %v362 = vpop.f32.mrb[0].mxu0
    %v363 = vadd.f32 0.0, %v362
    %v364 = vpop.f32.mrb[0].mxu0
    %365 = vmatprep.mubr.f32.mxu0 %v148
    %366 = vmatmul.mubr.f32.gmra.mrb[0].mxu0 %v147
    %v367 = vpop.f32.mrb[0].mxu0
    %v368 = vadd.f32 0.0, %v367
    %v369 = vpop.f32.mrb[0].mxu0
    %370 = vmatprep.mubr.f32.mxu0 %v150
    %371 = vmatmul.mubr.f32.gmra.mrb[0].mxu0 %v149
    %v372 = vpop.f32.mrb[0].mxu0
    %v373 = vadd.f32 0.0, %v372
    %v374 = vpop.f32.mrb[0].mxu0
    %375 = vdwg.mxu0
    %v376 = vld [vmem:[%s2] sm:$0xff]
    %v377 = vld [vmem:[%s2 + $0x8] sm:$0xff]
    %v378 = vld [vmem:[%s2 + $0x10] sm:$0xff]
    %v379 = vld [vmem:[%s2 + $0x18] sm:$0xff]
    %v380 = vld [vmem:[%s2 + $0x20] sm:$0xff]
    %v381 = vld [vmem:[%s2 + $0x28] sm:$0xff]
    %v382 = vld [vmem:[%s2 + $0x30] sm:$0xff]
    %v383 = vld [vmem:[%s2 + $0x38] sm:$0xff]
    %v384 = vld [vmem:[%s2 + $0x40] sm:$0xff]
    %v385 = vld [vmem:[%s2 + $0x48] sm:$0xff]
    %v386 = vld [vmem:[%s2 + $0x50] sm:$0xff]
    %v387 = vld [vmem:[%s2 + $0x58] sm:$0xff]
    %v388 = vld [vmem:[%s2 + $0x60] sm:$0xff]
    %v389 = vld [vmem:[%s2 + $0x68] sm:$0xff]
    %v390 = vld [vmem:[%s2 + $0x70] sm:$0xff]
    %v391 = vld [vmem:[%s2 + $0x78] sm:$0xff]
    %v392 = vld [vmem:[%s3] sm:$0xff]
    %v393 = vld [vmem:[%s3 + $0x8] sm:$0xff]
    %v394 = vld [vmem:[%s3 + $0x10] sm:$0xff]
    %v395 = vld [vmem:[%s3 + $0x18] sm:$0xff]
    %v396 = vld [vmem:[%s3 + $0x20] sm:$0xff]
    %v397 = vld [vmem:[%s3 + $0x28] sm:$0xff]
    %v398 = vld [vmem:[%s3 + $0x30] sm:$0xff]
    %v399 = vld [vmem:[%s3 + $0x38] sm:$0xff]
    %v400 = vld [vmem:[%s3 + $0x40] sm:$0xff]
    %v401 = vld [vmem:[%s3 + $0x48] sm:$0xff]
    %v402 = vld [vmem:[%s3 + $0x50] sm:$0xff]
    %v403 = vld [vmem:[%s3 + $0x58] sm:$0xff]
    %v404 = vld [vmem:[%s3 + $0x60] sm:$0xff]
    %v405 = vld [vmem:[%s3 + $0x68] sm:$0xff]
    %v406 = vld [vmem:[%s3 + $0x70] sm:$0xff]
    %v407 = vld [vmem:[%s3 + $0x78] sm:$0xff]
    %408 = vmatprep.subr.mxu0 0.0
    %409 = vmatpush1.msra.mxu0 %v392
    %410 = vmatprep.subr.mxu0 0.0
    %411 = vmatpush1.msra.mxu0 %v393
    %412 = vmatprep.subr.mxu0 0.0
    %413 = vmatpush1.msra.mxu0 %v394
    %414 = vmatprep.subr.mxu0 0.0
    %415 = vmatpush1.msra.mxu0 %v395
    %416 = vmatprep.subr.mxu0 0.0
    %417 = vmatpush1.msra.mxu0 %v396
    %418 = vmatprep.subr.mxu0 0.0
    %419 = vmatpush1.msra.mxu0 %v397
    %420 = vmatprep.subr.mxu0 0.0
    %421 = vmatpush1.msra.mxu0 %v398
    %422 = vmatprep.subr.mxu0 0.0
    %423 = vmatpush1.msra.mxu0 %v399
    %424 = vmatprep.subr.mxu0 0.0
    %425 = vmatpush1.msra.mxu0 %v400
    %426 = vmatprep.subr.mxu0 0.0
    %427 = vmatpush1.msra.mxu0 %v401
    %428 = vmatprep.subr.mxu0 0.0
    %429 = vmatpush1.msra.mxu0 %v402
    %430 = vmatprep.subr.mxu0 0.0
    %431 = vmatpush1.msra.mxu0 %v403
    %432 = vmatprep.subr.mxu0 0.0
    %433 = vmatpush1.msra.mxu0 %v404
    %434 = vmatprep.subr.mxu0 0.0
    %435 = vmatpush1.msra.mxu0 %v405
    %436 = vmatprep.subr.mxu0 0.0
    %437 = vmatpush1.msra.mxu0 %v406
    %438 = vmatprep.subr.mxu0 0.0
    %439 = vmatpush1.msra.mxu0 %v407
    %440 = vmatprep.subr.mxu0 0.0
    %441 = vmatpush1.msra.mxu0 0.0
    %442 = vmatprep.subr.mxu0 0.0
    %443 = vmatpush1.msra.mxu0 0.0
    %444 = vmatprep.subr.mxu0 0.0
    %445 = vmatpush1.msra.mxu0 0.0
    %446 = vmatprep.subr.mxu0 0.0
    %447 = vmatpush1.msra.mxu0 0.0
    %448 = vmatprep.subr.mxu0 0.0
    %449 = vmatpush1.msra.mxu0 0.0
    %450 = vmatprep.subr.mxu0 0.0
    %451 = vmatpush1.msra.mxu0 0.0
    %452 = vmatprep.subr.mxu0 0.0
    %453 = vmatpush1.msra.mxu0 0.0
    %454 = vmatprep.subr.mxu0 0.0
    %455 = vmatpush1.msra.mxu0 0.0
    %456 = vmatprep.subr.mxu0 0.0
    %457 = vmatpush1.msra.mxu0 0.0
    %458 = vmatprep.subr.mxu0 0.0
    %459 = vmatpush1.msra.mxu0 0.0
    %460 = vmatprep.subr.mxu0 0.0
    %461 = vmatpush1.msra.mxu0 0.0
    %462 = vmatprep.subr.mxu0 0.0
    %463 = vmatpush1.msra.mxu0 0.0
    %464 = vmatprep.subr.mxu0 0.0
    %465 = vmatpush1.msra.mxu0 0.0
    %466 = vmatprep.subr.mxu0 0.0
    %467 = vmatpush1.msra.mxu0 0.0
    %468 = vmatprep.subr.mxu0 0.0
    %469 = vmatpush1.msra.mxu0 0.0
    %470 = vmatprep.subr.mxu0 0.0
    %471 = vmatpush1.msra.mxu0 0.0
    %472 = vmatprep.mubr.f32.mxu0 0.0
    %473 = vmatmul.mubr.f32.gmra.mrb[0].mxu0 %v55
    %v474 = vpop.f32.mrb[0].mxu0
    %v475 = vadd.f32 0.0, %v474
    %v476 = vpop.f32.mrb[0].mxu0
    %477 = vmatprep.mubr.f32.mxu0 0.0
    %478 = vmatmul.mubr.f32.gmra.mrb[0].mxu0 %v56
    %v479 = vpop.f32.mrb[0].mxu0
    %v480 = vadd.f32 0.0, %v479
    %v481 = vpop.f32.mrb[0].mxu0
    %482 = vmatprep.mubr.f32.mxu0 0.0
    %483 = vmatmul.mubr.f32.gmra.mrb[0].mxu0 %v57
    %v484 = vpop.f32.mrb[0].mxu0
    %v485 = vadd.f32 0.0, %v484
    %v486 = vpop.f32.mrb[0].mxu0
    %487 = vmatprep.mubr.f32.mxu0 0.0
    %488 = vmatmul.mubr.f32.gmra.mrb[0].mxu0 %v58
    %v489 = vpop.f32.mrb[0].mxu0
    %v490 = vadd.f32 0.0, %v489
    %v491 = vpop.f32.mrb[0].mxu0
    %492 = vmatprep.mubr.f32.mxu0 0.0
    %493 = vmatmul.mubr.f32.gmra.mrb[0].mxu0 %v59
    %v494 = vpop.f32.mrb[0].mxu0
    %v495 = vadd.f32 0.0, %v494
    %v496 = vpop.f32.mrb[0].mxu0
    %497 = vmatprep.mubr.f32.mxu0 0.0
    %498 = vmatmul.mubr.f32.gmra.mrb[0].mxu0 %v60
    %v499 = vpop.f32.mrb[0].mxu0
    %v500 = vadd.f32 0.0, %v499
    %v501 = vpop.f32.mrb[0].mxu0
    %502 = vmatprep.mubr.f32.mxu0 0.0
    %503 = vmatmul.mubr.f32.gmra.mrb[0].mxu0 %v61
    %v504 = vpop.f32.mrb[0].mxu0
    %v505 = vadd.f32 0.0, %v504
    %v506 = vpop.f32.mrb[0].mxu0
    %507 = vmatprep.mubr.f32.mxu0 0.0
    %508 = vmatmul.mubr.f32.gmra.mrb[0].mxu0 %v62
    %v509 = vpop.f32.mrb[0].mxu0
    %v510 = vadd.f32 0.0, %v509
    %v511 = vpop.f32.mrb[0].mxu0
    %512 = vmatprep.mubr.f32.mxu0 0.0
    %513 = vmatmul.mubr.f32.gmra.mrb[0].mxu0 %v63
    %v514 = vpop.f32.mrb[0].mxu0
    %v515 = vadd.f32 0.0, %v514
    %v516 = vpop.f32.mrb[0].mxu0
    %517 = vmatprep.mubr.f32.mxu0 0.0
    %518 = vmatmul.mubr.f32.gmra.mrb[0].mxu0 %v64
    %v519 = vpop.f32.mrb[0].mxu0
    %v520 = vadd.f32 0.0, %v519
    %v521 = vpop.f32.mrb[0].mxu0
    %522 = vmatprep.mubr.f32.mxu0 0.0
    %523 = vmatmul.mubr.f32.gmra.mrb[0].mxu0 %v65
    %v524 = vpop.f32.mrb[0].mxu0
    %v525 = vadd.f32 0.0, %v524
    %v526 = vpop.f32.mrb[0].mxu0
    %527 = vmatprep.mubr.f32.mxu0 0.0
    %528 = vmatmul.mubr.f32.gmra.mrb[0].mxu0 %v66
    %v529 = vpop.f32.mrb[0].mxu0
    %v530 = vadd.f32 0.0, %v529
    %v531 = vpop.f32.mrb[0].mxu0
    %532 = vmatprep.mubr.f32.mxu0 0.0
    %533 = vmatmul.mubr.f32.gmra.mrb[0].mxu0 %v67
    %v534 = vpop.f32.mrb[0].mxu0
    %v535 = vadd.f32 0.0, %v534
    %v536 = vpop.f32.mrb[0].mxu0
    %537 = vmatprep.mubr.f32.mxu0 0.0
    %538 = vmatmul.mubr.f32.gmra.mrb[0].mxu0 %v68
    %v539 = vpop.f32.mrb[0].mxu0
    %v540 = vadd.f32 0.0, %v539
    %v541 = vpop.f32.mrb[0].mxu0
    %542 = vmatprep.mubr.f32.mxu0 0.0
    %543 = vmatmul.mubr.f32.gmra.mrb[0].mxu0 %v69
    %v544 = vpop.f32.mrb[0].mxu0
    %v545 = vadd.f32 0.0, %v544
    %v546 = vpop.f32.mrb[0].mxu0
    %547 = vmatprep.mubr.f32.mxu0 0.0
    %548 = vmatmul.mubr.f32.gmra.mrb[0].mxu0 %v70
    %v549 = vpop.f32.mrb[0].mxu0
    %v550 = vadd.f32 0.0, %v549
    %v551 = vpop.f32.mrb[0].mxu0
    %552 = vmatprep.mubr.f32.mxu0 0.0
    %553 = vmatmul.mubr.f32.gmra.mrb[0].mxu0 %v71
    %v554 = vpop.f32.mrb[0].mxu0
    %v555 = vadd.f32 0.0, %v554
    %v556 = vpop.f32.mrb[0].mxu0
    %557 = vmatprep.mubr.f32.mxu0 0.0
    %558 = vmatmul.mubr.f32.gmra.mrb[0].mxu0 %v72
    %v559 = vpop.f32.mrb[0].mxu0
    %v560 = vadd.f32 0.0, %v559
    %v561 = vpop.f32.mrb[0].mxu0
    %562 = vmatprep.mubr.f32.mxu0 0.0
    %563 = vmatmul.mubr.f32.gmra.mrb[0].mxu0 %v73
    %v564 = vpop.f32.mrb[0].mxu0
    %v565 = vadd.f32 0.0, %v564
    %v566 = vpop.f32.mrb[0].mxu0
    %567 = vmatprep.mubr.f32.mxu0 0.0
    %568 = vmatmul.mubr.f32.gmra.mrb[0].mxu0 %v74
    %v569 = vpop.f32.mrb[0].mxu0
    %v570 = vadd.f32 0.0, %v569
    %v571 = vpop.f32.mrb[0].mxu0
    %572 = vmatprep.mubr.f32.mxu0 0.0
    %573 = vmatmul.mubr.f32.gmra.mrb[0].mxu0 %v75
    %v574 = vpop.f32.mrb[0].mxu0
    %v575 = vadd.f32 0.0, %v574
    %v576 = vpop.f32.mrb[0].mxu0
    %577 = vmatprep.mubr.f32.mxu0 0.0
    %578 = vmatmul.mubr.f32.gmra.mrb[0].mxu0 %v76
    %v579 = vpop.f32.mrb[0].mxu0
    %v580 = vadd.f32 0.0, %v579
    %v581 = vpop.f32.mrb[0].mxu0
    %582 = vmatprep.mubr.f32.mxu0 0.0
    %583 = vmatmul.mubr.f32.gmra.mrb[0].mxu0 %v77
    %v584 = vpop.f32.mrb[0].mxu0
    %v585 = vadd.f32 0.0, %v584
    %v586 = vpop.f32.mrb[0].mxu0
    %587 = vmatprep.mubr.f32.mxu0 0.0
    %588 = vmatmul.mubr.f32.gmra.mrb[0].mxu0 %v78
    %v589 = vpop.f32.mrb[0].mxu0
    %v590 = vadd.f32 0.0, %v589
    %v591 = vpop.f32.mrb[0].mxu0
    %592 = vmatprep.mubr.f32.mxu0 0.0
    %593 = vmatmul.mubr.f32.gmra.mrb[0].mxu0 %v79
    %v594 = vpop.f32.mrb[0].mxu0
    %v595 = vadd.f32 0.0, %v594
    %v596 = vpop.f32.mrb[0].mxu0
    %597 = vmatprep.mubr.f32.mxu0 0.0
    %598 = vmatmul.mubr.f32.gmra.mrb[0].mxu0 %v80
    %v599 = vpop.f32.mrb[0].mxu0
    %v600 = vadd.f32 0.0, %v599
    %v601 = vpop.f32.mrb[0].mxu0
    %602 = vmatprep.mubr.f32.mxu0 0.0
    %603 = vmatmul.mubr.f32.gmra.mrb[0].mxu0 %v81
    %v604 = vpop.f32.mrb[0].mxu0
    %v605 = vadd.f32 0.0, %v604
    %v606 = vpop.f32.mrb[0].mxu0
    %607 = vmatprep.mubr.f32.mxu0 0.0
    %608 = vmatmul.mubr.f32.gmra.mrb[0].mxu0 %v82
    %v609 = vpop.f32.mrb[0].mxu0
    %v610 = vadd.f32 0.0, %v609
    %v611 = vpop.f32.mrb[0].mxu0
    %612 = vmatprep.mubr.f32.mxu0 0.0
    %613 = vmatmul.mubr.f32.gmra.mrb[0].mxu0 %v83
    %v614 = vpop.f32.mrb[0].mxu0
    %v615 = vadd.f32 0.0, %v614
    %v616 = vpop.f32.mrb[0].mxu0
    %617 = vmatprep.mubr.f32.mxu0 0.0
    %618 = vmatmul.mubr.f32.gmra.mrb[0].mxu0 %v84
    %v619 = vpop.f32.mrb[0].mxu0
    %v620 = vadd.f32 0.0, %v619
    %v621 = vpop.f32.mrb[0].mxu0
    %622 = vmatprep.mubr.f32.mxu0 0.0
    %623 = vmatmul.mubr.f32.gmra.mrb[0].mxu0 %v85
    %v624 = vpop.f32.mrb[0].mxu0
    %v625 = vadd.f32 0.0, %v624
    %v626 = vpop.f32.mrb[0].mxu0
    %627 = vmatprep.mubr.f32.mxu0 0.0
    %628 = vmatmul.mubr.f32.gmra.mrb[0].mxu0 %v86
    %v629 = vpop.f32.mrb[0].mxu0
    %v630 = vadd.f32 0.0, %v629
    %v631 = vpop.f32.mrb[0].mxu0
    %632 = vdwg.mxu0
    %633 = vmatprep.subr.mxu0 0.0
    %634 = vmatpush1.msra.mxu0 %v376
    %635 = vmatprep.subr.mxu0 0.0
    %636 = vmatpush1.msra.mxu0 %v377
    %637 = vmatprep.subr.mxu0 0.0
    %638 = vmatpush1.msra.mxu0 %v378
    %639 = vmatprep.subr.mxu0 0.0
    %640 = vmatpush1.msra.mxu0 %v379
    %641 = vmatprep.subr.mxu0 0.0
    %642 = vmatpush1.msra.mxu0 %v380
    %643 = vmatprep.subr.mxu0 0.0
    %644 = vmatpush1.msra.mxu0 %v381
    %645 = vmatprep.subr.mxu0 0.0
    %646 = vmatpush1.msra.mxu0 %v382
    %647 = vmatprep.subr.mxu0 0.0
    %648 = vmatpush1.msra.mxu0 %v383
    %649 = vmatprep.subr.mxu0 0.0
    %650 = vmatpush1.msra.mxu0 %v384
    %651 = vmatprep.subr.mxu0 0.0
    %652 = vmatpush1.msra.mxu0 %v385
    %653 = vmatprep.subr.mxu0 0.0
    %654 = vmatpush1.msra.mxu0 %v386
    %655 = vmatprep.subr.mxu0 0.0
    %656 = vmatpush1.msra.mxu0 %v387
    %657 = vmatprep.subr.mxu0 0.0
    %658 = vmatpush1.msra.mxu0 %v388
    %659 = vmatprep.subr.mxu0 0.0
    %660 = vmatpush1.msra.mxu0 %v389
    %661 = vmatprep.subr.mxu0 0.0
    %662 = vmatpush1.msra.mxu0 %v390
    %663 = vmatprep.subr.mxu0 0.0
    %664 = vmatpush1.msra.mxu0 %v391
    %665 = vmatprep.subr.mxu0 0.0
    %666 = vmatpush1.msra.mxu0 0.0
    %667 = vmatprep.subr.mxu0 0.0
    %668 = vmatpush1.msra.mxu0 0.0
    %669 = vmatprep.subr.mxu0 0.0
    %670 = vmatpush1.msra.mxu0 0.0
    %671 = vmatprep.subr.mxu0 0.0
    %672 = vmatpush1.msra.mxu0 0.0
    %673 = vmatprep.subr.mxu0 0.0
    %674 = vmatpush1.msra.mxu0 0.0
    %675 = vmatprep.subr.mxu0 0.0
    %676 = vmatpush1.msra.mxu0 0.0
    %677 = vmatprep.subr.mxu0 0.0
    %678 = vmatpush1.msra.mxu0 0.0
    %679 = vmatprep.subr.mxu0 0.0
    %680 = vmatpush1.msra.mxu0 0.0
    %681 = vmatprep.subr.mxu0 0.0
    %682 = vmatpush1.msra.mxu0 0.0
    %683 = vmatprep.subr.mxu0 0.0
    %684 = vmatpush1.msra.mxu0 0.0
    %685 = vmatprep.subr.mxu0 0.0
    %686 = vmatpush1.msra.mxu0 0.0
    %687 = vmatprep.subr.mxu0 0.0
    %688 = vmatpush1.msra.mxu0 0.0
    %689 = vmatprep.subr.mxu0 0.0
    %690 = vmatpush1.msra.mxu0 0.0
    %691 = vmatprep.subr.mxu0 0.0
    %692 = vmatpush1.msra.mxu0 0.0
    %693 = vmatprep.subr.mxu0 0.0
    %694 = vmatpush1.msra.mxu0 0.0
    %695 = vmatprep.subr.mxu0 0.0
    %696 = vmatpush1.msra.mxu0 0.0
    %697 = vmatprep.mubr.f32.mxu0 0.0
    %698 = vmatmul.mubr.f32.gmra.mrb[0].mxu0 %v218
    %v699 = vpop.f32.mrb[0].mxu0
    %v700 = vadd.f32 %v475, %v699
    %v701 = vpop.f32.mrb[0].mxu0
    %702 = vmatprep.mubr.f32.mxu0 0.0
    %703 = vmatmul.mubr.f32.gmra.mrb[0].mxu0 %v223
    %v704 = vpop.f32.mrb[0].mxu0
    %v705 = vadd.f32 %v480, %v704
    %v706 = vpop.f32.mrb[0].mxu0
    %707 = vmatprep.mubr.f32.mxu0 0.0
    %708 = vmatmul.mubr.f32.gmra.mrb[0].mxu0 %v228
    %v709 = vpop.f32.mrb[0].mxu0
    %v710 = vadd.f32 %v485, %v709
    %v711 = vpop.f32.mrb[0].mxu0
    %712 = vmatprep.mubr.f32.mxu0 0.0
    %713 = vmatmul.mubr.f32.gmra.mrb[0].mxu0 %v233
    %v714 = vpop.f32.mrb[0].mxu0
    %v715 = vadd.f32 %v490, %v714
    %v716 = vpop.f32.mrb[0].mxu0
    %717 = vmatprep.mubr.f32.mxu0 0.0
    %718 = vmatmul.mubr.f32.gmra.mrb[0].mxu0 %v238
    %v719 = vpop.f32.mrb[0].mxu0
    %v720 = vadd.f32 %v495, %v719
    %v721 = vpop.f32.mrb[0].mxu0
    %722 = vmatprep.mubr.f32.mxu0 0.0
    %723 = vmatmul.mubr.f32.gmra.mrb[0].mxu0 %v243
    %v724 = vpop.f32.mrb[0].mxu0
    %v725 = vadd.f32 %v500, %v724
    %v726 = vpop.f32.mrb[0].mxu0
    %727 = vmatprep.mubr.f32.mxu0 0.0
    %728 = vmatmul.mubr.f32.gmra.mrb[0].mxu0 %v248
    %v729 = vpop.f32.mrb[0].mxu0
    %v730 = vadd.f32 %v505, %v729
    %v731 = vpop.f32.mrb[0].mxu0
    %732 = vmatprep.mubr.f32.mxu0 0.0
    %733 = vmatmul.mubr.f32.gmra.mrb[0].mxu0 %v253
    %v734 = vpop.f32.mrb[0].mxu0
    %v735 = vadd.f32 %v510, %v734
    %v736 = vpop.f32.mrb[0].mxu0
    %737 = vmatprep.mubr.f32.mxu0 0.0
    %738 = vmatmul.mubr.f32.gmra.mrb[0].mxu0 %v258
    %v739 = vpop.f32.mrb[0].mxu0
    %v740 = vadd.f32 %v515, %v739
    %v741 = vpop.f32.mrb[0].mxu0
    %742 = vmatprep.mubr.f32.mxu0 0.0
    %743 = vmatmul.mubr.f32.gmra.mrb[0].mxu0 %v263
    %v744 = vpop.f32.mrb[0].mxu0
    %v745 = vadd.f32 %v520, %v744
    %v746 = vpop.f32.mrb[0].mxu0
    %747 = vmatprep.mubr.f32.mxu0 0.0
    %748 = vmatmul.mubr.f32.gmra.mrb[0].mxu0 %v268
    %v749 = vpop.f32.mrb[0].mxu0
    %v750 = vadd.f32 %v525, %v749
    %v751 = vpop.f32.mrb[0].mxu0
    %752 = vmatprep.mubr.f32.mxu0 0.0
    %753 = vmatmul.mubr.f32.gmra.mrb[0].mxu0 %v273
    %v754 = vpop.f32.mrb[0].mxu0
    %v755 = vadd.f32 %v530, %v754
    %v756 = vpop.f32.mrb[0].mxu0
    %757 = vmatprep.mubr.f32.mxu0 0.0
    %758 = vmatmul.mubr.f32.gmra.mrb[0].mxu0 %v278
    %v759 = vpop.f32.mrb[0].mxu0
    %v760 = vadd.f32 %v535, %v759
    %v761 = vpop.f32.mrb[0].mxu0
    %762 = vmatprep.mubr.f32.mxu0 0.0
    %763 = vmatmul.mubr.f32.gmra.mrb[0].mxu0 %v283
    %v764 = vpop.f32.mrb[0].mxu0
    %v765 = vadd.f32 %v540, %v764
    %v766 = vpop.f32.mrb[0].mxu0
    %767 = vmatprep.mubr.f32.mxu0 0.0
    %768 = vmatmul.mubr.f32.gmra.mrb[0].mxu0 %v288
    %v769 = vpop.f32.mrb[0].mxu0
    %v770 = vadd.f32 %v545, %v769
    %v771 = vpop.f32.mrb[0].mxu0
    %772 = vmatprep.mubr.f32.mxu0 0.0
    %773 = vmatmul.mubr.f32.gmra.mrb[0].mxu0 %v293
    %v774 = vpop.f32.mrb[0].mxu0
    %v775 = vadd.f32 %v550, %v774
    %v776 = vpop.f32.mrb[0].mxu0
    %777 = vmatprep.mubr.f32.mxu0 0.0
    %778 = vmatmul.mubr.f32.gmra.mrb[0].mxu0 %v298
    %v779 = vpop.f32.mrb[0].mxu0
    %v780 = vadd.f32 %v555, %v779
    %v781 = vpop.f32.mrb[0].mxu0
    %782 = vmatprep.mubr.f32.mxu0 0.0
    %783 = vmatmul.mubr.f32.gmra.mrb[0].mxu0 %v303
    %v784 = vpop.f32.mrb[0].mxu0
    %v785 = vadd.f32 %v560, %v784
    %v786 = vpop.f32.mrb[0].mxu0
    %787 = vmatprep.mubr.f32.mxu0 0.0
    %788 = vmatmul.mubr.f32.gmra.mrb[0].mxu0 %v308
    %v789 = vpop.f32.mrb[0].mxu0
    %v790 = vadd.f32 %v565, %v789
    %v791 = vpop.f32.mrb[0].mxu0
    %792 = vmatprep.mubr.f32.mxu0 0.0
    %793 = vmatmul.mubr.f32.gmra.mrb[0].mxu0 %v313
    %v794 = vpop.f32.mrb[0].mxu0
    %v795 = vadd.f32 %v570, %v794
    %v796 = vpop.f32.mrb[0].mxu0
    %797 = vmatprep.mubr.f32.mxu0 0.0
    %798 = vmatmul.mubr.f32.gmra.mrb[0].mxu0 %v318
    %v799 = vpop.f32.mrb[0].mxu0
    %v800 = vadd.f32 %v575, %v799
    %v801 = vpop.f32.mrb[0].mxu0
    %802 = vmatprep.mubr.f32.mxu0 0.0
    %803 = vmatmul.mubr.f32.gmra.mrb[0].mxu0 %v323
    %v804 = vpop.f32.mrb[0].mxu0
    %v805 = vadd.f32 %v580, %v804
    %v806 = vpop.f32.mrb[0].mxu0
    %807 = vmatprep.mubr.f32.mxu0 0.0
    %808 = vmatmul.mubr.f32.gmra.mrb[0].mxu0 %v328
    %v809 = vpop.f32.mrb[0].mxu0
    %v810 = vadd.f32 %v585, %v809
    %v811 = vpop.f32.mrb[0].mxu0
    %812 = vmatprep.mubr.f32.mxu0 0.0
    %813 = vmatmul.mubr.f32.gmra.mrb[0].mxu0 %v333
    %v814 = vpop.f32.mrb[0].mxu0
    %v815 = vadd.f32 %v590, %v814
    %v816 = vpop.f32.mrb[0].mxu0
    %817 = vmatprep.mubr.f32.mxu0 0.0
    %818 = vmatmul.mubr.f32.gmra.mrb[0].mxu0 %v338
    %v819 = vpop.f32.mrb[0].mxu0
    %v820 = vadd.f32 %v595, %v819
    %v821 = vpop.f32.mrb[0].mxu0
    %822 = vmatprep.mubr.f32.mxu0 0.0
    %823 = vmatmul.mubr.f32.gmra.mrb[0].mxu0 %v343
    %v824 = vpop.f32.mrb[0].mxu0
    %v825 = vadd.f32 %v600, %v824
    %v826 = vpop.f32.mrb[0].mxu0
    %827 = vmatprep.mubr.f32.mxu0 0.0
    %828 = vmatmul.mubr.f32.gmra.mrb[0].mxu0 %v348
    %v829 = vpop.f32.mrb[0].mxu0
    %v830 = vadd.f32 %v605, %v829
    %v831 = vpop.f32.mrb[0].mxu0
    %832 = vmatprep.mubr.f32.mxu0 0.0
    %833 = vmatmul.mubr.f32.gmra.mrb[0].mxu0 %v353
    %v834 = vpop.f32.mrb[0].mxu0
    %v835 = vadd.f32 %v610, %v834
    %v836 = vpop.f32.mrb[0].mxu0
    %837 = vmatprep.mubr.f32.mxu0 0.0
    %838 = vmatmul.mubr.f32.gmra.mrb[0].mxu0 %v358
    %v839 = vpop.f32.mrb[0].mxu0
    %v840 = vadd.f32 %v615, %v839
    %v841 = vpop.f32.mrb[0].mxu0
    %842 = vmatprep.mubr.f32.mxu0 0.0
    %843 = vmatmul.mubr.f32.gmra.mrb[0].mxu0 %v363
    %v844 = vpop.f32.mrb[0].mxu0
    %v845 = vadd.f32 %v620, %v844
    %v846 = vpop.f32.mrb[0].mxu0
    %847 = vmatprep.mubr.f32.mxu0 0.0
    %848 = vmatmul.mubr.f32.gmra.mrb[0].mxu0 %v368
    %v849 = vpop.f32.mrb[0].mxu0
    %v850 = vadd.f32 %v625, %v849
    %v851 = vpop.f32.mrb[0].mxu0
    %852 = vmatprep.mubr.f32.mxu0 0.0
    %853 = vmatmul.mubr.f32.gmra.mrb[0].mxu0 %v373
    %v854 = vpop.f32.mrb[0].mxu0
    %v855 = vadd.f32 %v630, %v854
    %v856 = vpop.f32.mrb[0].mxu0
    %857 = vdwg.mxu0
    %v858 = vld [vmem:[%s4] sm:$0x1]
    %v860 = vlaneseq
    %v861 = vshrl.u32 %v860, 7
    %v862 = vsub.s32 0, %v861
    %v863 = vrot.slane %v858, %v862
    %v865 = vadd.f32 %v700, %v863
    %v866 = vadd.f32 %v705, %v863
    %v867 = vadd.f32 %v710, %v863
    %v868 = vadd.f32 %v715, %v863
    %v869 = vadd.f32 %v720, %v863
    %v870 = vadd.f32 %v725, %v863
    %v871 = vadd.f32 %v730, %v863
    %v872 = vadd.f32 %v735, %v863
    %v873 = vadd.f32 %v740, %v863
    %v874 = vadd.f32 %v745, %v863
    %v875 = vadd.f32 %v750, %v863
    %v876 = vadd.f32 %v755, %v863
    %v877 = vadd.f32 %v760, %v863
    %v878 = vadd.f32 %v765, %v863
    %v879 = vadd.f32 %v770, %v863
    %v880 = vadd.f32 %v775, %v863
    %v881 = vadd.f32 %v780, %v863
    %v882 = vadd.f32 %v785, %v863
    %v883 = vadd.f32 %v790, %v863
    %v884 = vadd.f32 %v795, %v863
    %v885 = vadd.f32 %v800, %v863
    %v886 = vadd.f32 %v805, %v863
    %v887 = vadd.f32 %v810, %v863
    %v888 = vadd.f32 %v815, %v863
    %v889 = vadd.f32 %v820, %v863
    %v890 = vadd.f32 %v825, %v863
    %v891 = vadd.f32 %v830, %v863
    %v892 = vadd.f32 %v835, %v863
    %v893 = vadd.f32 %v840, %v863
    %v894 = vadd.f32 %v845, %v863
    %v895 = vadd.f32 %v850, %v863
    %v896 = vadd.f32 %v855, %v863
    %v897 = vmul.f32 %v865, %v865
    %v898 = vmul.f32 %v866, %v866
    %v899 = vmul.f32 %v867, %v867
    %v900 = vmul.f32 %v868, %v868
    %v901 = vmul.f32 %v869, %v869
    %v902 = vmul.f32 %v870, %v870
    %v903 = vmul.f32 %v871, %v871
    %v904 = vmul.f32 %v872, %v872
    %v905 = vmul.f32 %v873, %v873
    %v906 = vmul.f32 %v874, %v874
    %v907 = vmul.f32 %v875, %v875
    %v908 = vmul.f32 %v876, %v876
    %v909 = vmul.f32 %v877, %v877
    %v910 = vmul.f32 %v878, %v878
    %v911 = vmul.f32 %v879, %v879
    %v912 = vmul.f32 %v880, %v880
    %v913 = vmul.f32 %v881, %v881
    %v914 = vmul.f32 %v882, %v882
    %v915 = vmul.f32 %v883, %v883
    %v916 = vmul.f32 %v884, %v884
    %v917 = vmul.f32 %v885, %v885
    %v918 = vmul.f32 %v886, %v886
    %v919 = vmul.f32 %v887, %v887
    %v920 = vmul.f32 %v888, %v888
    %v921 = vmul.f32 %v889, %v889
    %v922 = vmul.f32 %v890, %v890
    %v923 = vmul.f32 %v891, %v891
    %v924 = vmul.f32 %v892, %v892
    %v925 = vmul.f32 %v893, %v893
    %v926 = vmul.f32 %v894, %v894
    %v927 = vmul.f32 %v895, %v895
    %v928 = vmul.f32 %v896, %v896
    %929 = vadd.xlane.f32.xlu0 %v897
    %v930 = vpop.xlane.xlu0 %929
    %931 = vadd.xlane.f32.xlu0 %v898
    %v932 = vpop.xlane.xlu0 %931
    %933 = vadd.xlane.f32.xlu0 %v899
    %v934 = vpop.xlane.xlu0 %933
    %935 = vadd.xlane.f32.xlu0 %v900
    %v936 = vpop.xlane.xlu0 %935
    %937 = vadd.xlane.f32.xlu0 %v901
    %v938 = vpop.xlane.xlu0 %937
    %939 = vadd.xlane.f32.xlu0 %v902
    %v940 = vpop.xlane.xlu0 %939
    %941 = vadd.xlane.f32.xlu0 %v903
    %v942 = vpop.xlane.xlu0 %941
    %943 = vadd.xlane.f32.xlu0 %v904
    %v944 = vpop.xlane.xlu0 %943
    %945 = vadd.xlane.f32.xlu0 %v905
    %v946 = vpop.xlane.xlu0 %945
    %947 = vadd.xlane.f32.xlu0 %v906
    %v948 = vpop.xlane.xlu0 %947
    %949 = vadd.xlane.f32.xlu0 %v907
    %v950 = vpop.xlane.xlu0 %949
    %951 = vadd.xlane.f32.xlu0 %v908
    %v952 = vpop.xlane.xlu0 %951
    %953 = vadd.xlane.f32.xlu0 %v909
    %v954 = vpop.xlane.xlu0 %953
    %955 = vadd.xlane.f32.xlu0 %v910
    %v956 = vpop.xlane.xlu0 %955
    %957 = vadd.xlane.f32.xlu0 %v911
    %v958 = vpop.xlane.xlu0 %957
    %959 = vadd.xlane.f32.xlu0 %v912
    %v960 = vpop.xlane.xlu0 %959
    %961 = vadd.xlane.f32.xlu0 %v913
    %v962 = vpop.xlane.xlu0 %961
    %963 = vadd.xlane.f32.xlu0 %v914
    %v964 = vpop.xlane.xlu0 %963
    %965 = vadd.xlane.f32.xlu0 %v915
    %v966 = vpop.xlane.xlu0 %965
    %967 = vadd.xlane.f32.xlu0 %v916
    %v968 = vpop.xlane.xlu0 %967
    %969 = vadd.xlane.f32.xlu0 %v917
    %v970 = vpop.xlane.xlu0 %969
    %971 = vadd.xlane.f32.xlu0 %v918
    %v972 = vpop.xlane.xlu0 %971
    %973 = vadd.xlane.f32.xlu0 %v919
    %v974 = vpop.xlane.xlu0 %973
    %975 = vadd.xlane.f32.xlu0 %v920
    %v976 = vpop.xlane.xlu0 %975
    %977 = vadd.xlane.f32.xlu0 %v921
    %v978 = vpop.xlane.xlu0 %977
    %979 = vadd.xlane.f32.xlu0 %v922
    %v980 = vpop.xlane.xlu0 %979
    %981 = vadd.xlane.f32.xlu0 %v923
    %v982 = vpop.xlane.xlu0 %981
    %983 = vadd.xlane.f32.xlu0 %v924
    %v984 = vpop.xlane.xlu0 %983
    %985 = vadd.xlane.f32.xlu0 %v925
    %v986 = vpop.xlane.xlu0 %985
    %987 = vadd.xlane.f32.xlu0 %v926
    %v988 = vpop.xlane.xlu0 %987
    %989 = vadd.xlane.f32.xlu0 %v927
    %v990 = vpop.xlane.xlu0 %989
    %991 = vadd.xlane.f32.xlu0 %v928
    %v992 = vpop.xlane.xlu0 %991
    %v993 = vrsqrt.pop %v930
    %v994 = vmul.f32 %v930, %v993
    %vm995 = vcmp.eq.f32.partialorder %v930, inf
    %v996 = vsel %vm995, %v930, %v994
    %vm997 = vcmp.eq.f32.partialorder %v930, 0.0
    %v998 = vand.u32 %v930, 2147483648
    %v999 = vsel %vm997, %v998, %v996
    %v1000 = vrsqrt.pop %v932
    %v1001 = vmul.f32 %v932, %v1000
    %vm1002 = vcmp.eq.f32.partialorder %v932, inf
    %v1003 = vsel %vm1002, %v932, %v1001
    %vm1004 = vcmp.eq.f32.partialorder %v932, 0.0
    %v1005 = vand.u32 %v932, 2147483648
    %v1006 = vsel %vm1004, %v1005, %v1003
    %v1007 = vrsqrt.pop %v934
    %v1008 = vmul.f32 %v934, %v1007
    %vm1009 = vcmp.eq.f32.partialorder %v934, inf
    %v1010 = vsel %vm1009, %v934, %v1008
    %vm1011 = vcmp.eq.f32.partialorder %v934, 0.0
    %v1012 = vand.u32 %v934, 2147483648
    %v1013 = vsel %vm1011, %v1012, %v1010
    %v1014 = vrsqrt.pop %v936
    %v1015 = vmul.f32 %v936, %v1014
    %vm1016 = vcmp.eq.f32.partialorder %v936, inf
    %v1017 = vsel %vm1016, %v936, %v1015
    %vm1018 = vcmp.eq.f32.partialorder %v936, 0.0
    %v1019 = vand.u32 %v936, 2147483648
    %v1020 = vsel %vm1018, %v1019, %v1017
    %v1021 = vrsqrt.pop %v938
    %v1022 = vmul.f32 %v938, %v1021
    %vm1023 = vcmp.eq.f32.partialorder %v938, inf
    %v1024 = vsel %vm1023, %v938, %v1022
    %vm1025 = vcmp.eq.f32.partialorder %v938, 0.0
    %v1026 = vand.u32 %v938, 2147483648
    %v1027 = vsel %vm1025, %v1026, %v1024
    %v1028 = vrsqrt.pop %v940
    %v1029 = vmul.f32 %v940, %v1028
    %vm1030 = vcmp.eq.f32.partialorder %v940, inf
    %v1031 = vsel %vm1030, %v940, %v1029
    %vm1032 = vcmp.eq.f32.partialorder %v940, 0.0
    %v1033 = vand.u32 %v940, 2147483648
    %v1034 = vsel %vm1032, %v1033, %v1031
    %v1035 = vrsqrt.pop %v942
    %v1036 = vmul.f32 %v942, %v1035
    %vm1037 = vcmp.eq.f32.partialorder %v942, inf
    %v1038 = vsel %vm1037, %v942, %v1036
    %vm1039 = vcmp.eq.f32.partialorder %v942, 0.0
    %v1040 = vand.u32 %v942, 2147483648
    %v1041 = vsel %vm1039, %v1040, %v1038
    %v1042 = vrsqrt.pop %v944
    %v1043 = vmul.f32 %v944, %v1042
    %vm1044 = vcmp.eq.f32.partialorder %v944, inf
    %v1045 = vsel %vm1044, %v944, %v1043
    %vm1046 = vcmp.eq.f32.partialorder %v944, 0.0
    %v1047 = vand.u32 %v944, 2147483648
    %v1048 = vsel %vm1046, %v1047, %v1045
    %v1049 = vrsqrt.pop %v946
    %v1050 = vmul.f32 %v946, %v1049
    %vm1051 = vcmp.eq.f32.partialorder %v946, inf
    %v1052 = vsel %vm1051, %v946, %v1050
    %vm1053 = vcmp.eq.f32.partialorder %v946, 0.0
    %v1054 = vand.u32 %v946, 2147483648
    %v1055 = vsel %vm1053, %v1054, %v1052
    %v1056 = vrsqrt.pop %v948
    %v1057 = vmul.f32 %v948, %v1056
    %vm1058 = vcmp.eq.f32.partialorder %v948, inf
    %v1059 = vsel %vm1058, %v948, %v1057
    %vm1060 = vcmp.eq.f32.partialorder %v948, 0.0
    %v1061 = vand.u32 %v948, 2147483648
    %v1062 = vsel %vm1060, %v1061, %v1059
    %v1063 = vrsqrt.pop %v950
    %v1064 = vmul.f32 %v950, %v1063
    %vm1065 = vcmp.eq.f32.partialorder %v950, inf
    %v1066 = vsel %vm1065, %v950, %v1064
    %vm1067 = vcmp.eq.f32.partialorder %v950, 0.0
    %v1068 = vand.u32 %v950, 2147483648
    %v1069 = vsel %vm1067, %v1068, %v1066
    %v1070 = vrsqrt.pop %v952
    %v1071 = vmul.f32 %v952, %v1070
    %vm1072 = vcmp.eq.f32.partialorder %v952, inf
    %v1073 = vsel %vm1072, %v952, %v1071
    %vm1074 = vcmp.eq.f32.partialorder %v952, 0.0
    %v1075 = vand.u32 %v952, 2147483648
    %v1076 = vsel %vm1074, %v1075, %v1073
    %v1077 = vrsqrt.pop %v954
    %v1078 = vmul.f32 %v954, %v1077
    %vm1079 = vcmp.eq.f32.partialorder %v954, inf
    %v1080 = vsel %vm1079, %v954, %v1078
    %vm1081 = vcmp.eq.f32.partialorder %v954, 0.0
    %v1082 = vand.u32 %v954, 2147483648
    %v1083 = vsel %vm1081, %v1082, %v1080
    %v1084 = vrsqrt.pop %v956
    %v1085 = vmul.f32 %v956, %v1084
    %vm1086 = vcmp.eq.f32.partialorder %v956, inf
    %v1087 = vsel %vm1086, %v956, %v1085
    %vm1088 = vcmp.eq.f32.partialorder %v956, 0.0
    %v1089 = vand.u32 %v956, 2147483648
    %v1090 = vsel %vm1088, %v1089, %v1087
    %v1091 = vrsqrt.pop %v958
    %v1092 = vmul.f32 %v958, %v1091
    %vm1093 = vcmp.eq.f32.partialorder %v958, inf
    %v1094 = vsel %vm1093, %v958, %v1092
    %vm1095 = vcmp.eq.f32.partialorder %v958, 0.0
    %v1096 = vand.u32 %v958, 2147483648
    %v1097 = vsel %vm1095, %v1096, %v1094
    %v1098 = vrsqrt.pop %v960
    %v1099 = vmul.f32 %v960, %v1098
    %vm1100 = vcmp.eq.f32.partialorder %v960, inf
    %v1101 = vsel %vm1100, %v960, %v1099
    %vm1102 = vcmp.eq.f32.partialorder %v960, 0.0
    %v1103 = vand.u32 %v960, 2147483648
    %v1104 = vsel %vm1102, %v1103, %v1101
    %v1105 = vrsqrt.pop %v962
    %v1106 = vmul.f32 %v962, %v1105
    %vm1107 = vcmp.eq.f32.partialorder %v962, inf
    %v1108 = vsel %vm1107, %v962, %v1106
    %vm1109 = vcmp.eq.f32.partialorder %v962, 0.0
    %v1110 = vand.u32 %v962, 2147483648
    %v1111 = vsel %vm1109, %v1110, %v1108
    %v1112 = vrsqrt.pop %v964
    %v1113 = vmul.f32 %v964, %v1112
    %vm1114 = vcmp.eq.f32.partialorder %v964, inf
    %v1115 = vsel %vm1114, %v964, %v1113
    %vm1116 = vcmp.eq.f32.partialorder %v964, 0.0
    %v1117 = vand.u32 %v964, 2147483648
    %v1118 = vsel %vm1116, %v1117, %v1115
    %v1119 = vrsqrt.pop %v966
    %v1120 = vmul.f32 %v966, %v1119
    %vm1121 = vcmp.eq.f32.partialorder %v966, inf
    %v1122 = vsel %vm1121, %v966, %v1120
    %vm1123 = vcmp.eq.f32.partialorder %v966, 0.0
    %v1124 = vand.u32 %v966, 2147483648
    %v1125 = vsel %vm1123, %v1124, %v1122
    %v1126 = vrsqrt.pop %v968
    %v1127 = vmul.f32 %v968, %v1126
    %vm1128 = vcmp.eq.f32.partialorder %v968, inf
    %v1129 = vsel %vm1128, %v968, %v1127
    %vm1130 = vcmp.eq.f32.partialorder %v968, 0.0
    %v1131 = vand.u32 %v968, 2147483648
    %v1132 = vsel %vm1130, %v1131, %v1129
    %v1133 = vrsqrt.pop %v970
    %v1134 = vmul.f32 %v970, %v1133
    %vm1135 = vcmp.eq.f32.partialorder %v970, inf
    %v1136 = vsel %vm1135, %v970, %v1134
    %vm1137 = vcmp.eq.f32.partialorder %v970, 0.0
    %v1138 = vand.u32 %v970, 2147483648
    %v1139 = vsel %vm1137, %v1138, %v1136
    %v1140 = vrsqrt.pop %v972
    %v1141 = vmul.f32 %v972, %v1140
    %vm1142 = vcmp.eq.f32.partialorder %v972, inf
    %v1143 = vsel %vm1142, %v972, %v1141
    %vm1144 = vcmp.eq.f32.partialorder %v972, 0.0
    %v1145 = vand.u32 %v972, 2147483648
    %v1146 = vsel %vm1144, %v1145, %v1143
    %v1147 = vrsqrt.pop %v974
    %v1148 = vmul.f32 %v974, %v1147
    %vm1149 = vcmp.eq.f32.partialorder %v974, inf
    %v1150 = vsel %vm1149, %v974, %v1148
    %vm1151 = vcmp.eq.f32.partialorder %v974, 0.0
    %v1152 = vand.u32 %v974, 2147483648
    %v1153 = vsel %vm1151, %v1152, %v1150
    %v1154 = vrsqrt.pop %v976
    %v1155 = vmul.f32 %v976, %v1154
    %vm1156 = vcmp.eq.f32.partialorder %v976, inf
    %v1157 = vsel %vm1156, %v976, %v1155
    %vm1158 = vcmp.eq.f32.partialorder %v976, 0.0
    %v1159 = vand.u32 %v976, 2147483648
    %v1160 = vsel %vm1158, %v1159, %v1157
    %v1161 = vrsqrt.pop %v978
    %v1162 = vmul.f32 %v978, %v1161
    %vm1163 = vcmp.eq.f32.partialorder %v978, inf
    %v1164 = vsel %vm1163, %v978, %v1162
    %vm1165 = vcmp.eq.f32.partialorder %v978, 0.0
    %v1166 = vand.u32 %v978, 2147483648
    %v1167 = vsel %vm1165, %v1166, %v1164
    %v1168 = vrsqrt.pop %v980
    %v1169 = vmul.f32 %v980, %v1168
    %vm1170 = vcmp.eq.f32.partialorder %v980, inf
    %v1171 = vsel %vm1170, %v980, %v1169
    %vm1172 = vcmp.eq.f32.partialorder %v980, 0.0
    %v1173 = vand.u32 %v980, 2147483648
    %v1174 = vsel %vm1172, %v1173, %v1171
    %v1175 = vrsqrt.pop %v982
    %v1176 = vmul.f32 %v982, %v1175
    %vm1177 = vcmp.eq.f32.partialorder %v982, inf
    %v1178 = vsel %vm1177, %v982, %v1176
    %vm1179 = vcmp.eq.f32.partialorder %v982, 0.0
    %v1180 = vand.u32 %v982, 2147483648
    %v1181 = vsel %vm1179, %v1180, %v1178
    %v1182 = vrsqrt.pop %v984
    %v1183 = vmul.f32 %v984, %v1182
    %vm1184 = vcmp.eq.f32.partialorder %v984, inf
    %v1185 = vsel %vm1184, %v984, %v1183
    %vm1186 = vcmp.eq.f32.partialorder %v984, 0.0
    %v1187 = vand.u32 %v984, 2147483648
    %v1188 = vsel %vm1186, %v1187, %v1185
    %v1189 = vrsqrt.pop %v986
    %v1190 = vmul.f32 %v986, %v1189
    %vm1191 = vcmp.eq.f32.partialorder %v986, inf
    %v1192 = vsel %vm1191, %v986, %v1190
    %vm1193 = vcmp.eq.f32.partialorder %v986, 0.0
    %v1194 = vand.u32 %v986, 2147483648
    %v1195 = vsel %vm1193, %v1194, %v1192
    %v1196 = vrsqrt.pop %v988
    %v1197 = vmul.f32 %v988, %v1196
    %vm1198 = vcmp.eq.f32.partialorder %v988, inf
    %v1199 = vsel %vm1198, %v988, %v1197
    %vm1200 = vcmp.eq.f32.partialorder %v988, 0.0
    %v1201 = vand.u32 %v988, 2147483648
    %v1202 = vsel %vm1200, %v1201, %v1199
    %v1203 = vrsqrt.pop %v990
    %v1204 = vmul.f32 %v990, %v1203
    %vm1205 = vcmp.eq.f32.partialorder %v990, inf
    %v1206 = vsel %vm1205, %v990, %v1204
    %vm1207 = vcmp.eq.f32.partialorder %v990, 0.0
    %v1208 = vand.u32 %v990, 2147483648
    %v1209 = vsel %vm1207, %v1208, %v1206
    %v1210 = vrsqrt.pop %v992
    %v1211 = vmul.f32 %v992, %v1210
    %vm1212 = vcmp.eq.f32.partialorder %v992, inf
    %v1213 = vsel %vm1212, %v992, %v1211
    %vm1214 = vcmp.eq.f32.partialorder %v992, 0.0
    %v1215 = vand.u32 %v992, 2147483648
    %v1216 = vsel %vm1214, %v1215, %v1213
    %v1217 = vmax.f32 %v999, 1e-12
    %v1218 = vmax.f32 %v1006, 1e-12
    %v1219 = vmax.f32 %v1013, 1e-12
    %v1220 = vmax.f32 %v1020, 1e-12
    %v1221 = vmax.f32 %v1027, 1e-12
    %v1222 = vmax.f32 %v1034, 1e-12
    %v1223 = vmax.f32 %v1041, 1e-12
    %v1224 = vmax.f32 %v1048, 1e-12
    %v1225 = vmax.f32 %v1055, 1e-12
    %v1226 = vmax.f32 %v1062, 1e-12
    %v1227 = vmax.f32 %v1069, 1e-12
    %v1228 = vmax.f32 %v1076, 1e-12
    %v1229 = vmax.f32 %v1083, 1e-12
    %v1230 = vmax.f32 %v1090, 1e-12
    %v1231 = vmax.f32 %v1097, 1e-12
    %v1232 = vmax.f32 %v1104, 1e-12
    %v1233 = vmax.f32 %v1111, 1e-12
    %v1234 = vmax.f32 %v1118, 1e-12
    %v1235 = vmax.f32 %v1125, 1e-12
    %v1236 = vmax.f32 %v1132, 1e-12
    %v1237 = vmax.f32 %v1139, 1e-12
    %v1238 = vmax.f32 %v1146, 1e-12
    %v1239 = vmax.f32 %v1153, 1e-12
    %v1240 = vmax.f32 %v1160, 1e-12
    %v1241 = vmax.f32 %v1167, 1e-12
    %v1242 = vmax.f32 %v1174, 1e-12
    %v1243 = vmax.f32 %v1181, 1e-12
    %v1244 = vmax.f32 %v1188, 1e-12
    %v1245 = vmax.f32 %v1195, 1e-12
    %v1246 = vmax.f32 %v1202, 1e-12
    %v1247 = vmax.f32 %v1209, 1e-12
    %v1248 = vmax.f32 %v1216, 1e-12
    %v1249 = vrcp.pop %v1217
    %v1250 = vmul.f32 %v865, %v1249
    %v1251 = vrcp.pop %v1218
    %v1252 = vmul.f32 %v866, %v1251
    %v1253 = vrcp.pop %v1219
    %v1254 = vmul.f32 %v867, %v1253
    %v1255 = vrcp.pop %v1220
    %v1256 = vmul.f32 %v868, %v1255
    %v1257 = vrcp.pop %v1221
    %v1258 = vmul.f32 %v869, %v1257
    %v1259 = vrcp.pop %v1222
    %v1260 = vmul.f32 %v870, %v1259
    %v1261 = vrcp.pop %v1223
    %v1262 = vmul.f32 %v871, %v1261
    %v1263 = vrcp.pop %v1224
    %v1264 = vmul.f32 %v872, %v1263
    %v1265 = vrcp.pop %v1225
    %v1266 = vmul.f32 %v873, %v1265
    %v1267 = vrcp.pop %v1226
    %v1268 = vmul.f32 %v874, %v1267
    %v1269 = vrcp.pop %v1227
    %v1270 = vmul.f32 %v875, %v1269
    %v1271 = vrcp.pop %v1228
    %v1272 = vmul.f32 %v876, %v1271
    %v1273 = vrcp.pop %v1229
    %v1274 = vmul.f32 %v877, %v1273
    %v1275 = vrcp.pop %v1230
    %v1276 = vmul.f32 %v878, %v1275
    %v1277 = vrcp.pop %v1231
    %v1278 = vmul.f32 %v879, %v1277
    %v1279 = vrcp.pop %v1232
    %v1280 = vmul.f32 %v880, %v1279
    %v1281 = vrcp.pop %v1233
    %v1282 = vmul.f32 %v881, %v1281
    %v1283 = vrcp.pop %v1234
    %v1284 = vmul.f32 %v882, %v1283
    %v1285 = vrcp.pop %v1235
    %v1286 = vmul.f32 %v883, %v1285
    %v1287 = vrcp.pop %v1236
    %v1288 = vmul.f32 %v884, %v1287
    %v1289 = vrcp.pop %v1237
    %v1290 = vmul.f32 %v885, %v1289
    %v1291 = vrcp.pop %v1238
    %v1292 = vmul.f32 %v886, %v1291
    %v1293 = vrcp.pop %v1239
    %v1294 = vmul.f32 %v887, %v1293
    %v1295 = vrcp.pop %v1240
    %v1296 = vmul.f32 %v888, %v1295
    %v1297 = vrcp.pop %v1241
    %v1298 = vmul.f32 %v889, %v1297
    %v1299 = vrcp.pop %v1242
    %v1300 = vmul.f32 %v890, %v1299
    %v1301 = vrcp.pop %v1243
    %v1302 = vmul.f32 %v891, %v1301
    %v1303 = vrcp.pop %v1244
    %v1304 = vmul.f32 %v892, %v1303
    %v1305 = vrcp.pop %v1245
    %v1306 = vmul.f32 %v893, %v1305
    %v1307 = vrcp.pop %v1246
    %v1308 = vmul.f32 %v894, %v1307
    %v1309 = vrcp.pop %v1247
    %v1310 = vmul.f32 %v895, %v1309
    %v1311 = vrcp.pop %v1248
    %v1312 = vmul.f32 %v896, %v1311
    %v1313 = vmax.f32 %v1250, 0.0
    %v1314 = vmax.f32 %v1252, 0.0
    %v1315 = vmax.f32 %v1254, 0.0
    %v1316 = vmax.f32 %v1256, 0.0
    %v1317 = vmax.f32 %v1258, 0.0
    %v1318 = vmax.f32 %v1260, 0.0
    %v1319 = vmax.f32 %v1262, 0.0
    %v1320 = vmax.f32 %v1264, 0.0
    %v1321 = vmax.f32 %v1266, 0.0
    %v1322 = vmax.f32 %v1268, 0.0
    %v1323 = vmax.f32 %v1270, 0.0
    %v1324 = vmax.f32 %v1272, 0.0
    %v1325 = vmax.f32 %v1274, 0.0
    %v1326 = vmax.f32 %v1276, 0.0
    %v1327 = vmax.f32 %v1278, 0.0
    %v1328 = vmax.f32 %v1280, 0.0
    %v1329 = vmax.f32 %v1282, 0.0
    %v1330 = vmax.f32 %v1284, 0.0
    %v1331 = vmax.f32 %v1286, 0.0
    %v1332 = vmax.f32 %v1288, 0.0
    %v1333 = vmax.f32 %v1290, 0.0
    %v1334 = vmax.f32 %v1292, 0.0
    %v1335 = vmax.f32 %v1294, 0.0
    %v1336 = vmax.f32 %v1296, 0.0
    %v1337 = vmax.f32 %v1298, 0.0
    %v1338 = vmax.f32 %v1300, 0.0
    %v1339 = vmax.f32 %v1302, 0.0
    %v1340 = vmax.f32 %v1304, 0.0
    %v1341 = vmax.f32 %v1306, 0.0
    %v1342 = vmax.f32 %v1308, 0.0
    %v1343 = vmax.f32 %v1310, 0.0
    %v1344 = vmax.f32 %v1312, 0.0
    %1345 = vst [vmem:[#allocation2] sm:$0xff] %v1313
    %1346 = vst [vmem:[#allocation2 + $0x8] sm:$0xff] %v1314
    %1347 = vst [vmem:[#allocation2 + $0x10] sm:$0xff] %v1315
    %1348 = vst [vmem:[#allocation2 + $0x18] sm:$0xff] %v1316
    %1349 = vst [vmem:[#allocation2 + $0x20] sm:$0xff] %v1317
    %1350 = vst [vmem:[#allocation2 + $0x28] sm:$0xff] %v1318
    %1351 = vst [vmem:[#allocation2 + $0x30] sm:$0xff] %v1319
    %1352 = vst [vmem:[#allocation2 + $0x38] sm:$0xff] %v1320
    %1353 = vst [vmem:[#allocation2 + $0x40] sm:$0xff] %v1321
    %1354 = vst [vmem:[#allocation2 + $0x48] sm:$0xff] %v1322
    %1355 = vst [vmem:[#allocation2 + $0x50] sm:$0xff] %v1323
    %1356 = vst [vmem:[#allocation2 + $0x58] sm:$0xff] %v1324
    %1357 = vst [vmem:[#allocation2 + $0x60] sm:$0xff] %v1325
    %1358 = vst [vmem:[#allocation2 + $0x68] sm:$0xff] %v1326
    %1359 = vst [vmem:[#allocation2 + $0x70] sm:$0xff] %v1327
    %1360 = vst [vmem:[#allocation2 + $0x78] sm:$0xff] %v1328
    %1361 = vst [vmem:[#allocation2 + $0x80] sm:$0xff] %v1329
    %1362 = vst [vmem:[#allocation2 + $0x88] sm:$0xff] %v1330
    %1363 = vst [vmem:[#allocation2 + $0x90] sm:$0xff] %v1331
    %1364 = vst [vmem:[#allocation2 + $0x98] sm:$0xff] %v1332
    %1365 = vst [vmem:[#allocation2 + $0xa0] sm:$0xff] %v1333
    %1366 = vst [vmem:[#allocation2 + $0xa8] sm:$0xff] %v1334
    %1367 = vst [vmem:[#allocation2 + $0xb0] sm:$0xff] %v1335
    %1368 = vst [vmem:[#allocation2 + $0xb8] sm:$0xff] %v1336
    %1369 = vst [vmem:[#allocation2 + $0xc0] sm:$0xff] %v1337
    %1370 = vst [vmem:[#allocation2 + $0xc8] sm:$0xff] %v1338
    %1371 = vst [vmem:[#allocation2 + $0xd0] sm:$0xff] %v1339
    %1372 = vst [vmem:[#allocation2 + $0xd8] sm:$0xff] %v1340
    %1373 = vst [vmem:[#allocation2 + $0xe0] sm:$0xff] %v1341
    %1374 = vst [vmem:[#allocation2 + $0xe8] sm:$0xff] %v1342
    %1375 = vst [vmem:[#allocation2 + $0xf0] sm:$0xff] %v1343
    %1376 = vst [vmem:[#allocation2 + $0xf8] sm:$0xff] %v1344
    // Predicated region
    $region22: #{encoder_forward.3} parent=1 // pred_check
      _
    $region23: #{encoder_forward.3} parent=1 // pred_check_branch
      %1378 = sbr.rel (0) target = $region25
    $region24: #{encoder_forward.3} parent=1 // pred_region
      %s1380 = ssub.s32 4096, 4096
      %1381 = vsyncadd [#allocation3], %s1380
      %s1382 = sshll.u32 [#allocation2], 4
      %s1383 = int_to_ptr.vmem [resolvable:$true] %s1382
      %1388 = dma.vmem_to_hbm [thread:$0]  %s1383, 4096, %s5, [#allocation3], 128, 128, 8
    $region25: #{encoder_forward.3} parent=1 // pred_fallthru
      _
    // Predicated region
    $region26: #{encoder_forward.3} parent=1 // pred_check
      _
    $region27: #{encoder_forward.3} parent=1 // pred_check_branch
      %1390 = sbr.rel (0) target = $region29
    $region28: #{encoder_forward.3} parent=1 // pred_region
      %1391 = dma.done [#allocation3], 4096
    $region29: #{encoder_forward.3} parent=1 // pred_fallthru
      _
    %1392 = vsyncpa [#allocation3], 1

// kernel: encoder_forward.2
$region0: #{encoder_forward.2}
  #allocation0 [shape = 'u32[]', space=smem, size = 0x4, offset = 0x4, fixed_abs, tag = 'smem constant byte address 0x4 - core index']
  #allocation1 [shape = 'u32[144,128]{1,0:T(1,128)}', space=vmem, size = 0x12000, scoped, tag = 'internal scratch']
  %s0 = inlined_call_operand.vmem [shape: f32[256,256], index: 0, kind: input, shape index: {}]
  %s1 = inlined_call_operand.vmem [shape: f32[256,64], index: 1, kind: input, shape index: {}]
  %s2 = inlined_call_operand.vmem [shape: f32[64,128], index: 2, kind: input, shape index: {}]
  %s3 = inlined_call_operand.vmem [shape: f32[64,128], index: 3, kind: input, shape index: {}]
  %s4 = inlined_call_operand.vmem [shape: f32[1,128], index: 4, kind: input, shape index: {}]
  %s5 = inlined_call_operand.vmem [shape: f32[256,128], index: 5, kind: output, shape index: {}]
  %s6 = sld [smem:[#allocation0]]
  $region30: #{encoder_forward.2} parent=0
    _
  %s8 = ssub.s32 1, %s6
  %s9 = scalar_select 0, %s8, %s6
  // Predicated region
  $region2: #{encoder_forward.2} parent=0 // pred_check
    _
  $region3: #{encoder_forward.2} parent=0 // pred_check_branch
    %11 = sbr.rel (0) target = $region5
  $region4: #{encoder_forward.2} parent=0 // pred_region
    _
  $region5: #{encoder_forward.2} parent=0 // pred_fallthru
    _
  // Predicated region
  $region6: #{encoder_forward.2} parent=0 // pred_check
    _
  $region7: #{encoder_forward.2} parent=0 // pred_check_branch
    %13 = sbr.rel (0) target = $region9
  $region8: #{encoder_forward.2} parent=0 // pred_region
    _
  $region9: #{encoder_forward.2} parent=0 // pred_fallthru
    _
  // Predicated region
  $region10: #{encoder_forward.2} parent=0 // pred_check
    _
  $region11: #{encoder_forward.2} parent=0 // pred_check_branch
    %15 = sbr.rel (0) target = $region13
  $region12: #{encoder_forward.2} parent=0 // pred_region
    _
  $region13: #{encoder_forward.2} parent=0 // pred_fallthru
    _
  // Predicated region
  $region14: #{encoder_forward.2} parent=0 // pred_check
    _
  $region15: #{encoder_forward.2} parent=0 // pred_check_branch
    %17 = sbr.rel (0) target = $region17
  $region16: #{encoder_forward.2} parent=0 // pred_region
    _
  $region17: #{encoder_forward.2} parent=0 // pred_fallthru
    _
  // Predicated region
  $region18: #{encoder_forward.2} parent=0 // pred_check
    _
  $region19: #{encoder_forward.2} parent=0 // pred_check_branch
    %19 = sbr.rel (0) target = $region21
  $region20: #{encoder_forward.2} parent=0 // pred_region
    _
  $region21: #{encoder_forward.2} parent=0 // pred_fallthru
    _
  %s20 = smul.u32 0, 256
  %v21 = vld [vmem:[%s1] sm:$0xff]
  %v22 = vld [vmem:[%s1 + $0x8] sm:$0xff]
  %v23 = vld [vmem:[%s1 + $0x10] sm:$0xff]
  %v24 = vld [vmem:[%s1 + $0x18] sm:$0xff]
  %v25 = vld [vmem:[%s1 + $0x20] sm:$0xff]
  %v26 = vld [vmem:[%s1 + $0x28] sm:$0xff]
  %v27 = vld [vmem:[%s1 + $0x30] sm:$0xff]
  %v28 = vld [vmem:[%s1 + $0x38] sm:$0xff]
  %v29 = vld [vmem:[%s1 + $0x40] sm:$0xff]
  %v30 = vld [vmem:[%s1 + $0x48] sm:$0xff]
  %v31 = vld [vmem:[%s1 + $0x50] sm:$0xff]
  %v32 = vld [vmem:[%s1 + $0x58] sm:$0xff]
  %v33 = vld [vmem:[%s1 + $0x60] sm:$0xff]
  %v34 = vld [vmem:[%s1 + $0x68] sm:$0xff]
  %v35 = vld [vmem:[%s1 + $0x70] sm:$0xff]
  %v36 = vld [vmem:[%s1 + $0x78] sm:$0xff]
  %v37 = vld [vmem:[%s1 + $0x80] sm:$0xff]
  %v38 = vld [vmem:[%s1 + $0x88] sm:$0xff]
  %v39 = vld [vmem:[%s1 + $0x90] sm:$0xff]
  %v40 = vld [vmem:[%s1 + $0x98] sm:$0xff]
  %v41 = vld [vmem:[%s1 + $0xa0] sm:$0xff]
  %v42 = vld [vmem:[%s1 + $0xa8] sm:$0xff]
  %v43 = vld [vmem:[%s1 + $0xb0] sm:$0xff]
  %v44 = vld [vmem:[%s1 + $0xb8] sm:$0xff]
  %v45 = vld [vmem:[%s1 + $0xc0] sm:$0xff]
  %v46 = vld [vmem:[%s1 + $0xc8] sm:$0xff]
  %v47 = vld [vmem:[%s1 + $0xd0] sm:$0xff]
  %v48 = vld [vmem:[%s1 + $0xd8] sm:$0xff]
  %v49 = vld [vmem:[%s1 + $0xe0] sm:$0xff]
  %v50 = vld [vmem:[%s1 + $0xe8] sm:$0xff]
  %v51 = vld [vmem:[%s1 + $0xf0] sm:$0xff]
  %v52 = vld [vmem:[%s1 + $0xf8] sm:$0xff]
  %s53 = scalar_lea.vmem %s1, %s20
  %v54 = vld [vmem:[%s53] sm:$0xff]
  %v55 = vld [vmem:[%s53 + $0x8] sm:$0xff]
  %v56 = vld [vmem:[%s53 + $0x10] sm:$0xff]
  %v57 = vld [vmem:[%s53 + $0x18] sm:$0xff]
  %v58 = vld [vmem:[%s53 + $0x20] sm:$0xff]
  %v59 = vld [vmem:[%s53 + $0x28] sm:$0xff]
  %v60 = vld [vmem:[%s53 + $0x30] sm:$0xff]
  %v61 = vld [vmem:[%s53 + $0x38] sm:$0xff]
  %v62 = vld [vmem:[%s53 + $0x40] sm:$0xff]
  %v63 = vld [vmem:[%s53 + $0x48] sm:$0xff]
  %v64 = vld [vmem:[%s53 + $0x50] sm:$0xff]
  %v65 = vld [vmem:[%s53 + $0x58] sm:$0xff]
  %v66 = vld [vmem:[%s53 + $0x60] sm:$0xff]
  %v67 = vld [vmem:[%s53 + $0x68] sm:$0xff]
  %v68 = vld [vmem:[%s53 + $0x70] sm:$0xff]
  %v69 = vld [vmem:[%s53 + $0x78] sm:$0xff]
  %v70 = vld [vmem:[%s53 + $0x80] sm:$0xff]
  %v71 = vld [vmem:[%s53 + $0x88] sm:$0xff]
  %v72 = vld [vmem:[%s53 + $0x90] sm:$0xff]
  %v73 = vld [vmem:[%s53 + $0x98] sm:$0xff]
  %v74 = vld [vmem:[%s53 + $0xa0] sm:$0xff]
  %v75 = vld [vmem:[%s53 + $0xa8] sm:$0xff]
  %v76 = vld [vmem:[%s53 + $0xb0] sm:$0xff]
  %v77 = vld [vmem:[%s53 + $0xb8] sm:$0xff]
  %v78 = vld [vmem:[%s53 + $0xc0] sm:$0xff]
  %v79 = vld [vmem:[%s53 + $0xc8] sm:$0xff]
  %v80 = vld [vmem:[%s53 + $0xd0] sm:$0xff]
  %v81 = vld [vmem:[%s53 + $0xd8] sm:$0xff]
  %v82 = vld [vmem:[%s53 + $0xe0] sm:$0xff]
  %v83 = vld [vmem:[%s53 + $0xe8] sm:$0xff]
  %v84 = vld [vmem:[%s53 + $0xf0] sm:$0xff]
  %v85 = vld [vmem:[%s53 + $0xf8] sm:$0xff]
  %v86 = vld [vmem:[%s0] sm:$0xff]
  %v87 = vld [vmem:[%s0 + $0x8] sm:$0xff]
  %v88 = vld [vmem:[%s0 + $0x10] sm:$0xff]
  %v89 = vld [vmem:[%s0 + $0x18] sm:$0xff]
  %v90 = vld [vmem:[%s0 + $0x20] sm:$0xff]
  %v91 = vld [vmem:[%s0 + $0x28] sm:$0xff]
  %v92 = vld [vmem:[%s0 + $0x30] sm:$0xff]
  %v93 = vld [vmem:[%s0 + $0x38] sm:$0xff]
  %v94 = vld [vmem:[%s0 + $0x40] sm:$0xff]
  %v95 = vld [vmem:[%s0 + $0x48] sm:$0xff]
  %v96 = vld [vmem:[%s0 + $0x50] sm:$0xff]
  %v97 = vld [vmem:[%s0 + $0x58] sm:$0xff]
  %v98 = vld [vmem:[%s0 + $0x60] sm:$0xff]
  %v99 = vld [vmem:[%s0 + $0x68] sm:$0xff]
  %v100 = vld [vmem:[%s0 + $0x70] sm:$0xff]
  %v101 = vld [vmem:[%s0 + $0x78] sm:$0xff]
  %v102 = vld [vmem:[%s0 + $0x80] sm:$0xff]
  %v103 = vld [vmem:[%s0 + $0x88] sm:$0xff]
  %v104 = vld [vmem:[%s0 + $0x90] sm:$0xff]
  %v105 = vld [vmem:[%s0 + $0x98] sm:$0xff]
  %v106 = vld [vmem:[%s0 + $0xa0] sm:$0xff]
  %v107 = vld [vmem:[%s0 + $0xa8] sm:$0xff]
  %v108 = vld [vmem:[%s0 + $0xb0] sm:$0xff]
  %v109 = vld [vmem:[%s0 + $0xb8] sm:$0xff]
  %v110 = vld [vmem:[%s0 + $0xc0] sm:$0xff]
  %v111 = vld [vmem:[%s0 + $0xc8] sm:$0xff]
  %v112 = vld [vmem:[%s0 + $0xd0] sm:$0xff]
  %v113 = vld [vmem:[%s0 + $0xd8] sm:$0xff]
  %v114 = vld [vmem:[%s0 + $0xe0] sm:$0xff]
  %v115 = vld [vmem:[%s0 + $0xe8] sm:$0xff]
  %v116 = vld [vmem:[%s0 + $0xf0] sm:$0xff]
  %v117 = vld [vmem:[%s0 + $0xf8] sm:$0xff]
  %v118 = vld [vmem:[%s0 + $0x100] sm:$0xff]
  %v119 = vld [vmem:[%s0 + $0x108] sm:$0xff]
  %v120 = vld [vmem:[%s0 + $0x110] sm:$0xff]
  %v121 = vld [vmem:[%s0 + $0x118] sm:$0xff]
  %v122 = vld [vmem:[%s0 + $0x120] sm:$0xff]
  %v123 = vld [vmem:[%s0 + $0x128] sm:$0xff]
  %v124 = vld [vmem:[%s0 + $0x130] sm:$0xff]
  %v125 = vld [vmem:[%s0 + $0x138] sm:$0xff]
  %v126 = vld [vmem:[%s0 + $0x140] sm:$0xff]
  %v127 = vld [vmem:[%s0 + $0x148] sm:$0xff]
  %v128 = vld [vmem:[%s0 + $0x150] sm:$0xff]
  %v129 = vld [vmem:[%s0 + $0x158] sm:$0xff]
  %v130 = vld [vmem:[%s0 + $0x160] sm:$0xff]
  %v131 = vld [vmem:[%s0 + $0x168] sm:$0xff]
  %v132 = vld [vmem:[%s0 + $0x170] sm:$0xff]
  %v133 = vld [vmem:[%s0 + $0x178] sm:$0xff]
  %v134 = vld [vmem:[%s0 + $0x180] sm:$0xff]
  %v135 = vld [vmem:[%s0 + $0x188] sm:$0xff]
  %v136 = vld [vmem:[%s0 + $0x190] sm:$0xff]
  %v137 = vld [vmem:[%s0 + $0x198] sm:$0xff]
  %v138 = vld [vmem:[%s0 + $0x1a0] sm:$0xff]
  %v139 = vld [vmem:[%s0 + $0x1a8] sm:$0xff]
  %v140 = vld [vmem:[%s0 + $0x1b0] sm:$0xff]
  %v141 = vld [vmem:[%s0 + $0x1b8] sm:$0xff]
  %v142 = vld [vmem:[%s0 + $0x1c0] sm:$0xff]
  %v143 = vld [vmem:[%s0 + $0x1c8] sm:$0xff]
  %v144 = vld [vmem:[%s0 + $0x1d0] sm:$0xff]
  %v145 = vld [vmem:[%s0 + $0x1d8] sm:$0xff]
  %v146 = vld [vmem:[%s0 + $0x1e0] sm:$0xff]
  %v147 = vld [vmem:[%s0 + $0x1e8] sm:$0xff]
  %v148 = vld [vmem:[%s0 + $0x1f0] sm:$0xff]
  %v149 = vld [vmem:[%s0 + $0x1f8] sm:$0xff]
  %150 = vmatprep.subr.mxu0 0.0
  %151 = vmatpush1.msra.mxu0 %v21
  %152 = vmatprep.subr.mxu0 0.0
  %153 = vmatpush1.msra.mxu0 %v22
  %154 = vmatprep.subr.mxu0 0.0
  %155 = vmatpush1.msra.mxu0 %v23
  %156 = vmatprep.subr.mxu0 0.0
  %157 = vmatpush1.msra.mxu0 %v24
  %158 = vmatprep.subr.mxu0 0.0
  %159 = vmatpush1.msra.mxu0 %v25
  %160 = vmatprep.subr.mxu0 0.0
  %161 = vmatpush1.msra.mxu0 %v26
  %162 = vmatprep.subr.mxu0 0.0
  %163 = vmatpush1.msra.mxu0 %v27
  %164 = vmatprep.subr.mxu0 0.0
  %165 = vmatpush1.msra.mxu0 %v28
  %166 = vmatprep.subr.mxu0 0.0
  %167 = vmatpush1.msra.mxu0 %v29
  %168 = vmatprep.subr.mxu0 0.0
  %169 = vmatpush1.msra.mxu0 %v30
  %170 = vmatprep.subr.mxu0 0.0
  %171 = vmatpush1.msra.mxu0 %v31
  %172 = vmatprep.subr.mxu0 0.0
  %173 = vmatpush1.msra.mxu0 %v32
  %174 = vmatprep.subr.mxu0 0.0
  %175 = vmatpush1.msra.mxu0 %v33
  %176 = vmatprep.subr.mxu0 0.0
  %177 = vmatpush1.msra.mxu0 %v34
  %178 = vmatprep.subr.mxu0 0.0
  %179 = vmatpush1.msra.mxu0 %v35
  %180 = vmatprep.subr.mxu0 0.0
  %181 = vmatpush1.msra.mxu0 %v36
  %182 = vmatprep.subr.mxu0 0.0
  %183 = vmatpush1.msra.mxu0 %v37
  %184 = vmatprep.subr.mxu0 0.0
  %185 = vmatpush1.msra.mxu0 %v38
  %186 = vmatprep.subr.mxu0 0.0
  %187 = vmatpush1.msra.mxu0 %v39
  %188 = vmatprep.subr.mxu0 0.0
  %189 = vmatpush1.msra.mxu0 %v40
  %190 = vmatprep.subr.mxu0 0.0
  %191 = vmatpush1.msra.mxu0 %v41
  %192 = vmatprep.subr.mxu0 0.0
  %193 = vmatpush1.msra.mxu0 %v42
  %194 = vmatprep.subr.mxu0 0.0
  %195 = vmatpush1.msra.mxu0 %v43
  %196 = vmatprep.subr.mxu0 0.0
  %197 = vmatpush1.msra.mxu0 %v44
  %198 = vmatprep.subr.mxu0 0.0
  %199 = vmatpush1.msra.mxu0 %v45
  %200 = vmatprep.subr.mxu0 0.0
  %201 = vmatpush1.msra.mxu0 %v46
  %202 = vmatprep.subr.mxu0 0.0
  %203 = vmatpush1.msra.mxu0 %v47
  %204 = vmatprep.subr.mxu0 0.0
  %205 = vmatpush1.msra.mxu0 %v48
  %206 = vmatprep.subr.mxu0 0.0
  %207 = vmatpush1.msra.mxu0 %v49
  %208 = vmatprep.subr.mxu0 0.0
  %209 = vmatpush1.msra.mxu0 %v50
  %210 = vmatprep.subr.mxu0 0.0
  %211 = vmatpush1.msra.mxu0 %v51
  %212 = vmatprep.subr.mxu0 0.0
  %213 = vmatpush1.msra.mxu0 %v52
  %214 = vmatprep.mubr.f32.mxu0 %v87
  %215 = vmatmul.mubr.f32.gmra.mrb[0].mxu0 %v86
  %v216 = vpop.f32.mrb[0].mxu0
  %v217 = vadd.f32 0.0, %v216
  %v218 = vpop.f32.mrb[0].mxu0
  %219 = vmatprep.mubr.f32.mxu0 %v89
  %220 = vmatmul.mubr.f32.gmra.mrb[0].mxu0 %v88
  %v221 = vpop.f32.mrb[0].mxu0
  %v222 = vadd.f32 0.0, %v221
  %v223 = vpop.f32.mrb[0].mxu0
  %224 = vmatprep.mubr.f32.mxu0 %v91
  %225 = vmatmul.mubr.f32.gmra.mrb[0].mxu0 %v90
  %v226 = vpop.f32.mrb[0].mxu0
  %v227 = vadd.f32 0.0, %v226
  %v228 = vpop.f32.mrb[0].mxu0
  %229 = vmatprep.mubr.f32.mxu0 %v93
  %230 = vmatmul.mubr.f32.gmra.mrb[0].mxu0 %v92
  %v231 = vpop.f32.mrb[0].mxu0
  %v232 = vadd.f32 0.0, %v231
  %v233 = vpop.f32.mrb[0].mxu0
  %234 = vmatprep.mubr.f32.mxu0 %v95
  %235 = vmatmul.mubr.f32.gmra.mrb[0].mxu0 %v94
  %v236 = vpop.f32.mrb[0].mxu0
  %v237 = vadd.f32 0.0, %v236
  %v238 = vpop.f32.mrb[0].mxu0
  %239 = vmatprep.mubr.f32.mxu0 %v97
  %240 = vmatmul.mubr.f32.gmra.mrb[0].mxu0 %v96
  %v241 = vpop.f32.mrb[0].mxu0
  %v242 = vadd.f32 0.0, %v241
  %v243 = vpop.f32.mrb[0].mxu0
  %244 = vmatprep.mubr.f32.mxu0 %v99
  %245 = vmatmul.mubr.f32.gmra.mrb[0].mxu0 %v98
  %v246 = vpop.f32.mrb[0].mxu0
  %v247 = vadd.f32 0.0, %v246
  %v248 = vpop.f32.mrb[0].mxu0
  %249 = vmatprep.mubr.f32.mxu0 %v101
  %250 = vmatmul.mubr.f32.gmra.mrb[0].mxu0 %v100
  %v251 = vpop.f32.mrb[0].mxu0
  %v252 = vadd.f32 0.0, %v251
  %v253 = vpop.f32.mrb[0].mxu0
  %254 = vmatprep.mubr.f32.mxu0 %v103
  %255 = vmatmul.mubr.f32.gmra.mrb[0].mxu0 %v102
  %v256 = vpop.f32.mrb[0].mxu0
  %v257 = vadd.f32 0.0, %v256
  %v258 = vpop.f32.mrb[0].mxu0
  %259 = vmatprep.mubr.f32.mxu0 %v105
  %260 = vmatmul.mubr.f32.gmra.mrb[0].mxu0 %v104
  %v261 = vpop.f32.mrb[0].mxu0
  %v262 = vadd.f32 0.0, %v261
  %v263 = vpop.f32.mrb[0].mxu0
  %264 = vmatprep.mubr.f32.mxu0 %v107
  %265 = vmatmul.mubr.f32.gmra.mrb[0].mxu0 %v106
  %v266 = vpop.f32.mrb[0].mxu0
  %v267 = vadd.f32 0.0, %v266
  %v268 = vpop.f32.mrb[0].mxu0
  %269 = vmatprep.mubr.f32.mxu0 %v109
  %270 = vmatmul.mubr.f32.gmra.mrb[0].mxu0 %v108
  %v271 = vpop.f32.mrb[0].mxu0
  %v272 = vadd.f32 0.0, %v271
  %v273 = vpop.f32.mrb[0].mxu0
  %274 = vmatprep.mubr.f32.mxu0 %v111
  %275 = vmatmul.mubr.f32.gmra.mrb[0].mxu0 %v110
  %v276 = vpop.f32.mrb[0].mxu0
  %v277 = vadd.f32 0.0, %v276
  %v278 = vpop.f32.mrb[0].mxu0
  %279 = vmatprep.mubr.f32.mxu0 %v113
  %280 = vmatmul.mubr.f32.gmra.mrb[0].mxu0 %v112
  %v281 = vpop.f32.mrb[0].mxu0
  %v282 = vadd.f32 0.0, %v281
  %v283 = vpop.f32.mrb[0].mxu0
  %284 = vmatprep.mubr.f32.mxu0 %v115
  %285 = vmatmul.mubr.f32.gmra.mrb[0].mxu0 %v114
  %v286 = vpop.f32.mrb[0].mxu0
  %v287 = vadd.f32 0.0, %v286
  %v288 = vpop.f32.mrb[0].mxu0
  %289 = vmatprep.mubr.f32.mxu0 %v117
  %290 = vmatmul.mubr.f32.gmra.mrb[0].mxu0 %v116
  %v291 = vpop.f32.mrb[0].mxu0
  %v292 = vadd.f32 0.0, %v291
  %v293 = vpop.f32.mrb[0].mxu0
  %294 = vmatprep.mubr.f32.mxu0 %v119
  %295 = vmatmul.mubr.f32.gmra.mrb[0].mxu0 %v118
  %v296 = vpop.f32.mrb[0].mxu0
  %v297 = vadd.f32 0.0, %v296
  %v298 = vpop.f32.mrb[0].mxu0
  %299 = vmatprep.mubr.f32.mxu0 %v121
  %300 = vmatmul.mubr.f32.gmra.mrb[0].mxu0 %v120
  %v301 = vpop.f32.mrb[0].mxu0
  %v302 = vadd.f32 0.0, %v301
  %v303 = vpop.f32.mrb[0].mxu0
  %304 = vmatprep.mubr.f32.mxu0 %v123
  %305 = vmatmul.mubr.f32.gmra.mrb[0].mxu0 %v122
  %v306 = vpop.f32.mrb[0].mxu0
  %v307 = vadd.f32 0.0, %v306
  %v308 = vpop.f32.mrb[0].mxu0
  %309 = vmatprep.mubr.f32.mxu0 %v125
  %310 = vmatmul.mubr.f32.gmra.mrb[0].mxu0 %v124
  %v311 = vpop.f32.mrb[0].mxu0
  %v312 = vadd.f32 0.0, %v311
  %v313 = vpop.f32.mrb[0].mxu0
  %314 = vmatprep.mubr.f32.mxu0 %v127
  %315 = vmatmul.mubr.f32.gmra.mrb[0].mxu0 %v126
  %v316 = vpop.f32.mrb[0].mxu0
  %v317 = vadd.f32 0.0, %v316
  %v318 = vpop.f32.mrb[0].mxu0
  %319 = vmatprep.mubr.f32.mxu0 %v129
  %320 = vmatmul.mubr.f32.gmra.mrb[0].mxu0 %v128
  %v321 = vpop.f32.mrb[0].mxu0
  %v322 = vadd.f32 0.0, %v321
  %v323 = vpop.f32.mrb[0].mxu0
  %324 = vmatprep.mubr.f32.mxu0 %v131
  %325 = vmatmul.mubr.f32.gmra.mrb[0].mxu0 %v130
  %v326 = vpop.f32.mrb[0].mxu0
  %v327 = vadd.f32 0.0, %v326
  %v328 = vpop.f32.mrb[0].mxu0
  %329 = vmatprep.mubr.f32.mxu0 %v133
  %330 = vmatmul.mubr.f32.gmra.mrb[0].mxu0 %v132
  %v331 = vpop.f32.mrb[0].mxu0
  %v332 = vadd.f32 0.0, %v331
  %v333 = vpop.f32.mrb[0].mxu0
  %334 = vmatprep.mubr.f32.mxu0 %v135
  %335 = vmatmul.mubr.f32.gmra.mrb[0].mxu0 %v134
  %v336 = vpop.f32.mrb[0].mxu0
  %v337 = vadd.f32 0.0, %v336
  %v338 = vpop.f32.mrb[0].mxu0
  %339 = vmatprep.mubr.f32.mxu0 %v137
  %340 = vmatmul.mubr.f32.gmra.mrb[0].mxu0 %v136
  %v341 = vpop.f32.mrb[0].mxu0
  %v342 = vadd.f32 0.0, %v341
  %v343 = vpop.f32.mrb[0].mxu0
  %344 = vmatprep.mubr.f32.mxu0 %v139
  %345 = vmatmul.mubr.f32.gmra.mrb[0].mxu0 %v138
  %v346 = vpop.f32.mrb[0].mxu0
  %v347 = vadd.f32 0.0, %v346
  %v348 = vpop.f32.mrb[0].mxu0
  %349 = vmatprep.mubr.f32.mxu0 %v141
  %350 = vmatmul.mubr.f32.gmra.mrb[0].mxu0 %v140
  %v351 = vpop.f32.mrb[0].mxu0
  %v352 = vadd.f32 0.0, %v351
  %v353 = vpop.f32.mrb[0].mxu0
  %354 = vmatprep.mubr.f32.mxu0 %v143
  %355 = vmatmul.mubr.f32.gmra.mrb[0].mxu0 %v142
  %v356 = vpop.f32.mrb[0].mxu0
  %v357 = vadd.f32 0.0, %v356
  %v358 = vpop.f32.mrb[0].mxu0
  %359 = vmatprep.mubr.f32.mxu0 %v145
  %360 = vmatmul.mubr.f32.gmra.mrb[0].mxu0 %v144
  %v361 = vpop.f32.mrb[0].mxu0
  %v362 = vadd.f32 0.0, %v361
  %v363 = vpop.f32.mrb[0].mxu0
  %364 = vmatprep.mubr.f32.mxu0 %v147
  %365 = vmatmul.mubr.f32.gmra.mrb[0].mxu0 %v146
  %v366 = vpop.f32.mrb[0].mxu0
  %v367 = vadd.f32 0.0, %v366
  %v368 = vpop.f32.mrb[0].mxu0
  %369 = vmatprep.mubr.f32.mxu0 %v149
  %370 = vmatmul.mubr.f32.gmra.mrb[0].mxu0 %v148
  %v371 = vpop.f32.mrb[0].mxu0
  %v372 = vadd.f32 0.0, %v371
  %v373 = vpop.f32.mrb[0].mxu0
  %374 = vdwg.mxu0
  %v375 = vld [vmem:[%s2] sm:$0xff]
  %v376 = vld [vmem:[%s2 + $0x8] sm:$0xff]
  %v377 = vld [vmem:[%s2 + $0x10] sm:$0xff]
  %v378 = vld [vmem:[%s2 + $0x18] sm:$0xff]
  %v379 = vld [vmem:[%s2 + $0x20] sm:$0xff]
  %v380 = vld [vmem:[%s2 + $0x28] sm:$0xff]
  %v381 = vld [vmem:[%s2 + $0x30] sm:$0xff]
  %v382 = vld [vmem:[%s2 + $0x38] sm:$0xff]
  %v383 = vld [vmem:[%s3] sm:$0xff]
  %v384 = vld [vmem:[%s3 + $0x8] sm:$0xff]
  %v385 = vld [vmem:[%s3 + $0x10] sm:$0xff]
  %v386 = vld [vmem:[%s3 + $0x18] sm:$0xff]
  %v387 = vld [vmem:[%s3 + $0x20] sm:$0xff]
  %v388 = vld [vmem:[%s3 + $0x28] sm:$0xff]
  %v389 = vld [vmem:[%s3 + $0x30] sm:$0xff]
  %v390 = vld [vmem:[%s3 + $0x38] sm:$0xff]
  %vm391 = vcmask 523264
  %v393 = vsel %vm391, %v54, 0
  %v396 = vsel %vm391, %v55, 0
  %v399 = vsel %vm391, %v56, 0
  %v402 = vsel %vm391, %v57, 0
  %v405 = vsel %vm391, %v58, 0
  %v408 = vsel %vm391, %v59, 0
  %v411 = vsel %vm391, %v60, 0
  %v414 = vsel %vm391, %v61, 0
  %v417 = vsel %vm391, %v62, 0
  %v420 = vsel %vm391, %v63, 0
  %v423 = vsel %vm391, %v64, 0
  %v426 = vsel %vm391, %v65, 0
  %v429 = vsel %vm391, %v66, 0
  %v432 = vsel %vm391, %v67, 0
  %v435 = vsel %vm391, %v68, 0
  %v438 = vsel %vm391, %v69, 0
  %v441 = vsel %vm391, %v70, 0
  %v444 = vsel %vm391, %v71, 0
  %v447 = vsel %vm391, %v72, 0
  %v450 = vsel %vm391, %v73, 0
  %v453 = vsel %vm391, %v74, 0
  %v456 = vsel %vm391, %v75, 0
  %v459 = vsel %vm391, %v76, 0
  %v462 = vsel %vm391, %v77, 0
  %v465 = vsel %vm391, %v78, 0
  %v468 = vsel %vm391, %v79, 0
  %v471 = vsel %vm391, %v80, 0
  %v474 = vsel %vm391, %v81, 0
  %v477 = vsel %vm391, %v82, 0
  %v480 = vsel %vm391, %v83, 0
  %v483 = vsel %vm391, %v84, 0
  %v486 = vsel %vm391, %v85, 0
  %488 = vmatprep.subr.mxu0 0.0
  %489 = vmatpush1.msra.mxu0 %v383
  %490 = vmatprep.subr.mxu0 0.0
  %491 = vmatpush1.msra.mxu0 %v384
  %492 = vmatprep.subr.mxu0 0.0
  %493 = vmatpush1.msra.mxu0 %v385
  %494 = vmatprep.subr.mxu0 0.0
  %495 = vmatpush1.msra.mxu0 %v386
  %496 = vmatprep.subr.mxu0 0.0
  %497 = vmatpush1.msra.mxu0 %v387
  %498 = vmatprep.subr.mxu0 0.0
  %499 = vmatpush1.msra.mxu0 %v388
  %500 = vmatprep.subr.mxu0 0.0
  %501 = vmatpush1.msra.mxu0 %v389
  %502 = vmatprep.subr.mxu0 0.0
  %503 = vmatpush1.msra.mxu0 %v390
  %504 = vmatprep.subr.mxu0 0.0
  %505 = vmatpush1.msra.mxu0 0.0
  %506 = vmatprep.subr.mxu0 0.0
  %507 = vmatpush1.msra.mxu0 0.0
  %508 = vmatprep.subr.mxu0 0.0
  %509 = vmatpush1.msra.mxu0 0.0
  %510 = vmatprep.subr.mxu0 0.0
  %511 = vmatpush1.msra.mxu0 0.0
  %512 = vmatprep.subr.mxu0 0.0
  %513 = vmatpush1.msra.mxu0 0.0
  %514 = vmatprep.subr.mxu0 0.0
  %515 = vmatpush1.msra.mxu0 0.0
  %516 = vmatprep.subr.mxu0 0.0
  %517 = vmatpush1.msra.mxu0 0.0
  %518 = vmatprep.subr.mxu0 0.0
  %519 = vmatpush1.msra.mxu0 0.0
  %520 = vmatprep.subr.mxu0 0.0
  %521 = vmatpush1.msra.mxu0 0.0
  %522 = vmatprep.subr.mxu0 0.0
  %523 = vmatpush1.msra.mxu0 0.0
  %524 = vmatprep.subr.mxu0 0.0
  %525 = vmatpush1.msra.mxu0 0.0
  %526 = vmatprep.subr.mxu0 0.0
  %527 = vmatpush1.msra.mxu0 0.0
  %528 = vmatprep.subr.mxu0 0.0
  %529 = vmatpush1.msra.mxu0 0.0
  %530 = vmatprep.subr.mxu0 0.0
  %531 = vmatpush1.msra.mxu0 0.0
  %532 = vmatprep.subr.mxu0 0.0
  %533 = vmatpush1.msra.mxu0 0.0
  %534 = vmatprep.subr.mxu0 0.0
  %535 = vmatpush1.msra.mxu0 0.0
  %536 = vmatprep.subr.mxu0 0.0
  %537 = vmatpush1.msra.mxu0 0.0
  %538 = vmatprep.subr.mxu0 0.0
  %539 = vmatpush1.msra.mxu0 0.0
  %540 = vmatprep.subr.mxu0 0.0
  %541 = vmatpush1.msra.mxu0 0.0
  %542 = vmatprep.subr.mxu0 0.0
  %543 = vmatpush1.msra.mxu0 0.0
  %544 = vmatprep.subr.mxu0 0.0
  %545 = vmatpush1.msra.mxu0 0.0
  %546 = vmatprep.subr.mxu0 0.0
  %547 = vmatpush1.msra.mxu0 0.0
  %548 = vmatprep.subr.mxu0 0.0
  %549 = vmatpush1.msra.mxu0 0.0
  %550 = vmatprep.subr.mxu0 0.0
  %551 = vmatpush1.msra.mxu0 0.0
  %552 = vmatprep.mubr.f32.mxu0 0.0
  %553 = vmatmul.mubr.f32.gmra.mrb[0].mxu0 %v393
  %v554 = vpop.f32.mrb[0].mxu0
  %v555 = vadd.f32 0.0, %v554
  %v556 = vpop.f32.mrb[0].mxu0
  %557 = vmatprep.mubr.f32.mxu0 0.0
  %558 = vmatmul.mubr.f32.gmra.mrb[0].mxu0 %v396
  %v559 = vpop.f32.mrb[0].mxu0
  %v560 = vadd.f32 0.0, %v559
  %v561 = vpop.f32.mrb[0].mxu0
  %562 = vmatprep.mubr.f32.mxu0 0.0
  %563 = vmatmul.mubr.f32.gmra.mrb[0].mxu0 %v399
  %v564 = vpop.f32.mrb[0].mxu0
  %v565 = vadd.f32 0.0, %v564
  %v566 = vpop.f32.mrb[0].mxu0
  %567 = vmatprep.mubr.f32.mxu0 0.0
  %568 = vmatmul.mubr.f32.gmra.mrb[0].mxu0 %v402
  %v569 = vpop.f32.mrb[0].mxu0
  %v570 = vadd.f32 0.0, %v569
  %v571 = vpop.f32.mrb[0].mxu0
  %572 = vmatprep.mubr.f32.mxu0 0.0
  %573 = vmatmul.mubr.f32.gmra.mrb[0].mxu0 %v405
  %v574 = vpop.f32.mrb[0].mxu0
  %v575 = vadd.f32 0.0, %v574
  %v576 = vpop.f32.mrb[0].mxu0
  %577 = vmatprep.mubr.f32.mxu0 0.0
  %578 = vmatmul.mubr.f32.gmra.mrb[0].mxu0 %v408
  %v579 = vpop.f32.mrb[0].mxu0
  %v580 = vadd.f32 0.0, %v579
  %v581 = vpop.f32.mrb[0].mxu0
  %582 = vmatprep.mubr.f32.mxu0 0.0
  %583 = vmatmul.mubr.f32.gmra.mrb[0].mxu0 %v411
  %v584 = vpop.f32.mrb[0].mxu0
  %v585 = vadd.f32 0.0, %v584
  %v586 = vpop.f32.mrb[0].mxu0
  %587 = vmatprep.mubr.f32.mxu0 0.0
  %588 = vmatmul.mubr.f32.gmra.mrb[0].mxu0 %v414
  %v589 = vpop.f32.mrb[0].mxu0
  %v590 = vadd.f32 0.0, %v589
  %v591 = vpop.f32.mrb[0].mxu0
  %592 = vmatprep.mubr.f32.mxu0 0.0
  %593 = vmatmul.mubr.f32.gmra.mrb[0].mxu0 %v417
  %v594 = vpop.f32.mrb[0].mxu0
  %v595 = vadd.f32 0.0, %v594
  %v596 = vpop.f32.mrb[0].mxu0
  %597 = vmatprep.mubr.f32.mxu0 0.0
  %598 = vmatmul.mubr.f32.gmra.mrb[0].mxu0 %v420
  %v599 = vpop.f32.mrb[0].mxu0
  %v600 = vadd.f32 0.0, %v599
  %v601 = vpop.f32.mrb[0].mxu0
  %602 = vmatprep.mubr.f32.mxu0 0.0
  %603 = vmatmul.mubr.f32.gmra.mrb[0].mxu0 %v423
  %v604 = vpop.f32.mrb[0].mxu0
  %v605 = vadd.f32 0.0, %v604
  %v606 = vpop.f32.mrb[0].mxu0
  %607 = vmatprep.mubr.f32.mxu0 0.0
  %608 = vmatmul.mubr.f32.gmra.mrb[0].mxu0 %v426
  %v609 = vpop.f32.mrb[0].mxu0
  %v610 = vadd.f32 0.0, %v609
  %v611 = vpop.f32.mrb[0].mxu0
  %612 = vmatprep.mubr.f32.mxu0 0.0
  %613 = vmatmul.mubr.f32.gmra.mrb[0].mxu0 %v429
  %v614 = vpop.f32.mrb[0].mxu0
  %v615 = vadd.f32 0.0, %v614
  %v616 = vpop.f32.mrb[0].mxu0
  %617 = vmatprep.mubr.f32.mxu0 0.0
  %618 = vmatmul.mubr.f32.gmra.mrb[0].mxu0 %v432
  %v619 = vpop.f32.mrb[0].mxu0
  %v620 = vadd.f32 0.0, %v619
  %v621 = vpop.f32.mrb[0].mxu0
  %622 = vmatprep.mubr.f32.mxu0 0.0
  %623 = vmatmul.mubr.f32.gmra.mrb[0].mxu0 %v435
  %v624 = vpop.f32.mrb[0].mxu0
  %v625 = vadd.f32 0.0, %v624
  %v626 = vpop.f32.mrb[0].mxu0
  %627 = vmatprep.mubr.f32.mxu0 0.0
  %628 = vmatmul.mubr.f32.gmra.mrb[0].mxu0 %v438
  %v629 = vpop.f32.mrb[0].mxu0
  %v630 = vadd.f32 0.0, %v629
  %v631 = vpop.f32.mrb[0].mxu0
  %632 = vmatprep.mubr.f32.mxu0 0.0
  %633 = vmatmul.mubr.f32.gmra.mrb[0].mxu0 %v441
  %v634 = vpop.f32.mrb[0].mxu0
  %v635 = vadd.f32 0.0, %v634
  %v636 = vpop.f32.mrb[0].mxu0
  %637 = vmatprep.mubr.f32.mxu0 0.0
  %638 = vmatmul.mubr.f32.gmra.mrb[0].mxu0 %v444
  %v639 = vpop.f32.mrb[0].mxu0
  %v640 = vadd.f32 0.0, %v639
  %v641 = vpop.f32.mrb[0].mxu0
  %642 = vmatprep.mubr.f32.mxu0 0.0
  %643 = vmatmul.mubr.f32.gmra.mrb[0].mxu0 %v447
  %v644 = vpop.f32.mrb[0].mxu0
  %v645 = vadd.f32 0.0, %v644
  %v646 = vpop.f32.mrb[0].mxu0
  %647 = vmatprep.mubr.f32.mxu0 0.0
  %648 = vmatmul.mubr.f32.gmra.mrb[0].mxu0 %v450
  %v649 = vpop.f32.mrb[0].mxu0
  %v650 = vadd.f32 0.0, %v649
  %v651 = vpop.f32.mrb[0].mxu0
  %652 = vmatprep.mubr.f32.mxu0 0.0
  %653 = vmatmul.mubr.f32.gmra.mrb[0].mxu0 %v453
  %v654 = vpop.f32.mrb[0].mxu0
  %v655 = vadd.f32 0.0, %v654
  %v656 = vpop.f32.mrb[0].mxu0
  %657 = vmatprep.mubr.f32.mxu0 0.0
  %658 = vmatmul.mubr.f32.gmra.mrb[0].mxu0 %v456
  %v659 = vpop.f32.mrb[0].mxu0
  %v660 = vadd.f32 0.0, %v659
  %v661 = vpop.f32.mrb[0].mxu0
  %662 = vmatprep.mubr.f32.mxu0 0.0
  %663 = vmatmul.mubr.f32.gmra.mrb[0].mxu0 %v459
  %v664 = vpop.f32.mrb[0].mxu0
  %v665 = vadd.f32 0.0, %v664
  %v666 = vpop.f32.mrb[0].mxu0
  %667 = vmatprep.mubr.f32.mxu0 0.0
  %668 = vmatmul.mubr.f32.gmra.mrb[0].mxu0 %v462
  %v669 = vpop.f32.mrb[0].mxu0
  %v670 = vadd.f32 0.0, %v669
  %v671 = vpop.f32.mrb[0].mxu0
  %672 = vmatprep.mubr.f32.mxu0 0.0
  %673 = vmatmul.mubr.f32.gmra.mrb[0].mxu0 %v465
  %v674 = vpop.f32.mrb[0].mxu0
  %v675 = vadd.f32 0.0, %v674
  %v676 = vpop.f32.mrb[0].mxu0
  %677 = vmatprep.mubr.f32.mxu0 0.0
  %678 = vmatmul.mubr.f32.gmra.mrb[0].mxu0 %v468
  %v679 = vpop.f32.mrb[0].mxu0
  %v680 = vadd.f32 0.0, %v679
  %v681 = vpop.f32.mrb[0].mxu0
  %682 = vmatprep.mubr.f32.mxu0 0.0
  %683 = vmatmul.mubr.f32.gmra.mrb[0].mxu0 %v471
  %v684 = vpop.f32.mrb[0].mxu0
  %v685 = vadd.f32 0.0, %v684
  %v686 = vpop.f32.mrb[0].mxu0
  %687 = vmatprep.mubr.f32.mxu0 0.0
  %688 = vmatmul.mubr.f32.gmra.mrb[0].mxu0 %v474
  %v689 = vpop.f32.mrb[0].mxu0
  %v690 = vadd.f32 0.0, %v689
  %v691 = vpop.f32.mrb[0].mxu0
  %692 = vmatprep.mubr.f32.mxu0 0.0
  %693 = vmatmul.mubr.f32.gmra.mrb[0].mxu0 %v477
  %v694 = vpop.f32.mrb[0].mxu0
  %v695 = vadd.f32 0.0, %v694
  %v696 = vpop.f32.mrb[0].mxu0
  %697 = vmatprep.mubr.f32.mxu0 0.0
  %698 = vmatmul.mubr.f32.gmra.mrb[0].mxu0 %v480
  %v699 = vpop.f32.mrb[0].mxu0
  %v700 = vadd.f32 0.0, %v699
  %v701 = vpop.f32.mrb[0].mxu0
  %702 = vmatprep.mubr.f32.mxu0 0.0
  %703 = vmatmul.mubr.f32.gmra.mrb[0].mxu0 %v483
  %v704 = vpop.f32.mrb[0].mxu0
  %v705 = vadd.f32 0.0, %v704
  %v706 = vpop.f32.mrb[0].mxu0
  %707 = vmatprep.mubr.f32.mxu0 0.0
  %708 = vmatmul.mubr.f32.gmra.mrb[0].mxu0 %v486
  %v709 = vpop.f32.mrb[0].mxu0
  %v710 = vadd.f32 0.0, %v709
  %v711 = vpop.f32.mrb[0].mxu0
  %712 = vdwg.mxu0
  %v714 = vsel %vm391, %v217, 0
  %v717 = vsel %vm391, %v222, 0
  %v720 = vsel %vm391, %v227, 0
  %v723 = vsel %vm391, %v232, 0
  %v726 = vsel %vm391, %v237, 0
  %v729 = vsel %vm391, %v242, 0
  %v732 = vsel %vm391, %v247, 0
  %v735 = vsel %vm391, %v252, 0
  %v738 = vsel %vm391, %v257, 0
  %v741 = vsel %vm391, %v262, 0
  %v744 = vsel %vm391, %v267, 0
  %v747 = vsel %vm391, %v272, 0
  %v750 = vsel %vm391, %v277, 0
  %v753 = vsel %vm391, %v282, 0
  %v756 = vsel %vm391, %v287, 0
  %v759 = vsel %vm391, %v292, 0
  %v762 = vsel %vm391, %v297, 0
  %v765 = vsel %vm391, %v302, 0
  %v768 = vsel %vm391, %v307, 0
  %v771 = vsel %vm391, %v312, 0
  %v774 = vsel %vm391, %v317, 0
  %v777 = vsel %vm391, %v322, 0
  %v780 = vsel %vm391, %v327, 0
  %v783 = vsel %vm391, %v332, 0
  %v786 = vsel %vm391, %v337, 0
  %v789 = vsel %vm391, %v342, 0
  %v792 = vsel %vm391, %v347, 0
  %v795 = vsel %vm391, %v352, 0
  %v798 = vsel %vm391, %v357, 0
  %v801 = vsel %vm391, %v362, 0
  %v804 = vsel %vm391, %v367, 0
  %v807 = vsel %vm391, %v372, 0
  %809 = vmatprep.subr.mxu0 0.0
  %810 = vmatpush1.msra.mxu0 %v375
  %811 = vmatprep.subr.mxu0 0.0
  %812 = vmatpush1.msra.mxu0 %v376
  %813 = vmatprep.subr.mxu0 0.0
  %814 = vmatpush1.msra.mxu0 %v377
  %815 = vmatprep.subr.mxu0 0.0
  %816 = vmatpush1.msra.mxu0 %v378
  %817 = vmatprep.subr.mxu0 0.0
  %818 = vmatpush1.msra.mxu0 %v379
  %819 = vmatprep.subr.mxu0 0.0
  %820 = vmatpush1.msra.mxu0 %v380
  %821 = vmatprep.subr.mxu0 0.0
  %822 = vmatpush1.msra.mxu0 %v381
  %823 = vmatprep.subr.mxu0 0.0
  %824 = vmatpush1.msra.mxu0 %v382
  %825 = vmatprep.subr.mxu0 0.0
  %826 = vmatpush1.msra.mxu0 0.0
  %827 = vmatprep.subr.mxu0 0.0
  %828 = vmatpush1.msra.mxu0 0.0
  %829 = vmatprep.subr.mxu0 0.0
  %830 = vmatpush1.msra.mxu0 0.0
  %831 = vmatprep.subr.mxu0 0.0
  %832 = vmatpush1.msra.mxu0 0.0
  %833 = vmatprep.subr.mxu0 0.0
  %834 = vmatpush1.msra.mxu0 0.0
  %835 = vmatprep.subr.mxu0 0.0
  %836 = vmatpush1.msra.mxu0 0.0
  %837 = vmatprep.subr.mxu0 0.0
  %838 = vmatpush1.msra.mxu0 0.0
  %839 = vmatprep.subr.mxu0 0.0
  %840 = vmatpush1.msra.mxu0 0.0
  %841 = vmatprep.subr.mxu0 0.0
  %842 = vmatpush1.msra.mxu0 0.0
  %843 = vmatprep.subr.mxu0 0.0
  %844 = vmatpush1.msra.mxu0 0.0
  %845 = vmatprep.subr.mxu0 0.0
  %846 = vmatpush1.msra.mxu0 0.0
  %847 = vmatprep.subr.mxu0 0.0
  %848 = vmatpush1.msra.mxu0 0.0
  %849 = vmatprep.subr.mxu0 0.0
  %850 = vmatpush1.msra.mxu0 0.0
  %851 = vmatprep.subr.mxu0 0.0
  %852 = vmatpush1.msra.mxu0 0.0
  %853 = vmatprep.subr.mxu0 0.0
  %854 = vmatpush1.msra.mxu0 0.0
  %855 = vmatprep.subr.mxu0 0.0
  %856 = vmatpush1.msra.mxu0 0.0
  %857 = vmatprep.subr.mxu0 0.0
  %858 = vmatpush1.msra.mxu0 0.0
  %859 = vmatprep.subr.mxu0 0.0
  %860 = vmatpush1.msra.mxu0 0.0
  %861 = vmatprep.subr.mxu0 0.0
  %862 = vmatpush1.msra.mxu0 0.0
  %863 = vmatprep.subr.mxu0 0.0
  %864 = vmatpush1.msra.mxu0 0.0
  %865 = vmatprep.subr.mxu0 0.0
  %866 = vmatpush1.msra.mxu0 0.0
  %867 = vmatprep.subr.mxu0 0.0
  %868 = vmatpush1.msra.mxu0 0.0
  %869 = vmatprep.subr.mxu0 0.0
  %870 = vmatpush1.msra.mxu0 0.0
  %871 = vmatprep.subr.mxu0 0.0
  %872 = vmatpush1.msra.mxu0 0.0
  %873 = vmatprep.mubr.f32.mxu0 0.0
  %874 = vmatmul.mubr.f32.gmra.mrb[0].mxu0 %v714
  %v875 = vpop.f32.mrb[0].mxu0
  %v876 = vadd.f32 %v555, %v875
  %v877 = vpop.f32.mrb[0].mxu0
  %878 = vmatprep.mubr.f32.mxu0 0.0
  %879 = vmatmul.mubr.f32.gmra.mrb[0].mxu0 %v717
  %v880 = vpop.f32.mrb[0].mxu0
  %v881 = vadd.f32 %v560, %v880
  %v882 = vpop.f32.mrb[0].mxu0
  %883 = vmatprep.mubr.f32.mxu0 0.0
  %884 = vmatmul.mubr.f32.gmra.mrb[0].mxu0 %v720
  %v885 = vpop.f32.mrb[0].mxu0
  %v886 = vadd.f32 %v565, %v885
  %v887 = vpop.f32.mrb[0].mxu0
  %888 = vmatprep.mubr.f32.mxu0 0.0
  %889 = vmatmul.mubr.f32.gmra.mrb[0].mxu0 %v723
  %v890 = vpop.f32.mrb[0].mxu0
  %v891 = vadd.f32 %v570, %v890
  %v892 = vpop.f32.mrb[0].mxu0
  %893 = vmatprep.mubr.f32.mxu0 0.0
  %894 = vmatmul.mubr.f32.gmra.mrb[0].mxu0 %v726
  %v895 = vpop.f32.mrb[0].mxu0
  %v896 = vadd.f32 %v575, %v895
  %v897 = vpop.f32.mrb[0].mxu0
  %898 = vmatprep.mubr.f32.mxu0 0.0
  %899 = vmatmul.mubr.f32.gmra.mrb[0].mxu0 %v729
  %v900 = vpop.f32.mrb[0].mxu0
  %v901 = vadd.f32 %v580, %v900
  %v902 = vpop.f32.mrb[0].mxu0
  %903 = vmatprep.mubr.f32.mxu0 0.0
  %904 = vmatmul.mubr.f32.gmra.mrb[0].mxu0 %v732
  %v905 = vpop.f32.mrb[0].mxu0
  %v906 = vadd.f32 %v585, %v905
  %v907 = vpop.f32.mrb[0].mxu0
  %908 = vmatprep.mubr.f32.mxu0 0.0
  %909 = vmatmul.mubr.f32.gmra.mrb[0].mxu0 %v735
  %v910 = vpop.f32.mrb[0].mxu0
  %v911 = vadd.f32 %v590, %v910
  %v912 = vpop.f32.mrb[0].mxu0
  %913 = vmatprep.mubr.f32.mxu0 0.0
  %914 = vmatmul.mubr.f32.gmra.mrb[0].mxu0 %v738
  %v915 = vpop.f32.mrb[0].mxu0
  %v916 = vadd.f32 %v595, %v915
  %v917 = vpop.f32.mrb[0].mxu0
  %918 = vmatprep.mubr.f32.mxu0 0.0
  %919 = vmatmul.mubr.f32.gmra.mrb[0].mxu0 %v741
  %v920 = vpop.f32.mrb[0].mxu0
  %v921 = vadd.f32 %v600, %v920
  %v922 = vpop.f32.mrb[0].mxu0
  %923 = vmatprep.mubr.f32.mxu0 0.0
  %924 = vmatmul.mubr.f32.gmra.mrb[0].mxu0 %v744
  %v925 = vpop.f32.mrb[0].mxu0
  %v926 = vadd.f32 %v605, %v925
  %v927 = vpop.f32.mrb[0].mxu0
  %928 = vmatprep.mubr.f32.mxu0 0.0
  %929 = vmatmul.mubr.f32.gmra.mrb[0].mxu0 %v747
  %v930 = vpop.f32.mrb[0].mxu0
  %v931 = vadd.f32 %v610, %v930
  %v932 = vpop.f32.mrb[0].mxu0
  %933 = vmatprep.mubr.f32.mxu0 0.0
  %934 = vmatmul.mubr.f32.gmra.mrb[0].mxu0 %v750
  %v935 = vpop.f32.mrb[0].mxu0
  %v936 = vadd.f32 %v615, %v935
  %v937 = vpop.f32.mrb[0].mxu0
  %938 = vmatprep.mubr.f32.mxu0 0.0
  %939 = vmatmul.mubr.f32.gmra.mrb[0].mxu0 %v753
  %v940 = vpop.f32.mrb[0].mxu0
  %v941 = vadd.f32 %v620, %v940
  %v942 = vpop.f32.mrb[0].mxu0
  %943 = vmatprep.mubr.f32.mxu0 0.0
  %944 = vmatmul.mubr.f32.gmra.mrb[0].mxu0 %v756
  %v945 = vpop.f32.mrb[0].mxu0
  %v946 = vadd.f32 %v625, %v945
  %v947 = vpop.f32.mrb[0].mxu0
  %948 = vmatprep.mubr.f32.mxu0 0.0
  %949 = vmatmul.mubr.f32.gmra.mrb[0].mxu0 %v759
  %v950 = vpop.f32.mrb[0].mxu0
  %v951 = vadd.f32 %v630, %v950
  %v952 = vpop.f32.mrb[0].mxu0
  %953 = vmatprep.mubr.f32.mxu0 0.0
  %954 = vmatmul.mubr.f32.gmra.mrb[0].mxu0 %v762
  %v955 = vpop.f32.mrb[0].mxu0
  %v956 = vadd.f32 %v635, %v955
  %v957 = vpop.f32.mrb[0].mxu0
  %958 = vmatprep.mubr.f32.mxu0 0.0
  %959 = vmatmul.mubr.f32.gmra.mrb[0].mxu0 %v765
  %v960 = vpop.f32.mrb[0].mxu0
  %v961 = vadd.f32 %v640, %v960
  %v962 = vpop.f32.mrb[0].mxu0
  %963 = vmatprep.mubr.f32.mxu0 0.0
  %964 = vmatmul.mubr.f32.gmra.mrb[0].mxu0 %v768
  %v965 = vpop.f32.mrb[0].mxu0
  %v966 = vadd.f32 %v645, %v965
  %v967 = vpop.f32.mrb[0].mxu0
  %968 = vmatprep.mubr.f32.mxu0 0.0
  %969 = vmatmul.mubr.f32.gmra.mrb[0].mxu0 %v771
  %v970 = vpop.f32.mrb[0].mxu0
  %v971 = vadd.f32 %v650, %v970
  %v972 = vpop.f32.mrb[0].mxu0
  %973 = vmatprep.mubr.f32.mxu0 0.0
  %974 = vmatmul.mubr.f32.gmra.mrb[0].mxu0 %v774
  %v975 = vpop.f32.mrb[0].mxu0
  %v976 = vadd.f32 %v655, %v975
  %v977 = vpop.f32.mrb[0].mxu0
  %978 = vmatprep.mubr.f32.mxu0 0.0
  %979 = vmatmul.mubr.f32.gmra.mrb[0].mxu0 %v777
  %v980 = vpop.f32.mrb[0].mxu0
  %v981 = vadd.f32 %v660, %v980
  %v982 = vpop.f32.mrb[0].mxu0
  %983 = vmatprep.mubr.f32.mxu0 0.0
  %984 = vmatmul.mubr.f32.gmra.mrb[0].mxu0 %v780
  %v985 = vpop.f32.mrb[0].mxu0
  %v986 = vadd.f32 %v665, %v985
  %v987 = vpop.f32.mrb[0].mxu0
  %988 = vmatprep.mubr.f32.mxu0 0.0
  %989 = vmatmul.mubr.f32.gmra.mrb[0].mxu0 %v783
  %v990 = vpop.f32.mrb[0].mxu0
  %v991 = vadd.f32 %v670, %v990
  %v992 = vpop.f32.mrb[0].mxu0
  %993 = vmatprep.mubr.f32.mxu0 0.0
  %994 = vmatmul.mubr.f32.gmra.mrb[0].mxu0 %v786
  %v995 = vpop.f32.mrb[0].mxu0
  %v996 = vadd.f32 %v675, %v995
  %v997 = vpop.f32.mrb[0].mxu0
  %998 = vmatprep.mubr.f32.mxu0 0.0
  %999 = vmatmul.mubr.f32.gmra.mrb[0].mxu0 %v789
  %v1000 = vpop.f32.mrb[0].mxu0
  %v1001 = vadd.f32 %v680, %v1000
  %v1002 = vpop.f32.mrb[0].mxu0
  %1003 = vmatprep.mubr.f32.mxu0 0.0
  %1004 = vmatmul.mubr.f32.gmra.mrb[0].mxu0 %v792
  %v1005 = vpop.f32.mrb[0].mxu0
  %v1006 = vadd.f32 %v685, %v1005
  %v1007 = vpop.f32.mrb[0].mxu0
  %1008 = vmatprep.mubr.f32.mxu0 0.0
  %1009 = vmatmul.mubr.f32.gmra.mrb[0].mxu0 %v795
  %v1010 = vpop.f32.mrb[0].mxu0
  %v1011 = vadd.f32 %v690, %v1010
  %v1012 = vpop.f32.mrb[0].mxu0
  %1013 = vmatprep.mubr.f32.mxu0 0.0
  %1014 = vmatmul.mubr.f32.gmra.mrb[0].mxu0 %v798
  %v1015 = vpop.f32.mrb[0].mxu0
  %v1016 = vadd.f32 %v695, %v1015
  %v1017 = vpop.f32.mrb[0].mxu0
  %1018 = vmatprep.mubr.f32.mxu0 0.0
  %1019 = vmatmul.mubr.f32.gmra.mrb[0].mxu0 %v801
  %v1020 = vpop.f32.mrb[0].mxu0
  %v1021 = vadd.f32 %v700, %v1020
  %v1022 = vpop.f32.mrb[0].mxu0
  %1023 = vmatprep.mubr.f32.mxu0 0.0
  %1024 = vmatmul.mubr.f32.gmra.mrb[0].mxu0 %v804
  %v1025 = vpop.f32.mrb[0].mxu0
  %v1026 = vadd.f32 %v705, %v1025
  %v1027 = vpop.f32.mrb[0].mxu0
  %1028 = vmatprep.mubr.f32.mxu0 0.0
  %1029 = vmatmul.mubr.f32.gmra.mrb[0].mxu0 %v807
  %v1030 = vpop.f32.mrb[0].mxu0
  %v1031 = vadd.f32 %v710, %v1030
  %v1032 = vpop.f32.mrb[0].mxu0
  %1033 = vdwg.mxu0
  %v1034 = vld [vmem:[%s4] sm:$0x1]
  %v1036 = vlaneseq
  %v1037 = vshrl.u32 %v1036, 7
  %v1038 = vsub.s32 0, %v1037
  %v1039 = vrot.slane %v1034, %v1038
  %v1041 = vadd.f32 %v876, %v1039
  %v1042 = vadd.f32 %v881, %v1039
  %v1043 = vadd.f32 %v886, %v1039
  %v1044 = vadd.f32 %v891, %v1039
  %v1045 = vadd.f32 %v896, %v1039
  %v1046 = vadd.f32 %v901, %v1039
  %v1047 = vadd.f32 %v906, %v1039
  %v1048 = vadd.f32 %v911, %v1039
  %v1049 = vadd.f32 %v916, %v1039
  %v1050 = vadd.f32 %v921, %v1039
  %v1051 = vadd.f32 %v926, %v1039
  %v1052 = vadd.f32 %v931, %v1039
  %v1053 = vadd.f32 %v936, %v1039
  %v1054 = vadd.f32 %v941, %v1039
  %v1055 = vadd.f32 %v946, %v1039
  %v1056 = vadd.f32 %v951, %v1039
  %v1057 = vadd.f32 %v956, %v1039
  %v1058 = vadd.f32 %v961, %v1039
  %v1059 = vadd.f32 %v966, %v1039
  %v1060 = vadd.f32 %v971, %v1039
  %v1061 = vadd.f32 %v976, %v1039
  %v1062 = vadd.f32 %v981, %v1039
  %v1063 = vadd.f32 %v986, %v1039
  %v1064 = vadd.f32 %v991, %v1039
  %v1065 = vadd.f32 %v996, %v1039
  %v1066 = vadd.f32 %v1001, %v1039
  %v1067 = vadd.f32 %v1006, %v1039
  %v1068 = vadd.f32 %v1011, %v1039
  %v1069 = vadd.f32 %v1016, %v1039
  %v1070 = vadd.f32 %v1021, %v1039
  %v1071 = vadd.f32 %v1026, %v1039
  %v1072 = vadd.f32 %v1031, %v1039
  %v1073 = vmul.f32 %v1041, %v1041
  %v1074 = vmul.f32 %v1042, %v1042
  %v1075 = vmul.f32 %v1043, %v1043
  %v1076 = vmul.f32 %v1044, %v1044
  %v1077 = vmul.f32 %v1045, %v1045
  %v1078 = vmul.f32 %v1046, %v1046
  %v1079 = vmul.f32 %v1047, %v1047
  %v1080 = vmul.f32 %v1048, %v1048
  %v1081 = vmul.f32 %v1049, %v1049
  %v1082 = vmul.f32 %v1050, %v1050
  %v1083 = vmul.f32 %v1051, %v1051
  %v1084 = vmul.f32 %v1052, %v1052
  %v1085 = vmul.f32 %v1053, %v1053
  %v1086 = vmul.f32 %v1054, %v1054
  %v1087 = vmul.f32 %v1055, %v1055
  %v1088 = vmul.f32 %v1056, %v1056
  %v1089 = vmul.f32 %v1057, %v1057
  %v1090 = vmul.f32 %v1058, %v1058
  %v1091 = vmul.f32 %v1059, %v1059
  %v1092 = vmul.f32 %v1060, %v1060
  %v1093 = vmul.f32 %v1061, %v1061
  %v1094 = vmul.f32 %v1062, %v1062
  %v1095 = vmul.f32 %v1063, %v1063
  %v1096 = vmul.f32 %v1064, %v1064
  %v1097 = vmul.f32 %v1065, %v1065
  %v1098 = vmul.f32 %v1066, %v1066
  %v1099 = vmul.f32 %v1067, %v1067
  %v1100 = vmul.f32 %v1068, %v1068
  %v1101 = vmul.f32 %v1069, %v1069
  %v1102 = vmul.f32 %v1070, %v1070
  %v1103 = vmul.f32 %v1071, %v1071
  %v1104 = vmul.f32 %v1072, %v1072
  %1105 = vadd.xlane.f32.xlu0 %v1073
  %v1106 = vpop.xlane.xlu0 %1105
  %1107 = vadd.xlane.f32.xlu0 %v1074
  %v1108 = vpop.xlane.xlu0 %1107
  %1109 = vadd.xlane.f32.xlu0 %v1075
  %v1110 = vpop.xlane.xlu0 %1109
  %1111 = vadd.xlane.f32.xlu0 %v1076
  %v1112 = vpop.xlane.xlu0 %1111
  %1113 = vadd.xlane.f32.xlu0 %v1077
  %v1114 = vpop.xlane.xlu0 %1113
  %1115 = vadd.xlane.f32.xlu0 %v1078
  %v1116 = vpop.xlane.xlu0 %1115
  %1117 = vadd.xlane.f32.xlu0 %v1079
  %v1118 = vpop.xlane.xlu0 %1117
  %1119 = vadd.xlane.f32.xlu0 %v1080
  %v1120 = vpop.xlane.xlu0 %1119
  %1121 = vadd.xlane.f32.xlu0 %v1081
  %v1122 = vpop.xlane.xlu0 %1121
  %1123 = vadd.xlane.f32.xlu0 %v1082
  %v1124 = vpop.xlane.xlu0 %1123
  %1125 = vadd.xlane.f32.xlu0 %v1083
  %v1126 = vpop.xlane.xlu0 %1125
  %1127 = vadd.xlane.f32.xlu0 %v1084
  %v1128 = vpop.xlane.xlu0 %1127
  %1129 = vadd.xlane.f32.xlu0 %v1085
  %v1130 = vpop.xlane.xlu0 %1129
  %1131 = vadd.xlane.f32.xlu0 %v1086
  %v1132 = vpop.xlane.xlu0 %1131
  %1133 = vadd.xlane.f32.xlu0 %v1087
  %v1134 = vpop.xlane.xlu0 %1133
  %1135 = vadd.xlane.f32.xlu0 %v1088
  %v1136 = vpop.xlane.xlu0 %1135
  %1137 = vadd.xlane.f32.xlu0 %v1089
  %v1138 = vpop.xlane.xlu0 %1137
  %1139 = vadd.xlane.f32.xlu0 %v1090
  %v1140 = vpop.xlane.xlu0 %1139
  %1141 = vadd.xlane.f32.xlu0 %v1091
  %v1142 = vpop.xlane.xlu0 %1141
  %1143 = vadd.xlane.f32.xlu0 %v1092
  %v1144 = vpop.xlane.xlu0 %1143
  %1145 = vadd.xlane.f32.xlu0 %v1093
  %v1146 = vpop.xlane.xlu0 %1145
  %1147 = vadd.xlane.f32.xlu0 %v1094
  %v1148 = vpop.xlane.xlu0 %1147
  %1149 = vadd.xlane.f32.xlu0 %v1095
  %v1150 = vpop.xlane.xlu0 %1149
  %1151 = vadd.xlane.f32.xlu0 %v1096
  %v1152 = vpop.xlane.xlu0 %1151
  %1153 = vadd.xlane.f32.xlu0 %v1097
  %v1154 = vpop.xlane.xlu0 %1153
  %1155 = vadd.xlane.f32.xlu0 %v1098
  %v1156 = vpop.xlane.xlu0 %1155
  %1157 = vadd.xlane.f32.xlu0 %v1099
  %v1158 = vpop.xlane.xlu0 %1157
  %1159 = vadd.xlane.f32.xlu0 %v1100
  %v1160 = vpop.xlane.xlu0 %1159
  %1161 = vadd.xlane.f32.xlu0 %v1101
  %v1162 = vpop.xlane.xlu0 %1161
  %1163 = vadd.xlane.f32.xlu0 %v1102
  %v1164 = vpop.xlane.xlu0 %1163
  %1165 = vadd.xlane.f32.xlu0 %v1103
  %v1166 = vpop.xlane.xlu0 %1165
  %1167 = vadd.xlane.f32.xlu0 %v1104
  %v1168 = vpop.xlane.xlu0 %1167
  %v1169 = vrsqrt.pop %v1106
  %v1170 = vmul.f32 %v1106, %v1169
  %vm1171 = vcmp.eq.f32.partialorder %v1106, inf
  %v1172 = vsel %vm1171, %v1106, %v1170
  %vm1173 = vcmp.eq.f32.partialorder %v1106, 0.0
  %v1174 = vand.u32 %v1106, 2147483648
  %v1175 = vsel %vm1173, %v1174, %v1172
  %v1176 = vrsqrt.pop %v1108
  %v1177 = vmul.f32 %v1108, %v1176
  %vm1178 = vcmp.eq.f32.partialorder %v1108, inf
  %v1179 = vsel %vm1178, %v1108, %v1177
  %vm1180 = vcmp.eq.f32.partialorder %v1108, 0.0
  %v1181 = vand.u32 %v1108, 2147483648
  %v1182 = vsel %vm1180, %v1181, %v1179
  %v1183 = vrsqrt.pop %v1110
  %v1184 = vmul.f32 %v1110, %v1183
  %vm1185 = vcmp.eq.f32.partialorder %v1110, inf
  %v1186 = vsel %vm1185, %v1110, %v1184
  %vm1187 = vcmp.eq.f32.partialorder %v1110, 0.0
  %v1188 = vand.u32 %v1110, 2147483648
  %v1189 = vsel %vm1187, %v1188, %v1186
  %v1190 = vrsqrt.pop %v1112
  %v1191 = vmul.f32 %v1112, %v1190
  %vm1192 = vcmp.eq.f32.partialorder %v1112, inf
  %v1193 = vsel %vm1192, %v1112, %v1191
  %vm1194 = vcmp.eq.f32.partialorder %v1112, 0.0
  %v1195 = vand.u32 %v1112, 2147483648
  %v1196 = vsel %vm1194, %v1195, %v1193
  %v1197 = vrsqrt.pop %v1114
  %v1198 = vmul.f32 %v1114, %v1197
  %vm1199 = vcmp.eq.f32.partialorder %v1114, inf
  %v1200 = vsel %vm1199, %v1114, %v1198
  %vm1201 = vcmp.eq.f32.partialorder %v1114, 0.0
  %v1202 = vand.u32 %v1114, 2147483648
  %v1203 = vsel %vm1201, %v1202, %v1200
  %v1204 = vrsqrt.pop %v1116
  %v1205 = vmul.f32 %v1116, %v1204
  %vm1206 = vcmp.eq.f32.partialorder %v1116, inf
  %v1207 = vsel %vm1206, %v1116, %v1205
  %vm1208 = vcmp.eq.f32.partialorder %v1116, 0.0
  %v1209 = vand.u32 %v1116, 2147483648
  %v1210 = vsel %vm1208, %v1209, %v1207
  %v1211 = vrsqrt.pop %v1118
  %v1212 = vmul.f32 %v1118, %v1211
  %vm1213 = vcmp.eq.f32.partialorder %v1118, inf
  %v1214 = vsel %vm1213, %v1118, %v1212
  %vm1215 = vcmp.eq.f32.partialorder %v1118, 0.0
  %v1216 = vand.u32 %v1118, 2147483648
  %v1217 = vsel %vm1215, %v1216, %v1214
  %v1218 = vrsqrt.pop %v1120
  %v1219 = vmul.f32 %v1120, %v1218
  %vm1220 = vcmp.eq.f32.partialorder %v1120, inf
  %v1221 = vsel %vm1220, %v1120, %v1219
  %vm1222 = vcmp.eq.f32.partialorder %v1120, 0.0
  %v1223 = vand.u32 %v1120, 2147483648
  %v1224 = vsel %vm1222, %v1223, %v1221
  %v1225 = vrsqrt.pop %v1122
  %v1226 = vmul.f32 %v1122, %v1225
  %vm1227 = vcmp.eq.f32.partialorder %v1122, inf
  %v1228 = vsel %vm1227, %v1122, %v1226
  %vm1229 = vcmp.eq.f32.partialorder %v1122, 0.0
  %v1230 = vand.u32 %v1122, 2147483648
  %v1231 = vsel %vm1229, %v1230, %v1228
  %v1232 = vrsqrt.pop %v1124
  %v1233 = vmul.f32 %v1124, %v1232
  %vm1234 = vcmp.eq.f32.partialorder %v1124, inf
  %v1235 = vsel %vm1234, %v1124, %v1233
  %vm1236 = vcmp.eq.f32.partialorder %v1124, 0.0
  %v1237 = vand.u32 %v1124, 2147483648
  %v1238 = vsel %vm1236, %v1237, %v1235
  %v1239 = vrsqrt.pop %v1126
  %v1240 = vmul.f32 %v1126, %v1239
  %vm1241 = vcmp.eq.f32.partialorder %v1126, inf
  %v1242 = vsel %vm1241, %v1126, %v1240
  %vm1243 = vcmp.eq.f32.partialorder %v1126, 0.0
  %v1244 = vand.u32 %v1126, 2147483648
  %v1245 = vsel %vm1243, %v1244, %v1242
  %v1246 = vrsqrt.pop %v1128
  %v1247 = vmul.f32 %v1128, %v1246
  %vm1248 = vcmp.eq.f32.partialorder %v1128, inf
  %v1249 = vsel %vm1248, %v1128, %v1247
  %vm1250 = vcmp.eq.f32.partialorder %v1128, 0.0
  %v1251 = vand.u32 %v1128, 2147483648
  %v1252 = vsel %vm1250, %v1251, %v1249
  %v1253 = vrsqrt.pop %v1130
  %v1254 = vmul.f32 %v1130, %v1253
  %vm1255 = vcmp.eq.f32.partialorder %v1130, inf
  %v1256 = vsel %vm1255, %v1130, %v1254
  %vm1257 = vcmp.eq.f32.partialorder %v1130, 0.0
  %v1258 = vand.u32 %v1130, 2147483648
  %v1259 = vsel %vm1257, %v1258, %v1256
  %v1260 = vrsqrt.pop %v1132
  %v1261 = vmul.f32 %v1132, %v1260
  %vm1262 = vcmp.eq.f32.partialorder %v1132, inf
  %v1263 = vsel %vm1262, %v1132, %v1261
  %vm1264 = vcmp.eq.f32.partialorder %v1132, 0.0
  %v1265 = vand.u32 %v1132, 2147483648
  %v1266 = vsel %vm1264, %v1265, %v1263
  %v1267 = vrsqrt.pop %v1134
  %v1268 = vmul.f32 %v1134, %v1267
  %vm1269 = vcmp.eq.f32.partialorder %v1134, inf
  %v1270 = vsel %vm1269, %v1134, %v1268
  %vm1271 = vcmp.eq.f32.partialorder %v1134, 0.0
  %v1272 = vand.u32 %v1134, 2147483648
  %v1273 = vsel %vm1271, %v1272, %v1270
  %v1274 = vrsqrt.pop %v1136
  %v1275 = vmul.f32 %v1136, %v1274
  %vm1276 = vcmp.eq.f32.partialorder %v1136, inf
  %v1277 = vsel %vm1276, %v1136, %v1275
  %vm1278 = vcmp.eq.f32.partialorder %v1136, 0.0
  %v1279 = vand.u32 %v1136, 2147483648
  %v1280 = vsel %vm1278, %v1279, %v1277
  %v1281 = vrsqrt.pop %v1138
  %v1282 = vmul.f32 %v1138, %v1281
  %vm1283 = vcmp.eq.f32.partialorder %v1138, inf
  %v1284 = vsel %vm1283, %v1138, %v1282
  %vm1285 = vcmp.eq.f32.partialorder %v1138, 0.0
  %v1286 = vand.u32 %v1138, 2147483648
  %v1287 = vsel %vm1285, %v1286, %v1284
  %v1288 = vrsqrt.pop %v1140
  %v1289 = vmul.f32 %v1140, %v1288
  %vm1290 = vcmp.eq.f32.partialorder %v1140, inf
  %v1291 = vsel %vm1290, %v1140, %v1289
  %vm1292 = vcmp.eq.f32.partialorder %v1140, 0.0
  %v1293 = vand.u32 %v1140, 2147483648
  %v1294 = vsel %vm1292, %v1293, %v1291
  %v1295 = vrsqrt.pop %v1142
  %v1296 = vmul.f32 %v1142, %v1295
  %vm1297 = vcmp.eq.f32.partialorder %v1142, inf
  %v1298 = vsel %vm1297, %v1142, %v1296
  %vm1299 = vcmp.eq.f32.partialorder %v1142, 0.0
  %v1300 = vand.u32 %v1142, 2147483648
  %v1301 = vsel %vm1299, %v1300, %v1298
  %v1302 = vrsqrt.pop %v1144
  %v1303 = vmul.f32 %v1144, %v1302
  %vm1304 = vcmp.eq.f32.partialorder %v1144, inf
  %v1305 = vsel %vm1304, %v1144, %v1303
  %vm1306 = vcmp.eq.f32.partialorder %v1144, 0.0
  %v1307 = vand.u32 %v1144, 2147483648
  %v1308 = vsel %vm1306, %v1307, %v1305
  %v1309 = vrsqrt.pop %v1146
  %v1310 = vmul.f32 %v1146, %v1309
  %vm1311 = vcmp.eq.f32.partialorder %v1146, inf
  %v1312 = vsel %vm1311, %v1146, %v1310
  %vm1313 = vcmp.eq.f32.partialorder %v1146, 0.0
  %v1314 = vand.u32 %v1146, 2147483648
  %v1315 = vsel %vm1313, %v1314, %v1312
  %v1316 = vrsqrt.pop %v1148
  %v1317 = vmul.f32 %v1148, %v1316
  %vm1318 = vcmp.eq.f32.partialorder %v1148, inf
  %v1319 = vsel %vm1318, %v1148, %v1317
  %vm1320 = vcmp.eq.f32.partialorder %v1148, 0.0
  %v1321 = vand.u32 %v1148, 2147483648
  %v1322 = vsel %vm1320, %v1321, %v1319
  %v1323 = vrsqrt.pop %v1150
  %v1324 = vmul.f32 %v1150, %v1323
  %vm1325 = vcmp.eq.f32.partialorder %v1150, inf
  %v1326 = vsel %vm1325, %v1150, %v1324
  %vm1327 = vcmp.eq.f32.partialorder %v1150, 0.0
  %v1328 = vand.u32 %v1150, 2147483648
  %v1329 = vsel %vm1327, %v1328, %v1326
  %v1330 = vrsqrt.pop %v1152
  %v1331 = vmul.f32 %v1152, %v1330
  %vm1332 = vcmp.eq.f32.partialorder %v1152, inf
  %v1333 = vsel %vm1332, %v1152, %v1331
  %vm1334 = vcmp.eq.f32.partialorder %v1152, 0.0
  %v1335 = vand.u32 %v1152, 2147483648
  %v1336 = vsel %vm1334, %v1335, %v1333
  %v1337 = vrsqrt.pop %v1154
  %v1338 = vmul.f32 %v1154, %v1337
  %vm1339 = vcmp.eq.f32.partialorder %v1154, inf
  %v1340 = vsel %vm1339, %v1154, %v1338
  %vm1341 = vcmp.eq.f32.partialorder %v1154, 0.0
  %v1342 = vand.u32 %v1154, 2147483648
  %v1343 = vsel %vm1341, %v1342, %v1340
  %v1344 = vrsqrt.pop %v1156
  %v1345 = vmul.f32 %v1156, %v1344
  %vm1346 = vcmp.eq.f32.partialorder %v1156, inf
  %v1347 = vsel %vm1346, %v1156, %v1345
  %vm1348 = vcmp.eq.f32.partialorder %v1156, 0.0
  %v1349 = vand.u32 %v1156, 2147483648
  %v1350 = vsel %vm1348, %v1349, %v1347
  %v1351 = vrsqrt.pop %v1158
  %v1352 = vmul.f32 %v1158, %v1351
  %vm1353 = vcmp.eq.f32.partialorder %v1158, inf
  %v1354 = vsel %vm1353, %v1158, %v1352
  %vm1355 = vcmp.eq.f32.partialorder %v1158, 0.0
  %v1356 = vand.u32 %v1158, 2147483648
  %v1357 = vsel %vm1355, %v1356, %v1354
  %v1358 = vrsqrt.pop %v1160
  %v1359 = vmul.f32 %v1160, %v1358
  %vm1360 = vcmp.eq.f32.partialorder %v1160, inf
  %v1361 = vsel %vm1360, %v1160, %v1359
  %vm1362 = vcmp.eq.f32.partialorder %v1160, 0.0
  %v1363 = vand.u32 %v1160, 2147483648
  %v1364 = vsel %vm1362, %v1363, %v1361
  %v1365 = vrsqrt.pop %v1162
  %v1366 = vmul.f32 %v1162, %v1365
  %vm1367 = vcmp.eq.f32.partialorder %v1162, inf
  %v1368 = vsel %vm1367, %v1162, %v1366
  %vm1369 = vcmp.eq.f32.partialorder %v1162, 0.0
  %v1370 = vand.u32 %v1162, 2147483648
  %v1371 = vsel %vm1369, %v1370, %v1368
  %v1372 = vrsqrt.pop %v1164
  %v1373 = vmul.f32 %v1164, %v1372
  %vm1374 = vcmp.eq.f32.partialorder %v1164, inf
  %v1375 = vsel %vm1374, %v1164, %v1373
  %vm1376 = vcmp.eq.f32.partialorder %v1164, 0.0
  %v1377 = vand.u32 %v1164, 2147483648
  %v1378 = vsel %vm1376, %v1377, %v1375
  %v1379 = vrsqrt.pop %v1166
  %v1380 = vmul.f32 %v1166, %v1379
  %vm1381 = vcmp.eq.f32.partialorder %v1166, inf
  %v1382 = vsel %vm1381, %v1166, %v1380
  %vm1383 = vcmp.eq.f32.partialorder %v1166, 0.0
  %v1384 = vand.u32 %v1166, 2147483648
  %v1385 = vsel %vm1383, %v1384, %v1382
  %v1386 = vrsqrt.pop %v1168
  %v1387 = vmul.f32 %v1168, %v1386
  %vm1388 = vcmp.eq.f32.partialorder %v1168, inf
  %v1389 = vsel %vm1388, %v1168, %v1387
  %vm1390 = vcmp.eq.f32.partialorder %v1168, 0.0
  %v1391 = vand.u32 %v1168, 2147483648
  %v1392 = vsel %vm1390, %v1391, %v1389
  %v1393 = vmax.f32 %v1175, 1e-12
  %v1394 = vmax.f32 %v1182, 1e-12
  %v1395 = vmax.f32 %v1189, 1e-12
  %v1396 = vmax.f32 %v1196, 1e-12
  %v1397 = vmax.f32 %v1203, 1e-12
  %v1398 = vmax.f32 %v1210, 1e-12
  %v1399 = vmax.f32 %v1217, 1e-12
  %v1400 = vmax.f32 %v1224, 1e-12
  %v1401 = vmax.f32 %v1231, 1e-12
  %v1402 = vmax.f32 %v1238, 1e-12
  %v1403 = vmax.f32 %v1245, 1e-12
  %v1404 = vmax.f32 %v1252, 1e-12
  %v1405 = vmax.f32 %v1259, 1e-12
  %v1406 = vmax.f32 %v1266, 1e-12
  %v1407 = vmax.f32 %v1273, 1e-12
  %v1408 = vmax.f32 %v1280, 1e-12
  %v1409 = vmax.f32 %v1287, 1e-12
  %v1410 = vmax.f32 %v1294, 1e-12
  %v1411 = vmax.f32 %v1301, 1e-12
  %v1412 = vmax.f32 %v1308, 1e-12
  %v1413 = vmax.f32 %v1315, 1e-12
  %v1414 = vmax.f32 %v1322, 1e-12
  %v1415 = vmax.f32 %v1329, 1e-12
  %v1416 = vmax.f32 %v1336, 1e-12
  %v1417 = vmax.f32 %v1343, 1e-12
  %v1418 = vmax.f32 %v1350, 1e-12
  %v1419 = vmax.f32 %v1357, 1e-12
  %v1420 = vmax.f32 %v1364, 1e-12
  %v1421 = vmax.f32 %v1371, 1e-12
  %v1422 = vmax.f32 %v1378, 1e-12
  %v1423 = vmax.f32 %v1385, 1e-12
  %v1424 = vmax.f32 %v1392, 1e-12
  %v1425 = vrcp.pop %v1393
  %v1426 = vmul.f32 %v1041, %v1425
  %v1427 = vrcp.pop %v1394
  %v1428 = vmul.f32 %v1042, %v1427
  %v1429 = vrcp.pop %v1395
  %v1430 = vmul.f32 %v1043, %v1429
  %v1431 = vrcp.pop %v1396
  %v1432 = vmul.f32 %v1044, %v1431
  %v1433 = vrcp.pop %v1397
  %v1434 = vmul.f32 %v1045, %v1433
  %v1435 = vrcp.pop %v1398
  %v1436 = vmul.f32 %v1046, %v1435
  %v1437 = vrcp.pop %v1399
  %v1438 = vmul.f32 %v1047, %v1437
  %v1439 = vrcp.pop %v1400
  %v1440 = vmul.f32 %v1048, %v1439
  %v1441 = vrcp.pop %v1401
  %v1442 = vmul.f32 %v1049, %v1441
  %v1443 = vrcp.pop %v1402
  %v1444 = vmul.f32 %v1050, %v1443
  %v1445 = vrcp.pop %v1403
  %v1446 = vmul.f32 %v1051, %v1445
  %v1447 = vrcp.pop %v1404
  %v1448 = vmul.f32 %v1052, %v1447
  %v1449 = vrcp.pop %v1405
  %v1450 = vmul.f32 %v1053, %v1449
  %v1451 = vrcp.pop %v1406
  %v1452 = vmul.f32 %v1054, %v1451
  %v1453 = vrcp.pop %v1407
  %v1454 = vmul.f32 %v1055, %v1453
  %v1455 = vrcp.pop %v1408
  %v1456 = vmul.f32 %v1056, %v1455
  %v1457 = vrcp.pop %v1409
  %v1458 = vmul.f32 %v1057, %v1457
  %v1459 = vrcp.pop %v1410
  %v1460 = vmul.f32 %v1058, %v1459
  %v1461 = vrcp.pop %v1411
  %v1462 = vmul.f32 %v1059, %v1461
  %v1463 = vrcp.pop %v1412
  %v1464 = vmul.f32 %v1060, %v1463
  %v1465 = vrcp.pop %v1413
  %v1466 = vmul.f32 %v1061, %v1465
  %v1467 = vrcp.pop %v1414
  %v1468 = vmul.f32 %v1062, %v1467
  %v1469 = vrcp.pop %v1415
  %v1470 = vmul.f32 %v1063, %v1469
  %v1471 = vrcp.pop %v1416
  %v1472 = vmul.f32 %v1064, %v1471
  %v1473 = vrcp.pop %v1417
  %v1474 = vmul.f32 %v1065, %v1473
  %v1475 = vrcp.pop %v1418
  %v1476 = vmul.f32 %v1066, %v1475
  %v1477 = vrcp.pop %v1419
  %v1478 = vmul.f32 %v1067, %v1477
  %v1479 = vrcp.pop %v1420
  %v1480 = vmul.f32 %v1068, %v1479
  %v1481 = vrcp.pop %v1421
  %v1482 = vmul.f32 %v1069, %v1481
  %v1483 = vrcp.pop %v1422
  %v1484 = vmul.f32 %v1070, %v1483
  %v1485 = vrcp.pop %v1423
  %v1486 = vmul.f32 %v1071, %v1485
  %v1487 = vrcp.pop %v1424
  %v1488 = vmul.f32 %v1072, %v1487
  %v1489 = vmax.f32 %v1426, 0.0
  %v1490 = vmax.f32 %v1428, 0.0
  %v1491 = vmax.f32 %v1430, 0.0
  %v1492 = vmax.f32 %v1432, 0.0
  %v1493 = vmax.f32 %v1434, 0.0
  %v1494 = vmax.f32 %v1436, 0.0
  %v1495 = vmax.f32 %v1438, 0.0
  %v1496 = vmax.f32 %v1440, 0.0
  %v1497 = vmax.f32 %v1442, 0.0
  %v1498 = vmax.f32 %v1444, 0.0
  %v1499 = vmax.f32 %v1446, 0.0
  %v1500 = vmax.f32 %v1448, 0.0
  %v1501 = vmax.f32 %v1450, 0.0
  %v1502 = vmax.f32 %v1452, 0.0
  %v1503 = vmax.f32 %v1454, 0.0
  %v1504 = vmax.f32 %v1456, 0.0
  %v1505 = vmax.f32 %v1458, 0.0
  %v1506 = vmax.f32 %v1460, 0.0
  %v1507 = vmax.f32 %v1462, 0.0
  %v1508 = vmax.f32 %v1464, 0.0
  %v1509 = vmax.f32 %v1466, 0.0
  %v1510 = vmax.f32 %v1468, 0.0
  %v1511 = vmax.f32 %v1470, 0.0
  %v1512 = vmax.f32 %v1472, 0.0
  %v1513 = vmax.f32 %v1474, 0.0
  %v1514 = vmax.f32 %v1476, 0.0
  %v1515 = vmax.f32 %v1478, 0.0
  %v1516 = vmax.f32 %v1480, 0.0
  %v1517 = vmax.f32 %v1482, 0.0
  %v1518 = vmax.f32 %v1484, 0.0
  %v1519 = vmax.f32 %v1486, 0.0
  %v1520 = vmax.f32 %v1488, 0.0
  %1521 = vst [vmem:[%s5] sm:$0xff] %v1489
  %1522 = vst [vmem:[%s5 + $0x8] sm:$0xff] %v1490
  %1523 = vst [vmem:[%s5 + $0x10] sm:$0xff] %v1491
  %1524 = vst [vmem:[%s5 + $0x18] sm:$0xff] %v1492
  %1525 = vst [vmem:[%s5 + $0x20] sm:$0xff] %v1493
  %1526 = vst [vmem:[%s5 + $0x28] sm:$0xff] %v1494
  %1527 = vst [vmem:[%s5 + $0x30] sm:$0xff] %v1495
  %1528 = vst [vmem:[%s5 + $0x38] sm:$0xff] %v1496
  %1529 = vst [vmem:[%s5 + $0x40] sm:$0xff] %v1497
  %1530 = vst [vmem:[%s5 + $0x48] sm:$0xff] %v1498
  %1531 = vst [vmem:[%s5 + $0x50] sm:$0xff] %v1499
  %1532 = vst [vmem:[%s5 + $0x58] sm:$0xff] %v1500
  %1533 = vst [vmem:[%s5 + $0x60] sm:$0xff] %v1501
  %1534 = vst [vmem:[%s5 + $0x68] sm:$0xff] %v1502
  %1535 = vst [vmem:[%s5 + $0x70] sm:$0xff] %v1503
  %1536 = vst [vmem:[%s5 + $0x78] sm:$0xff] %v1504
  %1537 = vst [vmem:[%s5 + $0x80] sm:$0xff] %v1505
  %1538 = vst [vmem:[%s5 + $0x88] sm:$0xff] %v1506
  %1539 = vst [vmem:[%s5 + $0x90] sm:$0xff] %v1507
  %1540 = vst [vmem:[%s5 + $0x98] sm:$0xff] %v1508
  %1541 = vst [vmem:[%s5 + $0xa0] sm:$0xff] %v1509
  %1542 = vst [vmem:[%s5 + $0xa8] sm:$0xff] %v1510
  %1543 = vst [vmem:[%s5 + $0xb0] sm:$0xff] %v1511
  %1544 = vst [vmem:[%s5 + $0xb8] sm:$0xff] %v1512
  %1545 = vst [vmem:[%s5 + $0xc0] sm:$0xff] %v1513
  %1546 = vst [vmem:[%s5 + $0xc8] sm:$0xff] %v1514
  %1547 = vst [vmem:[%s5 + $0xd0] sm:$0xff] %v1515
  %1548 = vst [vmem:[%s5 + $0xd8] sm:$0xff] %v1516
  %1549 = vst [vmem:[%s5 + $0xe0] sm:$0xff] %v1517
  %1550 = vst [vmem:[%s5 + $0xe8] sm:$0xff] %v1518
  %1551 = vst [vmem:[%s5 + $0xf0] sm:$0xff] %v1519
  %1552 = vst [vmem:[%s5 + $0xf8] sm:$0xff] %v1520
  // Predicated region
  $region22: #{encoder_forward.2} parent=0 // pred_check
    _
  $region23: #{encoder_forward.2} parent=0 // pred_check_branch
    %1554 = sbr.rel (0) target = $region25
  $region24: #{encoder_forward.2} parent=0 // pred_region
    _
  $region25: #{encoder_forward.2} parent=0 // pred_fallthru
    _
  // Predicated region
  $region26: #{encoder_forward.2} parent=0 // pred_check
    _
  $region27: #{encoder_forward.2} parent=0 // pred_check_branch
    %1556 = sbr.rel (0) target = $region29
  $region28: #{encoder_forward.2} parent=0 // pred_region
    _
  $region29: #{encoder_forward.2} parent=0 // pred_fallthru
    _

</llo_original>
